<compile_context>
chip_gen: v6e
topology: v6e:2x2x1
jax: 0.10.0
libtpu: 0.0.40
codegen_flags: <defaults>
</compile_context>

<pallas_src>
import functools

import numpy as np
import jax
import jax.numpy as jnp
from jax.experimental import pallas as pl
from jax.experimental.pallas import tpu as pltpu


# DEFAULT precision -> single-pass bf16 MXU (f32 accumulate).  Use
# Precision.HIGH here if bit-closeness to PyTorch f32 is required.
_DOT = functools.partial(jnp.dot, preferred_element_type=jnp.float32)

_TB_MAX = 128  # batch rows per grid step (clamped down for tiny batches)


def _round_up(n, m):
    return -(-n // m) * m


def _net_kernel(x_ref, t1_ref, b1_ref, t2_ref, b2_ref,
                w1_ref, bf1_ref, w2_ref, bf2_ref, w3_ref, bf3_ref, out_ref):
    """Whole Net forward for one batch tile; all intermediates stay in VMEM."""
    x = x_ref[...]                                   # (TB, 24, 140) f32
    tb = x.shape[0]

    # ---- conv1 + 2x2 maxpool + bias + ReLU --------------------------------
    # Single width-Toeplitz GEMM, K = 5*28 = 140 (2 MXU passes on v5e's
    # 128-deep MXU, 1 pass on v6e/v7x).  Output columns are ordered
    # (pool-col-parity t, pooled col qj, channel co).
    acc1 = _DOT(x.reshape(tb * 24, 140), t1_ref[...])        # (TB*24, 144)
    a1 = acc1.reshape(tb, 12, 2, 144)                        # (b, pooled row, parity, col)
    a1 = jnp.maximum(a1[:, :, 0, :], a1[:, :, 1, :])         # pool over row pairs
    a1 = jnp.maximum(a1[:, :, 0:72], a1[:, :, 72:144])       # pool over col pairs
    h1 = jnp.maximum(a1 + b1_ref[...], 0.0)                  # bias + ReLU once, after max
    # h1: (TB, 12, 72) == NHWC with (W, C) merged into the lane dim.

    # ---- conv2 + 2x2 maxpool + bias + ReLU --------------------------------
    # K-fused Toeplitz GEMM over the 5 stacked row windows, K = 5*72 = 360.
    lhs2 = jnp.concatenate([h1[:, di:di + 8, :] for di in range(5)], axis=-1)
    acc2 = _DOT(lhs2.reshape(tb * 8, 360), t2_ref[...])      # (TB*8, 128)
    a2 = acc2.reshape(tb, 4, 2, 128)
    a2 = jnp.maximum(a2[:, :, 0, :], a2[:, :, 1, :])
    a2 = jnp.maximum(a2[:, :, 0:64], a2[:, :, 64:128])
    h2 = jnp.maximum(a2 + b2_ref[...], 0.0)                  # (TB, 4, 64)

    # ---- fc1 -> relu -> fc2 -> relu -> fc3 (lane-dense, padded to 128) ----
    # PyTorch (C, H, W) flatten permutation is folded into w1; the 4 pooled
    # rows are concatenated along lanes -> one K=256 dot.
    f_in = jnp.concatenate([h2[:, k, :] for k in range(4)], axis=-1)   # (TB, 256)
    f = jnp.maximum(_DOT(f_in, w1_ref[...]) + bf1_ref[...], 0.0)       # (TB, 128)
    f = jnp.maximum(_DOT(f, w2_ref[...]) + bf2_ref[...], 0.0)
    out_ref[...] = _DOT(f, w3_ref[...]) + bf3_ref[...]       # (TB, 128); cols >=62 are 0


def prepare_params(params):
    """One-time weight prep (~0.6 MiB): K-fused banded Toeplitz matrices for
    the convs, CHW-flatten folded into fc1, FC dims zero-padded to 128.
    Call once and reuse; do NOT re-run per forward."""
    f32 = jnp.float32

    # conv1: T1[di*28 + j, t*72 + qj*6 + co] = w1[co, 0, di, j - (2*qj + t)]
    w1 = params["conv1_w"].astype(f32)[:, 0, :, :]                 # (6, 5, 5)
    col = np.arange(144)
    co = col % 6
    oj = 2 * ((col % 72) // 6) + col // 72                         # conv column per out lane
    dj = np.arange(28)[:, None] - oj[None, :]                      # (28, 144)
    valid = (dj >= 0) & (dj < 5)
    sh = (5, 28, 144)
    t1 = jnp.where(
        np.broadcast_to(valid[None], sh),
        w1[np.broadcast_to(co[None, None, :], sh),
           np.broadcast_to(np.arange(5)[:, None, None], sh),
           np.broadcast_to(np.clip(dj, 0, 4)[None], sh)],
        0.0).reshape(140, 144)
    b1 = jnp.tile(params["conv1_b"].astype(f32), 12).reshape(1, 72)

    # conv2: T2[di*72 + qj*6 + ci, t*64 + pj*16 + co] = w2[co, ci, di, qj - (2*pj + t)]
    w2 = params["conv2_w"].astype(f32)                             # (16, 6, 5, 5)
    k = np.arange(72)
    col = np.arange(128)
    oj2 = 2 * ((col % 64) // 16) + col // 64
    dj2 = (k // 6)[:, None] - oj2[None, :]                         # (72, 128)
    valid2 = (dj2 >= 0) & (dj2 < 5)
    sh = (5, 72, 128)
    t2 = jnp.where(
        np.broadcast_to(valid2[None], sh),
        w2[np.broadcast_to((col % 16)[None, None, :], sh),
           np.broadcast_to((k % 6)[None, :, None], sh),
           np.broadcast_to(np.arange(5)[:, None, None], sh),
           np.broadcast_to(np.clip(dj2, 0, 4)[None], sh)],
        0.0).reshape(360, 128)
    b2 = jnp.tile(params["conv2_b"].astype(f32), 4).reshape(1, 64)

    # fc1: fold the PyTorch (C=16, H=4, W=4) flatten order into the weight;
    # K order = pooled row pi (4) x lane r = pj*16 + co (64) -> 256.
    r = np.arange(64)
    f_idx = (r % 16)[None, :] * 16 + np.arange(4)[:, None] * 4 + (r // 16)[None, :]
    w1p = jnp.zeros((4, 64, 128), f32).at[:, :, :120].set(
        params["fc1_w"].astype(f32).T[f_idx]).reshape(256, 128)
    bf1 = jnp.zeros((1, 128), f32).at[0, :120].set(params["fc1_b"].astype(f32))

    w2p = jnp.zeros((128, 128), f32).at[:120, :84].set(params["fc2_w"].astype(f32).T)
    bf2 = jnp.zeros((1, 128), f32).at[0, :84].set(params["fc2_b"].astype(f32))
    w3p = jnp.zeros((128, 128), f32).at[:84, :62].set(params["fc3_w"].astype(f32).T)
    bf3 = jnp.zeros((1, 128), f32).at[0, :62].set(params["fc3_b"].astype(f32))

    prep = (t1, b1, t2, b2, w1p, bf1, w2p, bf2, w3p, bf3)
    return jax.tree_util.tree_map(jnp.asarray, prep)


def net_forward(x_nchw, prep):
    B = x_nchw.shape[0]
    tb = min(_TB_MAX, _round_up(B, 8))
    bpad = _round_up(B, tb)

    x = x_nchw.astype(jnp.float32).reshape(B, 28, 28)
    if bpad != B:
        x = jnp.pad(x, ((0, bpad - B), (0, 0), (0, 0)))
    # Rows-only im2col in the wrapper (cheap XLA gather): (B, 24, 5*28=140),
    # so the kernel needs no sublane-slice/relayout copies to feed conv1.
    xs = jnp.stack([x[:, di:di + 24, :] for di in range(5)], axis=2)
    xs = xs.reshape(bpad, 24, 140)

    (t1, b1, t2, b2, w1p, bf1, w2p, bf2, w3p, bf3) = prep
    const = lambda i: (0, 0)

    out = pl.pallas_call(
        _net_kernel,
        out_shape=jax.ShapeDtypeStruct((bpad, 128), jnp.float32),
        grid=(bpad // tb,),
        in_specs=[
            pl.BlockSpec((tb, 24, 140), lambda i: (i, 0, 0)),   # stacked image tile
            pl.BlockSpec((140, 144), const),                    # conv1 Toeplitz (resident)
            pl.BlockSpec((1, 72), const),                       # conv1 bias (tiled over cols)
            pl.BlockSpec((360, 128), const),                    # conv2 Toeplitz (resident)
            pl.BlockSpec((1, 64), const),                       # conv2 bias
            pl.BlockSpec((256, 128), const),                    # fc1 (CHW fold, padded)
            pl.BlockSpec((1, 128), const),                      # fc1 bias
            pl.BlockSpec((128, 128), const),                    # fc2 (padded)
            pl.BlockSpec((1, 128), const),
            pl.BlockSpec((128, 128), const),                    # fc3 (padded)
            pl.BlockSpec((1, 128), const),
        ],
        out_specs=pl.BlockSpec((tb, 128), lambda i: (i, 0)),
        compiler_params=pltpu.CompilerParams(
            dimension_semantics=("parallel",),
            vmem_limit_bytes=32 * 1024 * 1024),
    )(xs, t1, b1, t2, b2, w1p, bf1, w2p, bf2, w3p, bf3)
    return out[:B, :62]


def init_params(key):
    # Deterministic, PyTorch-default-style uniform(-1/sqrt(fan_in), +1/sqrt(fan_in)).
    ks = jax.random.split(key, 10)

    def u(k, shape, fan_in):
        bound = 1.0 / float(fan_in) ** 0.5
        return jax.random.uniform(k, shape, jnp.float32, -bound, bound)

    return {
        "conv1_w": u(ks[0], (6, 1, 5, 5), 25),
        "conv1_b": u(ks[1], (6,), 25),
        "conv2_w": u(ks[2], (16, 6, 5, 5), 150),
        "conv2_b": u(ks[3], (16,), 150),
        # FC weights stored in PyTorch (out, in) convention.
        "fc1_w": u(ks[4], (120, 256), 256),
        "fc1_b": u(ks[5], (120,), 256),
        "fc2_w": u(ks[6], (84, 120), 120),
        "fc2_b": u(ks[7], (84,), 120),
        "fc3_w": u(ks[8], (62, 84), 84),
        "fc3_b": u(ks[9], (62,), 84),
    }


def _reference_forward(x_nchw, params):
    """Pure-JAX (XLA, f32 HIGHEST) reference of the PyTorch forward."""
    hi = jax.lax.Precision.HIGHEST
    x = x_nchw.astype(jnp.float32)

    def conv(h, w, b):
        y = jax.lax.conv_general_dilated(
            h, w, (1, 1), "VALID",
            dimension_numbers=("NCHW", "OIHW", "NCHW"), precision=hi)
        return y + b[None, :, None, None]

    def pool(h):
        return jax.lax.reduce_window(h, -jnp.inf, jax.lax.max,
                                     (1, 1, 2, 2), (1, 1, 2, 2), "VALID")

    h = pool(jax.nn.relu(conv(x, params["conv1_w"], params["conv1_b"])))
    h = pool(jax.nn.relu(conv(h, params["conv2_w"], params["conv2_b"])))
    h = h.reshape(h.shape[0], 256)
    h = jax.nn.relu(jnp.dot(h, params["fc1_w"].T, precision=hi) + params["fc1_b"])
    h = jax.nn.relu(jnp.dot(h, params["fc2_w"].T, precision=hi) + params["fc2_b"])
    return jnp.dot(h, params["fc3_w"].T, precision=hi) + params["fc3_b"]


if __name__ == "__main__":
    key = jax.random.PRNGKey(0)
    k_x, k_p = jax.random.split(key)
    params = init_params(k_p)
    x = jax.random.normal(k_x, (2, 1, 28, 28), dtype=jnp.float32)  # NCHW like PyTorch

    prep = prepare_params(params)            # one-time weight prep, reused per call
    fwd = jax.jit(net_forward)
    logits = jax.block_until_ready(fwd(x, prep))
    assert logits.shape == (2, 62), logits.shape
    assert logits.dtype == jnp.float32

    ref = jax.block_until_ready(_reference_forward(x, params))
    err = float(jnp.max(jnp.abs(logits - ref)))
    # Single-pass (DEFAULT precision) MXU matmuls vs an f32-HIGHEST reference:
    # tolerance relaxed from 2e-3 to 2e-2 (structural bugs would be >> this).
    assert err < 2e-2, f"mismatch vs pure-JAX reference: {err}"
    print("KERNEL_OK")
</pallas_src>

<mosaic_0001>
module attributes {stable_mosaic.version = 11 : i64} {
  func.func @_net_kernel(%arg0: i32, %arg1: memref<8x24x140xf32, #tpu.memory_space<vmem>>, %arg2: memref<140x144xf32, #tpu.memory_space<vmem>>, %arg3: memref<1x72xf32, #tpu.memory_space<vmem>>, %arg4: memref<360x128xf32, #tpu.memory_space<vmem>>, %arg5: memref<1x64xf32, #tpu.memory_space<vmem>>, %arg6: memref<256x128xf32, #tpu.memory_space<vmem>>, %arg7: memref<1x128xf32, #tpu.memory_space<vmem>>, %arg8: memref<128x128xf32, #tpu.memory_space<vmem>>, %arg9: memref<1x128xf32, #tpu.memory_space<vmem>>, %arg10: memref<128x128xf32, #tpu.memory_space<vmem>>, %arg11: memref<1x128xf32, #tpu.memory_space<vmem>>, %arg12: memref<8x128xf32, #tpu.memory_space<vmem>>) attributes {dimension_semantics = [#tpu.dimension_semantics<parallel>], iteration_bounds = array<i64: 1>, scalar_prefetch = 0 : i64, scratch_operands = 0 : i64, tpu.core_type = #tpu.core_type<tc>, window_params = [{transform_indices = @transform_0, window_bounds = array<i64: 8, 24, 140>}, {pipeline_mode = #tpu.pipeline_mode<synchronous>, transform_indices = @transform_1, window_bounds = array<i64: 140, 144>}, {pipeline_mode = #tpu.pipeline_mode<synchronous>, transform_indices = @transform_2, window_bounds = array<i64: 1, 72>}, {pipeline_mode = #tpu.pipeline_mode<synchronous>, transform_indices = @transform_3, window_bounds = array<i64: 360, 128>}, {pipeline_mode = #tpu.pipeline_mode<synchronous>, transform_indices = @transform_4, window_bounds = array<i64: 1, 64>}, {pipeline_mode = #tpu.pipeline_mode<synchronous>, transform_indices = @transform_5, window_bounds = array<i64: 256, 128>}, {pipeline_mode = #tpu.pipeline_mode<synchronous>, transform_indices = @transform_6, window_bounds = array<i64: 1, 128>}, {pipeline_mode = #tpu.pipeline_mode<synchronous>, transform_indices = @transform_7, window_bounds = array<i64: 128, 128>}, {pipeline_mode = #tpu.pipeline_mode<synchronous>, transform_indices = @transform_8, window_bounds = array<i64: 1, 128>}, {pipeline_mode = #tpu.pipeline_mode<synchronous>, transform_indices = @transform_9, window_bounds = array<i64: 128, 128>}, {pipeline_mode = #tpu.pipeline_mode<synchronous>, transform_indices = @transform_10, window_bounds = array<i64: 1, 128>}, {transform_indices = @transform_11, window_bounds = array<i64: 8, 128>}]} {
    %c0 = arith.constant 0 : index
    %c0_0 = arith.constant 0 : index
    %c0_1 = arith.constant 0 : index
    %0 = vector.load %arg1[%c0, %c0_0, %c0_1] : memref<8x24x140xf32, #tpu.memory_space<vmem>>, vector<8x24x140xf32>
    %1 = vector.shape_cast %0 : vector<8x24x140xf32> to vector<192x140xf32>
    %c0_2 = arith.constant 0 : index
    %c0_3 = arith.constant 0 : index
    %2 = vector.load %arg2[%c0_2, %c0_3] : memref<140x144xf32, #tpu.memory_space<vmem>>, vector<140x144xf32>
    %cst = arith.constant dense<0.000000e+00> : vector<192x144xf32>
    %3 = tpu.matmul %1, %2, %cst {dimension_numbers = #tpu.dot_dimension_numbers<[1], [0], [0], [1], [0, 0, 1, 1], [], []>} : vector<192x140xf32>, vector<140x144xf32>, vector<192x144xf32> -> vector<192x144xf32>
    %4 = vector.shape_cast %3 : vector<192x144xf32> to vector<8x12x2x144xf32>
    %5 = vector.extract_strided_slice %4 {offsets = [0, 0, 0, 0], sizes = [8, 12, 1, 144], strides = [1, 1, 1, 1]} : vector<8x12x2x144xf32> to vector<8x12x1x144xf32>
    %6 = vector.shape_cast %5 : vector<8x12x1x144xf32> to vector<8x12x144xf32>
    %7 = vector.extract_strided_slice %4 {offsets = [0, 0, 1, 0], sizes = [8, 12, 1, 144], strides = [1, 1, 1, 1]} : vector<8x12x2x144xf32> to vector<8x12x1x144xf32>
    %8 = vector.shape_cast %7 : vector<8x12x1x144xf32> to vector<8x12x144xf32>
    %9 = arith.maximumf %6, %8 : vector<8x12x144xf32>
    %10 = vector.extract_strided_slice %9 {offsets = [0, 0, 0], sizes = [8, 12, 72], strides = [1, 1, 1]} : vector<8x12x144xf32> to vector<8x12x72xf32>
    %11 = vector.extract_strided_slice %9 {offsets = [0, 0, 72], sizes = [8, 12, 72], strides = [1, 1, 1]} : vector<8x12x144xf32> to vector<8x12x72xf32>
    %12 = arith.maximumf %10, %11 : vector<8x12x72xf32>
    %c0_4 = arith.constant 0 : index
    %c0_5 = arith.constant 0 : index
    %13 = vector.load %arg3[%c0_4, %c0_5] : memref<1x72xf32, #tpu.memory_space<vmem>>, vector<1x72xf32>
    %14 = vector.shape_cast %13 : vector<1x72xf32> to vector<1x1x72xf32>
    %15 = vector.broadcast %14 : vector<1x1x72xf32> to vector<8x12x72xf32>
    %16 = arith.addf %12, %15 : vector<8x12x72xf32>
    %cst_6 = arith.constant 0.000000e+00 : f32
    %17 = vector.broadcast %cst_6 : f32 to vector<8x12x72xf32>
    %18 = arith.maximumf %16, %17 : vector<8x12x72xf32>
    %19 = vector.extract_strided_slice %18 {offsets = [0, 0, 0], sizes = [8, 8, 72], strides = [1, 1, 1]} : vector<8x12x72xf32> to vector<8x8x72xf32>
    %20 = vector.extract_strided_slice %18 {offsets = [0, 1, 0], sizes = [8, 8, 72], strides = [1, 1, 1]} : vector<8x12x72xf32> to vector<8x8x72xf32>
    %21 = vector.extract_strided_slice %18 {offsets = [0, 2, 0], sizes = [8, 8, 72], strides = [1, 1, 1]} : vector<8x12x72xf32> to vector<8x8x72xf32>
    %22 = vector.extract_strided_slice %18 {offsets = [0, 3, 0], sizes = [8, 8, 72], strides = [1, 1, 1]} : vector<8x12x72xf32> to vector<8x8x72xf32>
    %23 = vector.extract_strided_slice %18 {offsets = [0, 4, 0], sizes = [8, 8, 72], strides = [1, 1, 1]} : vector<8x12x72xf32> to vector<8x8x72xf32>
    %24 = tpu.concatenate %19, %20, %21, %22, %23 in 2 : vector<8x8x72xf32>, vector<8x8x72xf32>, vector<8x8x72xf32>, vector<8x8x72xf32>, vector<8x8x72xf32> -> vector<8x8x360xf32>
    %25 = vector.shape_cast %24 : vector<8x8x360xf32> to vector<64x360xf32>
    %c0_7 = arith.constant 0 : index
    %c0_8 = arith.constant 0 : index
    %26 = vector.load %arg4[%c0_7, %c0_8] : memref<360x128xf32, #tpu.memory_space<vmem>>, vector<360x128xf32>
    %cst_9 = arith.constant dense<0.000000e+00> : vector<64x128xf32>
    %27 = tpu.matmul %25, %26, %cst_9 {dimension_numbers = #tpu.dot_dimension_numbers<[1], [0], [0], [1], [0, 0, 1, 1], [], []>} : vector<64x360xf32>, vector<360x128xf32>, vector<64x128xf32> -> vector<64x128xf32>
    %28 = vector.shape_cast %27 : vector<64x128xf32> to vector<8x4x2x128xf32>
    %29 = vector.extract_strided_slice %28 {offsets = [0, 0, 0, 0], sizes = [8, 4, 1, 128], strides = [1, 1, 1, 1]} : vector<8x4x2x128xf32> to vector<8x4x1x128xf32>
    %30 = vector.shape_cast %29 : vector<8x4x1x128xf32> to vector<8x4x128xf32>
    %31 = vector.extract_strided_slice %28 {offsets = [0, 0, 1, 0], sizes = [8, 4, 1, 128], strides = [1, 1, 1, 1]} : vector<8x4x2x128xf32> to vector<8x4x1x128xf32>
    %32 = vector.shape_cast %31 : vector<8x4x1x128xf32> to vector<8x4x128xf32>
    %33 = arith.maximumf %30, %32 : vector<8x4x128xf32>
    %34 = vector.extract_strided_slice %33 {offsets = [0, 0, 0], sizes = [8, 4, 64], strides = [1, 1, 1]} : vector<8x4x128xf32> to vector<8x4x64xf32>
    %35 = vector.extract_strided_slice %33 {offsets = [0, 0, 64], sizes = [8, 4, 64], strides = [1, 1, 1]} : vector<8x4x128xf32> to vector<8x4x64xf32>
    %36 = arith.maximumf %34, %35 : vector<8x4x64xf32>
    %c0_10 = arith.constant 0 : index
    %c0_11 = arith.constant 0 : index
    %37 = vector.load %arg5[%c0_10, %c0_11] : memref<1x64xf32, #tpu.memory_space<vmem>>, vector<1x64xf32>
    %38 = vector.shape_cast %37 : vector<1x64xf32> to vector<1x1x64xf32>
    %39 = vector.broadcast %38 : vector<1x1x64xf32> to vector<8x4x64xf32>
    %40 = arith.addf %36, %39 : vector<8x4x64xf32>
    %cst_12 = arith.constant 0.000000e+00 : f32
    %41 = vector.broadcast %cst_12 : f32 to vector<8x4x64xf32>
    %42 = arith.maximumf %40, %41 : vector<8x4x64xf32>
    %43 = vector.extract_strided_slice %42 {offsets = [0, 0, 0], sizes = [8, 1, 64], strides = [1, 1, 1]} : vector<8x4x64xf32> to vector<8x1x64xf32>
    %44 = vector.shape_cast %43 : vector<8x1x64xf32> to vector<8x64xf32>
    %45 = vector.extract_strided_slice %42 {offsets = [0, 1, 0], sizes = [8, 1, 64], strides = [1, 1, 1]} : vector<8x4x64xf32> to vector<8x1x64xf32>
    %46 = vector.shape_cast %45 : vector<8x1x64xf32> to vector<8x64xf32>
    %47 = vector.extract_strided_slice %42 {offsets = [0, 2, 0], sizes = [8, 1, 64], strides = [1, 1, 1]} : vector<8x4x64xf32> to vector<8x1x64xf32>
    %48 = vector.shape_cast %47 : vector<8x1x64xf32> to vector<8x64xf32>
    %49 = vector.extract_strided_slice %42 {offsets = [0, 3, 0], sizes = [8, 1, 64], strides = [1, 1, 1]} : vector<8x4x64xf32> to vector<8x1x64xf32>
    %50 = vector.shape_cast %49 : vector<8x1x64xf32> to vector<8x64xf32>
    %51 = tpu.concatenate %44, %46, %48, %50 in 1 : vector<8x64xf32>, vector<8x64xf32>, vector<8x64xf32>, vector<8x64xf32> -> vector<8x256xf32>
    %c0_13 = arith.constant 0 : index
    %c0_14 = arith.constant 0 : index
    %52 = vector.load %arg6[%c0_13, %c0_14] : memref<256x128xf32, #tpu.memory_space<vmem>>, vector<256x128xf32>
    %cst_15 = arith.constant dense<0.000000e+00> : vector<8x128xf32>
    %53 = tpu.matmul %51, %52, %cst_15 {dimension_numbers = #tpu.dot_dimension_numbers<[1], [0], [0], [1], [0, 0, 1, 1], [], []>} : vector<8x256xf32>, vector<256x128xf32>, vector<8x128xf32> -> vector<8x128xf32>
    %c0_16 = arith.constant 0 : index
    %c0_17 = arith.constant 0 : index
    %54 = vector.load %arg7[%c0_16, %c0_17] : memref<1x128xf32, #tpu.memory_space<vmem>>, vector<1x128xf32>
    %55 = vector.broadcast %54 : vector<1x128xf32> to vector<8x128xf32>
    %56 = arith.addf %53, %55 : vector<8x128xf32>
    %cst_18 = arith.constant 0.000000e+00 : f32
    %57 = vector.broadcast %cst_18 : f32 to vector<8x128xf32>
    %58 = arith.maximumf %56, %57 : vector<8x128xf32>
    %c0_19 = arith.constant 0 : index
    %c0_20 = arith.constant 0 : index
    %59 = vector.load %arg8[%c0_19, %c0_20] : memref<128x128xf32, #tpu.memory_space<vmem>>, vector<128x128xf32>
    %cst_21 = arith.constant dense<0.000000e+00> : vector<8x128xf32>
    %60 = tpu.matmul %58, %59, %cst_21 {dimension_numbers = #tpu.dot_dimension_numbers<[1], [0], [0], [1], [0, 0, 1, 1], [], []>} : vector<8x128xf32>, vector<128x128xf32>, vector<8x128xf32> -> vector<8x128xf32>
    %c0_22 = arith.constant 0 : index
    %c0_23 = arith.constant 0 : index
    %61 = vector.load %arg9[%c0_22, %c0_23] : memref<1x128xf32, #tpu.memory_space<vmem>>, vector<1x128xf32>
    %62 = vector.broadcast %61 : vector<1x128xf32> to vector<8x128xf32>
    %63 = arith.addf %60, %62 : vector<8x128xf32>
    %cst_24 = arith.constant 0.000000e+00 : f32
    %64 = vector.broadcast %cst_24 : f32 to vector<8x128xf32>
    %65 = arith.maximumf %63, %64 : vector<8x128xf32>
    %c0_25 = arith.constant 0 : index
    %c0_26 = arith.constant 0 : index
    %66 = vector.load %arg10[%c0_25, %c0_26] : memref<128x128xf32, #tpu.memory_space<vmem>>, vector<128x128xf32>
    %cst_27 = arith.constant dense<0.000000e+00> : vector<8x128xf32>
    %67 = tpu.matmul %65, %66, %cst_27 {dimension_numbers = #tpu.dot_dimension_numbers<[1], [0], [0], [1], [0, 0, 1, 1], [], []>} : vector<8x128xf32>, vector<128x128xf32>, vector<8x128xf32> -> vector<8x128xf32>
    %c0_28 = arith.constant 0 : index
    %c0_29 = arith.constant 0 : index
    %68 = vector.load %arg11[%c0_28, %c0_29] : memref<1x128xf32, #tpu.memory_space<vmem>>, vector<1x128xf32>
    %69 = vector.broadcast %68 : vector<1x128xf32> to vector<8x128xf32>
    %70 = arith.addf %67, %69 : vector<8x128xf32>
    %c0_30 = arith.constant 0 : index
    %c0_31 = arith.constant 0 : index
    %71 = vector.load %arg12[%c0_30, %c0_31] : memref<8x128xf32, #tpu.memory_space<vmem>>, vector<8x128xf32>
    tpu.vector_store %arg12[%c0_30, %c0_31], %70 {strides = array<i32>} : memref<8x128xf32, #tpu.memory_space<vmem>>, vector<8x128xf32>,
    return
  }
  func.func @transform_0(%arg0: i32) -> (i32, i32, i32) {
    %c0_i32 = arith.constant 0 : i32
    %c0_i32_0 = arith.constant 0 : i32
    %c0_i32_1 = arith.constant 0 : i32
    return %arg0, %c0_i32, %c0_i32_0 : i32, i32, i32
  }
  func.func @transform_1(%arg0: i32) -> (i32, i32) {
    %c0_i32 = arith.constant 0 : i32
    %c0_i32_0 = arith.constant 0 : i32
    %c0_i32_1 = arith.constant 0 : i32
    return %c0_i32, %c0_i32_0 : i32, i32
  }
  func.func @transform_2(%arg0: i32) -> (i32, i32) {
    %c0_i32 = arith.constant 0 : i32
    %c0_i32_0 = arith.constant 0 : i32
    %c0_i32_1 = arith.constant 0 : i32
    return %c0_i32, %c0_i32_0 : i32, i32
  }
  func.func @transform_3(%arg0: i32) -> (i32, i32) {
    %c0_i32 = arith.constant 0 : i32
    %c0_i32_0 = arith.constant 0 : i32
    %c0_i32_1 = arith.constant 0 : i32
    return %c0_i32, %c0_i32_0 : i32, i32
  }
  func.func @transform_4(%arg0: i32) -> (i32, i32) {
    %c0_i32 = arith.constant 0 : i32
    %c0_i32_0 = arith.constant 0 : i32
    %c0_i32_1 = arith.constant 0 : i32
    return %c0_i32, %c0_i32_0 : i32, i32
  }
  func.func @transform_5(%arg0: i32) -> (i32, i32) {
    %c0_i32 = arith.constant 0 : i32
    %c0_i32_0 = arith.constant 0 : i32
    %c0_i32_1 = arith.constant 0 : i32
    return %c0_i32, %c0_i32_0 : i32, i32
  }
  func.func @transform_6(%arg0: i32) -> (i32, i32) {
    %c0_i32 = arith.constant 0 : i32
    %c0_i32_0 = arith.constant 0 : i32
    %c0_i32_1 = arith.constant 0 : i32
    return %c0_i32, %c0_i32_0 : i32, i32
  }
  func.func @transform_7(%arg0: i32) -> (i32, i32) {
    %c0_i32 = arith.constant 0 : i32
    %c0_i32_0 = arith.constant 0 : i32
    %c0_i32_1 = arith.constant 0 : i32
    return %c0_i32, %c0_i32_0 : i32, i32
  }
  func.func @transform_8(%arg0: i32) -> (i32, i32) {
    %c0_i32 = arith.constant 0 : i32
    %c0_i32_0 = arith.constant 0 : i32
    %c0_i32_1 = arith.constant 0 : i32
    return %c0_i32, %c0_i32_0 : i32, i32
  }
  func.func @transform_9(%arg0: i32) -> (i32, i32) {
    %c0_i32 = arith.constant 0 : i32
    %c0_i32_0 = arith.constant 0 : i32
    %c0_i32_1 = arith.constant 0 : i32
    return %c0_i32, %c0_i32_0 : i32, i32
  }
  func.func @transform_10(%arg0: i32) -> (i32, i32) {
    %c0_i32 = arith.constant 0 : i32
    %c0_i32_0 = arith.constant 0 : i32
    %c0_i32_1 = arith.constant 0 : i32
    return %c0_i32, %c0_i32_0 : i32, i32
  }
  func.func @transform_11(%arg0: i32) -> (i32, i32) {
    %c0_i32 = arith.constant 0 : i32
    %c0_i32_0 = arith.constant 0 : i32
    return %arg0, %c0_i32 : i32, i32
  }
}

</mosaic_0001>

<llo_original>
// kernel: net_forward.1
$region0: #{net_forward.1}
  #allocation0 [shape = 'u32[]', space=smem, size = 0x4, offset = 0x4, fixed_abs, tag = 'smem constant byte address 0x4 - core index']
  #allocation1 [shape = 'u32[144,128]{1,0:T(1,128)}', space=vmem, size = 0x12000, scoped, tag = 'internal scratch']
  %s0 = inlined_call_operand.vmem [shape: f32[8,24,140], index: 0, kind: input, shape index: {}]
  %s1 = inlined_call_operand.vmem [shape: f32[140,144], index: 1, kind: input, shape index: {}]
  %s2 = inlined_call_operand.vmem [shape: f32[1,72], index: 2, kind: input, shape index: {}]
  %s3 = inlined_call_operand.vmem [shape: f32[360,128], index: 3, kind: input, shape index: {}]
  %s4 = inlined_call_operand.vmem [shape: f32[1,64], index: 4, kind: input, shape index: {}]
  %s5 = inlined_call_operand.vmem [shape: f32[256,128], index: 5, kind: input, shape index: {}]
  %s6 = inlined_call_operand.vmem [shape: f32[1,128], index: 6, kind: input, shape index: {}]
  %s7 = inlined_call_operand.vmem [shape: f32[128,128], index: 7, kind: input, shape index: {}]
  %s8 = inlined_call_operand.vmem [shape: f32[1,128], index: 8, kind: input, shape index: {}]
  %s9 = inlined_call_operand.vmem [shape: f32[128,128], index: 9, kind: input, shape index: {}]
  %s10 = inlined_call_operand.vmem [shape: f32[1,128], index: 10, kind: input, shape index: {}]
  %s11 = inlined_call_operand.vmem [shape: f32[8,128], index: 11, kind: output, shape index: {}]
  %s12 = sld [smem:[#allocation0]]
  $region54: #{net_forward.1} parent=0
    _
  %s14 = ssub.s32 1, %s12
  %s15 = scalar_select 0, %s14, %s12
  // Predicated region
  $region2: #{net_forward.1} parent=0 // pred_check
    _
  $region3: #{net_forward.1} parent=0 // pred_check_branch
    %17 = sbr.rel (0) target = $region5
  $region4: #{net_forward.1} parent=0 // pred_region
    _
  $region5: #{net_forward.1} parent=0 // pred_fallthru
    _
  // Predicated region
  $region6: #{net_forward.1} parent=0 // pred_check
    _
  $region7: #{net_forward.1} parent=0 // pred_check_branch
    %19 = sbr.rel (0) target = $region9
  $region8: #{net_forward.1} parent=0 // pred_region
    _
  $region9: #{net_forward.1} parent=0 // pred_fallthru
    _
  // Predicated region
  $region10: #{net_forward.1} parent=0 // pred_check
    _
  $region11: #{net_forward.1} parent=0 // pred_check_branch
    %21 = sbr.rel (0) target = $region13
  $region12: #{net_forward.1} parent=0 // pred_region
    _
  $region13: #{net_forward.1} parent=0 // pred_fallthru
    _
  // Predicated region
  $region14: #{net_forward.1} parent=0 // pred_check
    _
  $region15: #{net_forward.1} parent=0 // pred_check_branch
    %23 = sbr.rel (0) target = $region17
  $region16: #{net_forward.1} parent=0 // pred_region
    _
  $region17: #{net_forward.1} parent=0 // pred_fallthru
    _
  // Predicated region
  $region18: #{net_forward.1} parent=0 // pred_check
    _
  $region19: #{net_forward.1} parent=0 // pred_check_branch
    %25 = sbr.rel (0) target = $region21
  $region20: #{net_forward.1} parent=0 // pred_region
    _
  $region21: #{net_forward.1} parent=0 // pred_fallthru
    _
  // Predicated region
  $region22: #{net_forward.1} parent=0 // pred_check
    _
  $region23: #{net_forward.1} parent=0 // pred_check_branch
    %27 = sbr.rel (0) target = $region25
  $region24: #{net_forward.1} parent=0 // pred_region
    _
  $region25: #{net_forward.1} parent=0 // pred_fallthru
    _
  // Predicated region
  $region26: #{net_forward.1} parent=0 // pred_check
    _
  $region27: #{net_forward.1} parent=0 // pred_check_branch
    %29 = sbr.rel (0) target = $region29
  $region28: #{net_forward.1} parent=0 // pred_region
    _
  $region29: #{net_forward.1} parent=0 // pred_fallthru
    _
  // Predicated region
  $region30: #{net_forward.1} parent=0 // pred_check
    _
  $region31: #{net_forward.1} parent=0 // pred_check_branch
    %31 = sbr.rel (0) target = $region33
  $region32: #{net_forward.1} parent=0 // pred_region
    _
  $region33: #{net_forward.1} parent=0 // pred_fallthru
    _
  // Predicated region
  $region34: #{net_forward.1} parent=0 // pred_check
    _
  $region35: #{net_forward.1} parent=0 // pred_check_branch
    %33 = sbr.rel (0) target = $region37
  $region36: #{net_forward.1} parent=0 // pred_region
    _
  $region37: #{net_forward.1} parent=0 // pred_fallthru
    _
  // Predicated region
  $region38: #{net_forward.1} parent=0 // pred_check
    _
  $region39: #{net_forward.1} parent=0 // pred_check_branch
    %35 = sbr.rel (0) target = $region41
  $region40: #{net_forward.1} parent=0 // pred_region
    _
  $region41: #{net_forward.1} parent=0 // pred_fallthru
    _
  // Predicated region
  $region42: #{net_forward.1} parent=0 // pred_check
    _
  $region43: #{net_forward.1} parent=0 // pred_check_branch
    %37 = sbr.rel (0) target = $region45
  $region44: #{net_forward.1} parent=0 // pred_region
    _
  $region45: #{net_forward.1} parent=0 // pred_fallthru
    _
  %v38 = vld [vmem:[%s0] sm:$0xff]
  %v39 = vld [vmem:[%s0 + $0x8] sm:$0xff]
  %v40 = vld [vmem:[%s0 + $0x10] sm:$0xff]
  %v41 = vld [vmem:[%s0 + $0x18] sm:$0xff]
  %v42 = vld [vmem:[%s0 + $0x20] sm:$0xff]
  %v43 = vld [vmem:[%s0 + $0x28] sm:$0xff]
  %v44 = vld [vmem:[%s0 + $0x30] sm:$0xff]
  %v45 = vld [vmem:[%s0 + $0x38] sm:$0xff]
  %v46 = vld [vmem:[%s0 + $0x40] sm:$0xff]
  %v47 = vld [vmem:[%s0 + $0x48] sm:$0xff]
  %v48 = vld [vmem:[%s0 + $0x50] sm:$0xff]
  %v49 = vld [vmem:[%s0 + $0x58] sm:$0xff]
  %v50 = vld [vmem:[%s0 + $0x60] sm:$0xff]
  %v51 = vld [vmem:[%s0 + $0x68] sm:$0xff]
  %v52 = vld [vmem:[%s0 + $0x70] sm:$0xff]
  %v53 = vld [vmem:[%s0 + $0x78] sm:$0xff]
  %v54 = vld [vmem:[%s0 + $0x80] sm:$0xff]
  %v55 = vld [vmem:[%s0 + $0x88] sm:$0xff]
  %v56 = vld [vmem:[%s0 + $0x90] sm:$0xff]
  %v57 = vld [vmem:[%s0 + $0x98] sm:$0xff]
  %v58 = vld [vmem:[%s0 + $0xa0] sm:$0xff]
  %v59 = vld [vmem:[%s0 + $0xa8] sm:$0xff]
  %v60 = vld [vmem:[%s0 + $0xb0] sm:$0xff]
  %v61 = vld [vmem:[%s0 + $0xb8] sm:$0xff]
  %v62 = vld [vmem:[%s0 + $0xc0] sm:$0xff]
  %v63 = vld [vmem:[%s0 + $0xc8] sm:$0xff]
  %v64 = vld [vmem:[%s0 + $0xd0] sm:$0xff]
  %v65 = vld [vmem:[%s0 + $0xd8] sm:$0xff]
  %v66 = vld [vmem:[%s0 + $0xe0] sm:$0xff]
  %v67 = vld [vmem:[%s0 + $0xe8] sm:$0xff]
  %v68 = vld [vmem:[%s0 + $0xf0] sm:$0xff]
  %v69 = vld [vmem:[%s0 + $0xf8] sm:$0xff]
  %v70 = vld [vmem:[%s0 + $0x100] sm:$0xff]
  %v71 = vld [vmem:[%s0 + $0x108] sm:$0xff]
  %v72 = vld [vmem:[%s0 + $0x110] sm:$0xff]
  %v73 = vld [vmem:[%s0 + $0x118] sm:$0xff]
  %v74 = vld [vmem:[%s0 + $0x120] sm:$0xff]
  %v75 = vld [vmem:[%s0 + $0x128] sm:$0xff]
  %v76 = vld [vmem:[%s0 + $0x130] sm:$0xff]
  %v77 = vld [vmem:[%s0 + $0x138] sm:$0xff]
  %v78 = vld [vmem:[%s0 + $0x140] sm:$0xff]
  %v79 = vld [vmem:[%s0 + $0x148] sm:$0xff]
  %v80 = vld [vmem:[%s0 + $0x150] sm:$0xff]
  %v81 = vld [vmem:[%s0 + $0x158] sm:$0xff]
  %v82 = vld [vmem:[%s0 + $0x160] sm:$0xff]
  %v83 = vld [vmem:[%s0 + $0x168] sm:$0xff]
  %v84 = vld [vmem:[%s0 + $0x170] sm:$0xff]
  %v85 = vld [vmem:[%s0 + $0x178] sm:$0xff]
  %v86 = vld [vmem:[%s1] sm:$0xff]
  %v87 = vld [vmem:[%s1 + $0x8] sm:$0xff]
  %v88 = vld [vmem:[%s1 + $0x10] sm:$0xff]
  %v89 = vld [vmem:[%s1 + $0x18] sm:$0xff]
  %v90 = vld [vmem:[%s1 + $0x20] sm:$0xff]
  %v91 = vld [vmem:[%s1 + $0x28] sm:$0xff]
  %v92 = vld [vmem:[%s1 + $0x30] sm:$0xff]
  %v93 = vld [vmem:[%s1 + $0x38] sm:$0xff]
  %v94 = vld [vmem:[%s1 + $0x40] sm:$0xff]
  %v95 = vld [vmem:[%s1 + $0x48] sm:$0xff]
  %v96 = vld [vmem:[%s1 + $0x50] sm:$0xff]
  %v97 = vld [vmem:[%s1 + $0x58] sm:$0xff]
  %v98 = vld [vmem:[%s1 + $0x60] sm:$0xff]
  %v99 = vld [vmem:[%s1 + $0x68] sm:$0xff]
  %v100 = vld [vmem:[%s1 + $0x70] sm:$0xff]
  %v101 = vld [vmem:[%s1 + $0x78] sm:$0xff]
  %v102 = vld [vmem:[%s1 + $0x80] sm:$0xff]
  %v103 = vld [vmem:[%s1 + $0x88] sm:$0xff]
  %v104 = vld [vmem:[%s1 + $0x90] sm:$0xff]
  %v105 = vld [vmem:[%s1 + $0x98] sm:$0xff]
  %v106 = vld [vmem:[%s1 + $0xa0] sm:$0xff]
  %v107 = vld [vmem:[%s1 + $0xa8] sm:$0xff]
  %v108 = vld [vmem:[%s1 + $0xb0] sm:$0xff]
  %v109 = vld [vmem:[%s1 + $0xb8] sm:$0xff]
  %v110 = vld [vmem:[%s1 + $0xc0] sm:$0xff]
  %v111 = vld [vmem:[%s1 + $0xc8] sm:$0xff]
  %v112 = vld [vmem:[%s1 + $0xd0] sm:$0xff]
  %v113 = vld [vmem:[%s1 + $0xd8] sm:$0xff]
  %v114 = vld [vmem:[%s1 + $0xe0] sm:$0xff]
  %v115 = vld [vmem:[%s1 + $0xe8] sm:$0xff]
  %v116 = vld [vmem:[%s1 + $0xf0] sm:$0xff]
  %v117 = vld [vmem:[%s1 + $0xf8] sm:$0xff]
  %v118 = vld [vmem:[%s1 + $0x100] sm:$0xff]
  %v119 = vld [vmem:[%s1 + $0x108] sm:$0xff]
  %v120 = vld [vmem:[%s1 + $0x110] sm:$0xf]
  %v121 = vld [vmem:[%s1 + $0x118] sm:$0xf]
  %vm122 = vcmask 97280
  %v124 = vsel %vm122, %v39, 0
  %v127 = vsel %vm122, %v41, 0
  %v130 = vsel %vm122, %v43, 0
  %v133 = vsel %vm122, %v45, 0
  %v136 = vsel %vm122, %v47, 0
  %v139 = vsel %vm122, %v49, 0
  %v142 = vsel %vm122, %v51, 0
  %v145 = vsel %vm122, %v53, 0
  %v148 = vsel %vm122, %v55, 0
  %v151 = vsel %vm122, %v57, 0
  %v154 = vsel %vm122, %v59, 0
  %v157 = vsel %vm122, %v61, 0
  %v160 = vsel %vm122, %v63, 0
  %v163 = vsel %vm122, %v65, 0
  %v166 = vsel %vm122, %v67, 0
  %v169 = vsel %vm122, %v69, 0
  %v172 = vsel %vm122, %v71, 0
  %v175 = vsel %vm122, %v73, 0
  %v178 = vsel %vm122, %v75, 0
  %v181 = vsel %vm122, %v77, 0
  %v184 = vsel %vm122, %v79, 0
  %v187 = vsel %vm122, %v81, 0
  %v190 = vsel %vm122, %v83, 0
  %v193 = vsel %vm122, %v85, 0
  %vm195 = vcmask 1043456
  %v197 = vsel %vm195, %v120, 0
  %v200 = vsel %vm195, %v121, 0
  %202 = vmatprep.subr.mxu0 %v117
  %203 = vmatpush1.msra.mxu0 %v116
  %204 = vmatprep.subr.mxu0 %v115
  %205 = vmatpush1.msra.mxu0 %v114
  %206 = vmatprep.subr.mxu0 %v113
  %207 = vmatpush1.msra.mxu0 %v112
  %208 = vmatprep.subr.mxu0 %v111
  %209 = vmatpush1.msra.mxu0 %v110
  %210 = vmatprep.subr.mxu0 %v109
  %211 = vmatpush1.msra.mxu0 %v108
  %212 = vmatprep.subr.mxu0 %v107
  %213 = vmatpush1.msra.mxu0 %v106
  %214 = vmatprep.subr.mxu0 %v105
  %215 = vmatpush1.msra.mxu0 %v104
  %216 = vmatprep.subr.mxu0 %v103
  %217 = vmatpush1.msra.mxu0 %v102
  %218 = vmatprep.subr.mxu0 %v101
  %219 = vmatpush1.msra.mxu0 %v100
  %220 = vmatprep.subr.mxu0 %v99
  %221 = vmatpush1.msra.mxu0 %v98
  %222 = vmatprep.subr.mxu0 %v97
  %223 = vmatpush1.msra.mxu0 %v96
  %224 = vmatprep.subr.mxu0 %v95
  %225 = vmatpush1.msra.mxu0 %v94
  %226 = vmatprep.subr.mxu0 %v93
  %227 = vmatpush1.msra.mxu0 %v92
  %228 = vmatprep.subr.mxu0 %v91
  %229 = vmatpush1.msra.mxu0 %v90
  %230 = vmatprep.subr.mxu0 %v89
  %231 = vmatpush1.msra.mxu0 %v88
  %232 = vmatprep.subr.mxu0 %v87
  %233 = vmatpush1.msra.mxu0 %v86
  %234 = vmatprep.subr.mxu0 0.0
  %235 = vmatpush2.msra.mxu0 0.0
  %236 = vmatprep.subr.mxu0 0.0
  %237 = vmatpush2.msra.mxu0 0.0
  %238 = vmatprep.subr.mxu0 0.0
  %239 = vmatpush2.msra.mxu0 0.0
  %240 = vmatprep.subr.mxu0 0.0
  %241 = vmatpush2.msra.mxu0 0.0
  %242 = vmatprep.subr.mxu0 0.0
  %243 = vmatpush2.msra.mxu0 0.0
  %244 = vmatprep.subr.mxu0 0.0
  %245 = vmatpush2.msra.mxu0 0.0
  %246 = vmatprep.subr.mxu0 0.0
  %247 = vmatpush2.msra.mxu0 0.0
  %248 = vmatprep.subr.mxu0 0.0
  %249 = vmatpush2.msra.mxu0 0.0
  %250 = vmatprep.subr.mxu0 0.0
  %251 = vmatpush2.msra.mxu0 0.0
  %252 = vmatprep.subr.mxu0 0.0
  %253 = vmatpush2.msra.mxu0 0.0
  %254 = vmatprep.subr.mxu0 0.0
  %255 = vmatpush2.msra.mxu0 0.0
  %256 = vmatprep.subr.mxu0 0.0
  %257 = vmatpush2.msra.mxu0 0.0
  %258 = vmatprep.subr.mxu0 0.0
  %259 = vmatpush2.msra.mxu0 0.0
  %260 = vmatprep.subr.mxu0 0.0
  %261 = vmatpush2.msra.mxu0 0.0
  %262 = vmatprep.subr.mxu0 %v200
  %263 = vmatpush2.msra.mxu0 %v197
  %264 = vmatprep.subr.mxu0 %v119
  %265 = vmatpush2.msra.mxu0 %v118
  %266 = vmatprep.mubr.f32.mxu0 %v124
  %267 = vmatmul.mubr.f32.gmra.mxu0 %v38
  %v268 = vpop.f32.mrf.mxu0
  %v269 = vadd.f32 0.0, %v268
  %v270 = vpop.f32.mrf.mxu0
  %v271 = vadd.f32 0.0, %v270
  %272 = vmatprep.mubr.f32.mxu0 %v127
  %273 = vmatmul.mubr.f32.gmra.mxu0 %v40
  %v274 = vpop.f32.mrf.mxu0
  %v275 = vadd.f32 0.0, %v274
  %v276 = vpop.f32.mrf.mxu0
  %v277 = vadd.f32 0.0, %v276
  %278 = vmatprep.mubr.f32.mxu0 %v130
  %279 = vmatmul.mubr.f32.gmra.mxu0 %v42
  %v280 = vpop.f32.mrf.mxu0
  %v281 = vadd.f32 0.0, %v280
  %v282 = vpop.f32.mrf.mxu0
  %v283 = vadd.f32 0.0, %v282
  %284 = vmatprep.mubr.f32.mxu0 %v133
  %285 = vmatmul.mubr.f32.gmra.mxu0 %v44
  %v286 = vpop.f32.mrf.mxu0
  %v287 = vadd.f32 0.0, %v286
  %v288 = vpop.f32.mrf.mxu0
  %v289 = vadd.f32 0.0, %v288
  %290 = vmatprep.mubr.f32.mxu0 %v136
  %291 = vmatmul.mubr.f32.gmra.mxu0 %v46
  %v292 = vpop.f32.mrf.mxu0
  %v293 = vadd.f32 0.0, %v292
  %v294 = vpop.f32.mrf.mxu0
  %v295 = vadd.f32 0.0, %v294
  %296 = vmatprep.mubr.f32.mxu0 %v139
  %297 = vmatmul.mubr.f32.gmra.mxu0 %v48
  %v298 = vpop.f32.mrf.mxu0
  %v299 = vadd.f32 0.0, %v298
  %v300 = vpop.f32.mrf.mxu0
  %v301 = vadd.f32 0.0, %v300
  %302 = vmatprep.mubr.f32.mxu0 %v142
  %303 = vmatmul.mubr.f32.gmra.mxu0 %v50
  %v304 = vpop.f32.mrf.mxu0
  %v305 = vadd.f32 0.0, %v304
  %v306 = vpop.f32.mrf.mxu0
  %v307 = vadd.f32 0.0, %v306
  %308 = vmatprep.mubr.f32.mxu0 %v145
  %309 = vmatmul.mubr.f32.gmra.mxu0 %v52
  %v310 = vpop.f32.mrf.mxu0
  %v311 = vadd.f32 0.0, %v310
  %v312 = vpop.f32.mrf.mxu0
  %v313 = vadd.f32 0.0, %v312
  %314 = vmatprep.mubr.f32.mxu0 %v148
  %315 = vmatmul.mubr.f32.gmra.mxu0 %v54
  %v316 = vpop.f32.mrf.mxu0
  %v317 = vadd.f32 0.0, %v316
  %v318 = vpop.f32.mrf.mxu0
  %v319 = vadd.f32 0.0, %v318
  %320 = vmatprep.mubr.f32.mxu0 %v151
  %321 = vmatmul.mubr.f32.gmra.mxu0 %v56
  %v322 = vpop.f32.mrf.mxu0
  %v323 = vadd.f32 0.0, %v322
  %v324 = vpop.f32.mrf.mxu0
  %v325 = vadd.f32 0.0, %v324
  %326 = vmatprep.mubr.f32.mxu0 %v154
  %327 = vmatmul.mubr.f32.gmra.mxu0 %v58
  %v328 = vpop.f32.mrf.mxu0
  %v329 = vadd.f32 0.0, %v328
  %v330 = vpop.f32.mrf.mxu0
  %v331 = vadd.f32 0.0, %v330
  %332 = vmatprep.mubr.f32.mxu0 %v157
  %333 = vmatmul.mubr.f32.gmra.mxu0 %v60
  %v334 = vpop.f32.mrf.mxu0
  %v335 = vadd.f32 0.0, %v334
  %v336 = vpop.f32.mrf.mxu0
  %v337 = vadd.f32 0.0, %v336
  %338 = vmatprep.mubr.f32.mxu0 %v160
  %339 = vmatmul.mubr.f32.gmra.mxu0 %v62
  %v340 = vpop.f32.mrf.mxu0
  %v341 = vadd.f32 0.0, %v340
  %v342 = vpop.f32.mrf.mxu0
  %v343 = vadd.f32 0.0, %v342
  %344 = vmatprep.mubr.f32.mxu0 %v163
  %345 = vmatmul.mubr.f32.gmra.mxu0 %v64
  %v346 = vpop.f32.mrf.mxu0
  %v347 = vadd.f32 0.0, %v346
  %v348 = vpop.f32.mrf.mxu0
  %v349 = vadd.f32 0.0, %v348
  %350 = vmatprep.mubr.f32.mxu0 %v166
  %351 = vmatmul.mubr.f32.gmra.mxu0 %v66
  %v352 = vpop.f32.mrf.mxu0
  %v353 = vadd.f32 0.0, %v352
  %v354 = vpop.f32.mrf.mxu0
  %v355 = vadd.f32 0.0, %v354
  %356 = vmatprep.mubr.f32.mxu0 %v169
  %357 = vmatmul.mubr.f32.gmra.mxu0 %v68
  %v358 = vpop.f32.mrf.mxu0
  %v359 = vadd.f32 0.0, %v358
  %v360 = vpop.f32.mrf.mxu0
  %v361 = vadd.f32 0.0, %v360
  %362 = vmatprep.mubr.f32.mxu0 %v172
  %363 = vmatmul.mubr.f32.gmra.mxu0 %v70
  %v364 = vpop.f32.mrf.mxu0
  %v365 = vadd.f32 0.0, %v364
  %v366 = vpop.f32.mrf.mxu0
  %v367 = vadd.f32 0.0, %v366
  %368 = vmatprep.mubr.f32.mxu0 %v175
  %369 = vmatmul.mubr.f32.gmra.mxu0 %v72
  %v370 = vpop.f32.mrf.mxu0
  %v371 = vadd.f32 0.0, %v370
  %v372 = vpop.f32.mrf.mxu0
  %v373 = vadd.f32 0.0, %v372
  %374 = vmatprep.mubr.f32.mxu0 %v178
  %375 = vmatmul.mubr.f32.gmra.mxu0 %v74
  %v376 = vpop.f32.mrf.mxu0
  %v377 = vadd.f32 0.0, %v376
  %v378 = vpop.f32.mrf.mxu0
  %v379 = vadd.f32 0.0, %v378
  %380 = vmatprep.mubr.f32.mxu0 %v181
  %381 = vmatmul.mubr.f32.gmra.mxu0 %v76
  %v382 = vpop.f32.mrf.mxu0
  %v383 = vadd.f32 0.0, %v382
  %v384 = vpop.f32.mrf.mxu0
  %v385 = vadd.f32 0.0, %v384
  %386 = vmatprep.mubr.f32.mxu0 %v184
  %387 = vmatmul.mubr.f32.gmra.mxu0 %v78
  %v388 = vpop.f32.mrf.mxu0
  %v389 = vadd.f32 0.0, %v388
  %v390 = vpop.f32.mrf.mxu0
  %v391 = vadd.f32 0.0, %v390
  %392 = vmatprep.mubr.f32.mxu0 %v187
  %393 = vmatmul.mubr.f32.gmra.mxu0 %v80
  %v394 = vpop.f32.mrf.mxu0
  %v395 = vadd.f32 0.0, %v394
  %v396 = vpop.f32.mrf.mxu0
  %v397 = vadd.f32 0.0, %v396
  %398 = vmatprep.mubr.f32.mxu0 %v190
  %399 = vmatmul.mubr.f32.gmra.mxu0 %v82
  %v400 = vpop.f32.mrf.mxu0
  %v401 = vadd.f32 0.0, %v400
  %v402 = vpop.f32.mrf.mxu0
  %v403 = vadd.f32 0.0, %v402
  %404 = vmatprep.mubr.f32.mxu0 %v193
  %405 = vmatmul.mubr.f32.gmra.mxu0 %v84
  %v406 = vpop.f32.mrf.mxu0
  %v407 = vadd.f32 0.0, %v406
  %v408 = vpop.f32.mrf.mxu0
  %v409 = vadd.f32 0.0, %v408
  %410 = vdwg.mxu0
  %v459 = vcombine.low %v269, %v271
  %v460 = vcombine.high %v269, %v271
  %v462 = vunpack.c.l.s4 1983009808
  %v463 = vunpack.c.0.s8 %v462
  %v464 = vlaneseq
  %v465 = vshrl.u32 %v464, 7
  %v466 = vsub.s32 %v463, %v465
  %v467 = vrot.slane %v459, %v466
  %v469 = vunpack.c.l.s4 1983009808
  %v470 = vunpack.c.0.s8 %v469
  %v471 = vlaneseq
  %v472 = vshrl.u32 %v471, 7
  %v473 = vsub.s32 %v470, %v472
  %v474 = vrot.slane %v460, %v473
  %v475 = vcombine.high %v467, %v467
  %v476 = vcombine.high %v474, %v474
  %v477 = vcombine.low %v275, %v277
  %v478 = vcombine.high %v275, %v277
  %v480 = vunpack.c.l.s4 1983009808
  %v481 = vunpack.c.0.s8 %v480
  %v482 = vlaneseq
  %v483 = vshrl.u32 %v482, 7
  %v484 = vsub.s32 %v481, %v483
  %v485 = vrot.slane %v477, %v484
  %v487 = vunpack.c.l.s4 1983009808
  %v488 = vunpack.c.0.s8 %v487
  %v489 = vlaneseq
  %v490 = vshrl.u32 %v489, 7
  %v491 = vsub.s32 %v488, %v490
  %v492 = vrot.slane %v478, %v491
  %v493 = vcombine.high %v485, %v485
  %v494 = vcombine.high %v492, %v492
  %v495 = vcombine.low %v281, %v283
  %v496 = vcombine.high %v281, %v283
  %v498 = vunpack.c.l.s4 1983009808
  %v499 = vunpack.c.0.s8 %v498
  %v500 = vlaneseq
  %v501 = vshrl.u32 %v500, 7
  %v502 = vsub.s32 %v499, %v501
  %v503 = vrot.slane %v495, %v502
  %v505 = vunpack.c.l.s4 1983009808
  %v506 = vunpack.c.0.s8 %v505
  %v507 = vlaneseq
  %v508 = vshrl.u32 %v507, 7
  %v509 = vsub.s32 %v506, %v508
  %v510 = vrot.slane %v496, %v509
  %v511 = vcombine.high %v503, %v503
  %v512 = vcombine.high %v510, %v510
  %v513 = vcombine.low %v287, %v289
  %v514 = vcombine.high %v287, %v289
  %v516 = vunpack.c.l.s4 1983009808
  %v517 = vunpack.c.0.s8 %v516
  %v518 = vlaneseq
  %v519 = vshrl.u32 %v518, 7
  %v520 = vsub.s32 %v517, %v519
  %v521 = vrot.slane %v513, %v520
  %v523 = vunpack.c.l.s4 1983009808
  %v524 = vunpack.c.0.s8 %v523
  %v525 = vlaneseq
  %v526 = vshrl.u32 %v525, 7
  %v527 = vsub.s32 %v524, %v526
  %v528 = vrot.slane %v514, %v527
  %v529 = vcombine.high %v521, %v521
  %v530 = vcombine.high %v528, %v528
  %v531 = vcombine.low %v293, %v295
  %v532 = vcombine.high %v293, %v295
  %v534 = vunpack.c.l.s4 1983009808
  %v535 = vunpack.c.0.s8 %v534
  %v536 = vlaneseq
  %v537 = vshrl.u32 %v536, 7
  %v538 = vsub.s32 %v535, %v537
  %v539 = vrot.slane %v531, %v538
  %v541 = vunpack.c.l.s4 1983009808
  %v542 = vunpack.c.0.s8 %v541
  %v543 = vlaneseq
  %v544 = vshrl.u32 %v543, 7
  %v545 = vsub.s32 %v542, %v544
  %v546 = vrot.slane %v532, %v545
  %v547 = vcombine.high %v539, %v539
  %v548 = vcombine.high %v546, %v546
  %v549 = vcombine.low %v299, %v301
  %v550 = vcombine.high %v299, %v301
  %v552 = vunpack.c.l.s4 1983009808
  %v553 = vunpack.c.0.s8 %v552
  %v554 = vlaneseq
  %v555 = vshrl.u32 %v554, 7
  %v556 = vsub.s32 %v553, %v555
  %v557 = vrot.slane %v549, %v556
  %v559 = vunpack.c.l.s4 1983009808
  %v560 = vunpack.c.0.s8 %v559
  %v561 = vlaneseq
  %v562 = vshrl.u32 %v561, 7
  %v563 = vsub.s32 %v560, %v562
  %v564 = vrot.slane %v550, %v563
  %v565 = vcombine.high %v557, %v557
  %v566 = vcombine.high %v564, %v564
  %v567 = vcombine.low %v305, %v307
  %v568 = vcombine.high %v305, %v307
  %v570 = vunpack.c.l.s4 1983009808
  %v571 = vunpack.c.0.s8 %v570
  %v572 = vlaneseq
  %v573 = vshrl.u32 %v572, 7
  %v574 = vsub.s32 %v571, %v573
  %v575 = vrot.slane %v567, %v574
  %v577 = vunpack.c.l.s4 1983009808
  %v578 = vunpack.c.0.s8 %v577
  %v579 = vlaneseq
  %v580 = vshrl.u32 %v579, 7
  %v581 = vsub.s32 %v578, %v580
  %v582 = vrot.slane %v568, %v581
  %v583 = vcombine.high %v575, %v575
  %v584 = vcombine.high %v582, %v582
  %v585 = vcombine.low %v311, %v313
  %v586 = vcombine.high %v311, %v313
  %v588 = vunpack.c.l.s4 1983009808
  %v589 = vunpack.c.0.s8 %v588
  %v590 = vlaneseq
  %v591 = vshrl.u32 %v590, 7
  %v592 = vsub.s32 %v589, %v591
  %v593 = vrot.slane %v585, %v592
  %v595 = vunpack.c.l.s4 1983009808
  %v596 = vunpack.c.0.s8 %v595
  %v597 = vlaneseq
  %v598 = vshrl.u32 %v597, 7
  %v599 = vsub.s32 %v596, %v598
  %v600 = vrot.slane %v586, %v599
  %v601 = vcombine.high %v593, %v593
  %v602 = vcombine.high %v600, %v600
  %v603 = vcombine.low %v317, %v319
  %v604 = vcombine.high %v317, %v319
  %v606 = vunpack.c.l.s4 1983009808
  %v607 = vunpack.c.0.s8 %v606
  %v608 = vlaneseq
  %v609 = vshrl.u32 %v608, 7
  %v610 = vsub.s32 %v607, %v609
  %v611 = vrot.slane %v603, %v610
  %v613 = vunpack.c.l.s4 1983009808
  %v614 = vunpack.c.0.s8 %v613
  %v615 = vlaneseq
  %v616 = vshrl.u32 %v615, 7
  %v617 = vsub.s32 %v614, %v616
  %v618 = vrot.slane %v604, %v617
  %v619 = vcombine.high %v611, %v611
  %v620 = vcombine.high %v618, %v618
  %v621 = vcombine.low %v323, %v325
  %v622 = vcombine.high %v323, %v325
  %v624 = vunpack.c.l.s4 1983009808
  %v625 = vunpack.c.0.s8 %v624
  %v626 = vlaneseq
  %v627 = vshrl.u32 %v626, 7
  %v628 = vsub.s32 %v625, %v627
  %v629 = vrot.slane %v621, %v628
  %v631 = vunpack.c.l.s4 1983009808
  %v632 = vunpack.c.0.s8 %v631
  %v633 = vlaneseq
  %v634 = vshrl.u32 %v633, 7
  %v635 = vsub.s32 %v632, %v634
  %v636 = vrot.slane %v622, %v635
  %v637 = vcombine.high %v629, %v629
  %v638 = vcombine.high %v636, %v636
  %v639 = vcombine.low %v329, %v331
  %v640 = vcombine.high %v329, %v331
  %v642 = vunpack.c.l.s4 1983009808
  %v643 = vunpack.c.0.s8 %v642
  %v644 = vlaneseq
  %v645 = vshrl.u32 %v644, 7
  %v646 = vsub.s32 %v643, %v645
  %v647 = vrot.slane %v639, %v646
  %v649 = vunpack.c.l.s4 1983009808
  %v650 = vunpack.c.0.s8 %v649
  %v651 = vlaneseq
  %v652 = vshrl.u32 %v651, 7
  %v653 = vsub.s32 %v650, %v652
  %v654 = vrot.slane %v640, %v653
  %v655 = vcombine.high %v647, %v647
  %v656 = vcombine.high %v654, %v654
  %v657 = vcombine.low %v335, %v337
  %v658 = vcombine.high %v335, %v337
  %v660 = vunpack.c.l.s4 1983009808
  %v661 = vunpack.c.0.s8 %v660
  %v662 = vlaneseq
  %v663 = vshrl.u32 %v662, 7
  %v664 = vsub.s32 %v661, %v663
  %v665 = vrot.slane %v657, %v664
  %v667 = vunpack.c.l.s4 1983009808
  %v668 = vunpack.c.0.s8 %v667
  %v669 = vlaneseq
  %v670 = vshrl.u32 %v669, 7
  %v671 = vsub.s32 %v668, %v670
  %v672 = vrot.slane %v658, %v671
  %v673 = vcombine.high %v665, %v665
  %v674 = vcombine.high %v672, %v672
  %v675 = vcombine.low %v341, %v343
  %v676 = vcombine.high %v341, %v343
  %v678 = vunpack.c.l.s4 1983009808
  %v679 = vunpack.c.0.s8 %v678
  %v680 = vlaneseq
  %v681 = vshrl.u32 %v680, 7
  %v682 = vsub.s32 %v679, %v681
  %v683 = vrot.slane %v675, %v682
  %v685 = vunpack.c.l.s4 1983009808
  %v686 = vunpack.c.0.s8 %v685
  %v687 = vlaneseq
  %v688 = vshrl.u32 %v687, 7
  %v689 = vsub.s32 %v686, %v688
  %v690 = vrot.slane %v676, %v689
  %v691 = vcombine.high %v683, %v683
  %v692 = vcombine.high %v690, %v690
  %v693 = vcombine.low %v347, %v349
  %v694 = vcombine.high %v347, %v349
  %v696 = vunpack.c.l.s4 1983009808
  %v697 = vunpack.c.0.s8 %v696
  %v698 = vlaneseq
  %v699 = vshrl.u32 %v698, 7
  %v700 = vsub.s32 %v697, %v699
  %v701 = vrot.slane %v693, %v700
  %v703 = vunpack.c.l.s4 1983009808
  %v704 = vunpack.c.0.s8 %v703
  %v705 = vlaneseq
  %v706 = vshrl.u32 %v705, 7
  %v707 = vsub.s32 %v704, %v706
  %v708 = vrot.slane %v694, %v707
  %v709 = vcombine.high %v701, %v701
  %v710 = vcombine.high %v708, %v708
  %v711 = vcombine.low %v353, %v355
  %v712 = vcombine.high %v353, %v355
  %v714 = vunpack.c.l.s4 1983009808
  %v715 = vunpack.c.0.s8 %v714
  %v716 = vlaneseq
  %v717 = vshrl.u32 %v716, 7
  %v718 = vsub.s32 %v715, %v717
  %v719 = vrot.slane %v711, %v718
  %v721 = vunpack.c.l.s4 1983009808
  %v722 = vunpack.c.0.s8 %v721
  %v723 = vlaneseq
  %v724 = vshrl.u32 %v723, 7
  %v725 = vsub.s32 %v722, %v724
  %v726 = vrot.slane %v712, %v725
  %v727 = vcombine.high %v719, %v719
  %v728 = vcombine.high %v726, %v726
  %v729 = vcombine.low %v359, %v361
  %v730 = vcombine.high %v359, %v361
  %v732 = vunpack.c.l.s4 1983009808
  %v733 = vunpack.c.0.s8 %v732
  %v734 = vlaneseq
  %v735 = vshrl.u32 %v734, 7
  %v736 = vsub.s32 %v733, %v735
  %v737 = vrot.slane %v729, %v736
  %v739 = vunpack.c.l.s4 1983009808
  %v740 = vunpack.c.0.s8 %v739
  %v741 = vlaneseq
  %v742 = vshrl.u32 %v741, 7
  %v743 = vsub.s32 %v740, %v742
  %v744 = vrot.slane %v730, %v743
  %v745 = vcombine.high %v737, %v737
  %v746 = vcombine.high %v744, %v744
  %v747 = vcombine.low %v365, %v367
  %v748 = vcombine.high %v365, %v367
  %v750 = vunpack.c.l.s4 1983009808
  %v751 = vunpack.c.0.s8 %v750
  %v752 = vlaneseq
  %v753 = vshrl.u32 %v752, 7
  %v754 = vsub.s32 %v751, %v753
  %v755 = vrot.slane %v747, %v754
  %v757 = vunpack.c.l.s4 1983009808
  %v758 = vunpack.c.0.s8 %v757
  %v759 = vlaneseq
  %v760 = vshrl.u32 %v759, 7
  %v761 = vsub.s32 %v758, %v760
  %v762 = vrot.slane %v748, %v761
  %v763 = vcombine.high %v755, %v755
  %v764 = vcombine.high %v762, %v762
  %v765 = vcombine.low %v371, %v373
  %v766 = vcombine.high %v371, %v373
  %v768 = vunpack.c.l.s4 1983009808
  %v769 = vunpack.c.0.s8 %v768
  %v770 = vlaneseq
  %v771 = vshrl.u32 %v770, 7
  %v772 = vsub.s32 %v769, %v771
  %v773 = vrot.slane %v765, %v772
  %v775 = vunpack.c.l.s4 1983009808
  %v776 = vunpack.c.0.s8 %v775
  %v777 = vlaneseq
  %v778 = vshrl.u32 %v777, 7
  %v779 = vsub.s32 %v776, %v778
  %v780 = vrot.slane %v766, %v779
  %v781 = vcombine.high %v773, %v773
  %v782 = vcombine.high %v780, %v780
  %v783 = vcombine.low %v377, %v379
  %v784 = vcombine.high %v377, %v379
  %v786 = vunpack.c.l.s4 1983009808
  %v787 = vunpack.c.0.s8 %v786
  %v788 = vlaneseq
  %v789 = vshrl.u32 %v788, 7
  %v790 = vsub.s32 %v787, %v789
  %v791 = vrot.slane %v783, %v790
  %v793 = vunpack.c.l.s4 1983009808
  %v794 = vunpack.c.0.s8 %v793
  %v795 = vlaneseq
  %v796 = vshrl.u32 %v795, 7
  %v797 = vsub.s32 %v794, %v796
  %v798 = vrot.slane %v784, %v797
  %v799 = vcombine.high %v791, %v791
  %v800 = vcombine.high %v798, %v798
  %v801 = vcombine.low %v383, %v385
  %v802 = vcombine.high %v383, %v385
  %v804 = vunpack.c.l.s4 1983009808
  %v805 = vunpack.c.0.s8 %v804
  %v806 = vlaneseq
  %v807 = vshrl.u32 %v806, 7
  %v808 = vsub.s32 %v805, %v807
  %v809 = vrot.slane %v801, %v808
  %v811 = vunpack.c.l.s4 1983009808
  %v812 = vunpack.c.0.s8 %v811
  %v813 = vlaneseq
  %v814 = vshrl.u32 %v813, 7
  %v815 = vsub.s32 %v812, %v814
  %v816 = vrot.slane %v802, %v815
  %v817 = vcombine.high %v809, %v809
  %v818 = vcombine.high %v816, %v816
  %v819 = vcombine.low %v389, %v391
  %v820 = vcombine.high %v389, %v391
  %v822 = vunpack.c.l.s4 1983009808
  %v823 = vunpack.c.0.s8 %v822
  %v824 = vlaneseq
  %v825 = vshrl.u32 %v824, 7
  %v826 = vsub.s32 %v823, %v825
  %v827 = vrot.slane %v819, %v826
  %v829 = vunpack.c.l.s4 1983009808
  %v830 = vunpack.c.0.s8 %v829
  %v831 = vlaneseq
  %v832 = vshrl.u32 %v831, 7
  %v833 = vsub.s32 %v830, %v832
  %v834 = vrot.slane %v820, %v833
  %v835 = vcombine.high %v827, %v827
  %v836 = vcombine.high %v834, %v834
  %v837 = vcombine.low %v395, %v397
  %v838 = vcombine.high %v395, %v397
  %v840 = vunpack.c.l.s4 1983009808
  %v841 = vunpack.c.0.s8 %v840
  %v842 = vlaneseq
  %v843 = vshrl.u32 %v842, 7
  %v844 = vsub.s32 %v841, %v843
  %v845 = vrot.slane %v837, %v844
  %v847 = vunpack.c.l.s4 1983009808
  %v848 = vunpack.c.0.s8 %v847
  %v849 = vlaneseq
  %v850 = vshrl.u32 %v849, 7
  %v851 = vsub.s32 %v848, %v850
  %v852 = vrot.slane %v838, %v851
  %v853 = vcombine.high %v845, %v845
  %v854 = vcombine.high %v852, %v852
  %v855 = vcombine.low %v401, %v403
  %v856 = vcombine.high %v401, %v403
  %v858 = vunpack.c.l.s4 1983009808
  %v859 = vunpack.c.0.s8 %v858
  %v860 = vlaneseq
  %v861 = vshrl.u32 %v860, 7
  %v862 = vsub.s32 %v859, %v861
  %v863 = vrot.slane %v855, %v862
  %v865 = vunpack.c.l.s4 1983009808
  %v866 = vunpack.c.0.s8 %v865
  %v867 = vlaneseq
  %v868 = vshrl.u32 %v867, 7
  %v869 = vsub.s32 %v866, %v868
  %v870 = vrot.slane %v856, %v869
  %v871 = vcombine.high %v863, %v863
  %v872 = vcombine.high %v870, %v870
  %v873 = vcombine.low %v407, %v409
  %v874 = vcombine.high %v407, %v409
  %v876 = vunpack.c.l.s4 1983009808
  %v877 = vunpack.c.0.s8 %v876
  %v878 = vlaneseq
  %v879 = vshrl.u32 %v878, 7
  %v880 = vsub.s32 %v877, %v879
  %v881 = vrot.slane %v873, %v880
  %v883 = vunpack.c.l.s4 1983009808
  %v884 = vunpack.c.0.s8 %v883
  %v885 = vlaneseq
  %v886 = vshrl.u32 %v885, 7
  %v887 = vsub.s32 %v884, %v886
  %v888 = vrot.slane %v874, %v887
  %v889 = vcombine.high %v881, %v881
  %v890 = vcombine.high %v888, %v888
  %v987 = vrot.slane %v467, 7
  %v988 = vrot.slane %v987, 2
  %v989 = vrot.slane %v475, 7
  %v990 = vrot.slane %v989, 2
  %v991 = vrot.slane %v474, 7
  %v992 = vrot.slane %v991, 2
  %v993 = vrot.slane %v476, 7
  %v994 = vrot.slane %v993, 2
  %v995 = vrot.slane %v485, 7
  %v996 = vrot.slane %v995, 2
  %v997 = vrot.slane %v493, 7
  %v998 = vrot.slane %v997, 2
  %v999 = vrot.slane %v492, 7
  %v1000 = vrot.slane %v999, 2
  %v1001 = vrot.slane %v494, 7
  %v1002 = vrot.slane %v1001, 2
  %v1003 = vrot.slane %v503, 7
  %v1004 = vrot.slane %v1003, 2
  %v1005 = vrot.slane %v511, 7
  %v1006 = vrot.slane %v1005, 2
  %v1007 = vrot.slane %v510, 7
  %v1008 = vrot.slane %v1007, 2
  %v1009 = vrot.slane %v512, 7
  %v1010 = vrot.slane %v1009, 2
  %v1011 = vrot.slane %v521, 7
  %v1012 = vrot.slane %v1011, 2
  %v1013 = vrot.slane %v529, 7
  %v1014 = vrot.slane %v1013, 2
  %v1015 = vrot.slane %v528, 7
  %v1016 = vrot.slane %v1015, 2
  %v1017 = vrot.slane %v530, 7
  %v1018 = vrot.slane %v1017, 2
  %v1019 = vrot.slane %v539, 7
  %v1020 = vrot.slane %v1019, 2
  %v1021 = vrot.slane %v547, 7
  %v1022 = vrot.slane %v1021, 2
  %v1023 = vrot.slane %v546, 7
  %v1024 = vrot.slane %v1023, 2
  %v1025 = vrot.slane %v548, 7
  %v1026 = vrot.slane %v1025, 2
  %v1027 = vrot.slane %v557, 7
  %v1028 = vrot.slane %v1027, 2
  %v1029 = vrot.slane %v565, 7
  %v1030 = vrot.slane %v1029, 2
  %v1031 = vrot.slane %v564, 7
  %v1032 = vrot.slane %v1031, 2
  %v1033 = vrot.slane %v566, 7
  %v1034 = vrot.slane %v1033, 2
  %v1035 = vrot.slane %v575, 7
  %v1036 = vrot.slane %v1035, 2
  %v1037 = vrot.slane %v583, 7
  %v1038 = vrot.slane %v1037, 2
  %v1039 = vrot.slane %v582, 7
  %v1040 = vrot.slane %v1039, 2
  %v1041 = vrot.slane %v584, 7
  %v1042 = vrot.slane %v1041, 2
  %v1043 = vrot.slane %v593, 7
  %v1044 = vrot.slane %v1043, 2
  %v1045 = vrot.slane %v601, 7
  %v1046 = vrot.slane %v1045, 2
  %v1047 = vrot.slane %v600, 7
  %v1048 = vrot.slane %v1047, 2
  %v1049 = vrot.slane %v602, 7
  %v1050 = vrot.slane %v1049, 2
  %v1051 = vrot.slane %v611, 7
  %v1052 = vrot.slane %v1051, 2
  %v1053 = vrot.slane %v619, 7
  %v1054 = vrot.slane %v1053, 2
  %v1055 = vrot.slane %v618, 7
  %v1056 = vrot.slane %v1055, 2
  %v1057 = vrot.slane %v620, 7
  %v1058 = vrot.slane %v1057, 2
  %v1059 = vrot.slane %v629, 7
  %v1060 = vrot.slane %v1059, 2
  %v1061 = vrot.slane %v637, 7
  %v1062 = vrot.slane %v1061, 2
  %v1063 = vrot.slane %v636, 7
  %v1064 = vrot.slane %v1063, 2
  %v1065 = vrot.slane %v638, 7
  %v1066 = vrot.slane %v1065, 2
  %v1067 = vrot.slane %v647, 7
  %v1068 = vrot.slane %v1067, 2
  %v1069 = vrot.slane %v655, 7
  %v1070 = vrot.slane %v1069, 2
  %v1071 = vrot.slane %v654, 7
  %v1072 = vrot.slane %v1071, 2
  %v1073 = vrot.slane %v656, 7
  %v1074 = vrot.slane %v1073, 2
  %v1075 = vrot.slane %v665, 7
  %v1076 = vrot.slane %v1075, 2
  %v1077 = vrot.slane %v673, 7
  %v1078 = vrot.slane %v1077, 2
  %v1079 = vrot.slane %v672, 7
  %v1080 = vrot.slane %v1079, 2
  %v1081 = vrot.slane %v674, 7
  %v1082 = vrot.slane %v1081, 2
  %v1083 = vrot.slane %v683, 7
  %v1084 = vrot.slane %v1083, 2
  %v1085 = vrot.slane %v691, 7
  %v1086 = vrot.slane %v1085, 2
  %v1087 = vrot.slane %v690, 7
  %v1088 = vrot.slane %v1087, 2
  %v1089 = vrot.slane %v692, 7
  %v1090 = vrot.slane %v1089, 2
  %v1091 = vrot.slane %v701, 7
  %v1092 = vrot.slane %v1091, 2
  %v1093 = vrot.slane %v709, 7
  %v1094 = vrot.slane %v1093, 2
  %v1095 = vrot.slane %v708, 7
  %v1096 = vrot.slane %v1095, 2
  %v1097 = vrot.slane %v710, 7
  %v1098 = vrot.slane %v1097, 2
  %v1099 = vrot.slane %v719, 7
  %v1100 = vrot.slane %v1099, 2
  %v1101 = vrot.slane %v727, 7
  %v1102 = vrot.slane %v1101, 2
  %v1103 = vrot.slane %v726, 7
  %v1104 = vrot.slane %v1103, 2
  %v1105 = vrot.slane %v728, 7
  %v1106 = vrot.slane %v1105, 2
  %v1107 = vrot.slane %v737, 7
  %v1108 = vrot.slane %v1107, 2
  %v1109 = vrot.slane %v745, 7
  %v1110 = vrot.slane %v1109, 2
  %v1111 = vrot.slane %v744, 7
  %v1112 = vrot.slane %v1111, 2
  %v1113 = vrot.slane %v746, 7
  %v1114 = vrot.slane %v1113, 2
  %v1115 = vrot.slane %v755, 7
  %v1116 = vrot.slane %v1115, 2
  %v1117 = vrot.slane %v763, 7
  %v1118 = vrot.slane %v1117, 2
  %v1119 = vrot.slane %v762, 7
  %v1120 = vrot.slane %v1119, 2
  %v1121 = vrot.slane %v764, 7
  %v1122 = vrot.slane %v1121, 2
  %v1123 = vrot.slane %v773, 7
  %v1124 = vrot.slane %v1123, 2
  %v1125 = vrot.slane %v781, 7
  %v1126 = vrot.slane %v1125, 2
  %v1127 = vrot.slane %v780, 7
  %v1128 = vrot.slane %v1127, 2
  %v1129 = vrot.slane %v782, 7
  %v1130 = vrot.slane %v1129, 2
  %v1131 = vrot.slane %v791, 7
  %v1132 = vrot.slane %v1131, 2
  %v1133 = vrot.slane %v799, 7
  %v1134 = vrot.slane %v1133, 2
  %v1135 = vrot.slane %v798, 7
  %v1136 = vrot.slane %v1135, 2
  %v1137 = vrot.slane %v800, 7
  %v1138 = vrot.slane %v1137, 2
  %v1139 = vrot.slane %v809, 7
  %v1140 = vrot.slane %v1139, 2
  %v1141 = vrot.slane %v817, 7
  %v1142 = vrot.slane %v1141, 2
  %v1143 = vrot.slane %v816, 7
  %v1144 = vrot.slane %v1143, 2
  %v1145 = vrot.slane %v818, 7
  %v1146 = vrot.slane %v1145, 2
  %v1147 = vrot.slane %v827, 7
  %v1148 = vrot.slane %v1147, 2
  %v1149 = vrot.slane %v835, 7
  %v1150 = vrot.slane %v1149, 2
  %v1151 = vrot.slane %v834, 7
  %v1152 = vrot.slane %v1151, 2
  %v1153 = vrot.slane %v836, 7
  %v1154 = vrot.slane %v1153, 2
  %v1155 = vrot.slane %v845, 7
  %v1156 = vrot.slane %v1155, 2
  %v1157 = vrot.slane %v853, 7
  %v1158 = vrot.slane %v1157, 2
  %v1159 = vrot.slane %v852, 7
  %v1160 = vrot.slane %v1159, 2
  %v1161 = vrot.slane %v854, 7
  %v1162 = vrot.slane %v1161, 2
  %v1163 = vrot.slane %v863, 7
  %v1164 = vrot.slane %v1163, 2
  %v1165 = vrot.slane %v871, 7
  %v1166 = vrot.slane %v1165, 2
  %v1167 = vrot.slane %v870, 7
  %v1168 = vrot.slane %v1167, 2
  %v1169 = vrot.slane %v872, 7
  %v1170 = vrot.slane %v1169, 2
  %v1171 = vrot.slane %v881, 7
  %v1172 = vrot.slane %v1171, 2
  %v1173 = vrot.slane %v889, 7
  %v1174 = vrot.slane %v1173, 2
  %v1175 = vrot.slane %v888, 7
  %v1176 = vrot.slane %v1175, 2
  %v1177 = vrot.slane %v890, 7
  %v1178 = vrot.slane %v1177, 2
  %v1275 = vmax.f32 %v467, %v988
  %v1276 = vmax.f32 %v475, %v990
  %v1277 = vmax.f32 %v474, %v992
  %v1278 = vmax.f32 %v476, %v994
  %v1279 = vmax.f32 %v485, %v996
  %v1280 = vmax.f32 %v493, %v998
  %v1281 = vmax.f32 %v492, %v1000
  %v1282 = vmax.f32 %v494, %v1002
  %v1283 = vmax.f32 %v503, %v1004
  %v1284 = vmax.f32 %v511, %v1006
  %v1285 = vmax.f32 %v510, %v1008
  %v1286 = vmax.f32 %v512, %v1010
  %v1287 = vmax.f32 %v521, %v1012
  %v1288 = vmax.f32 %v529, %v1014
  %v1289 = vmax.f32 %v528, %v1016
  %v1290 = vmax.f32 %v530, %v1018
  %v1291 = vmax.f32 %v539, %v1020
  %v1292 = vmax.f32 %v547, %v1022
  %v1293 = vmax.f32 %v546, %v1024
  %v1294 = vmax.f32 %v548, %v1026
  %v1295 = vmax.f32 %v557, %v1028
  %v1296 = vmax.f32 %v565, %v1030
  %v1297 = vmax.f32 %v564, %v1032
  %v1298 = vmax.f32 %v566, %v1034
  %v1299 = vmax.f32 %v575, %v1036
  %v1300 = vmax.f32 %v583, %v1038
  %v1301 = vmax.f32 %v582, %v1040
  %v1302 = vmax.f32 %v584, %v1042
  %v1303 = vmax.f32 %v593, %v1044
  %v1304 = vmax.f32 %v601, %v1046
  %v1305 = vmax.f32 %v600, %v1048
  %v1306 = vmax.f32 %v602, %v1050
  %v1307 = vmax.f32 %v611, %v1052
  %v1308 = vmax.f32 %v619, %v1054
  %v1309 = vmax.f32 %v618, %v1056
  %v1310 = vmax.f32 %v620, %v1058
  %v1311 = vmax.f32 %v629, %v1060
  %v1312 = vmax.f32 %v637, %v1062
  %v1313 = vmax.f32 %v636, %v1064
  %v1314 = vmax.f32 %v638, %v1066
  %v1315 = vmax.f32 %v647, %v1068
  %v1316 = vmax.f32 %v655, %v1070
  %v1317 = vmax.f32 %v654, %v1072
  %v1318 = vmax.f32 %v656, %v1074
  %v1319 = vmax.f32 %v665, %v1076
  %v1320 = vmax.f32 %v673, %v1078
  %v1321 = vmax.f32 %v672, %v1080
  %v1322 = vmax.f32 %v674, %v1082
  %v1323 = vmax.f32 %v683, %v1084
  %v1324 = vmax.f32 %v691, %v1086
  %v1325 = vmax.f32 %v690, %v1088
  %v1326 = vmax.f32 %v692, %v1090
  %v1327 = vmax.f32 %v701, %v1092
  %v1328 = vmax.f32 %v709, %v1094
  %v1329 = vmax.f32 %v708, %v1096
  %v1330 = vmax.f32 %v710, %v1098
  %v1331 = vmax.f32 %v719, %v1100
  %v1332 = vmax.f32 %v727, %v1102
  %v1333 = vmax.f32 %v726, %v1104
  %v1334 = vmax.f32 %v728, %v1106
  %v1335 = vmax.f32 %v737, %v1108
  %v1336 = vmax.f32 %v745, %v1110
  %v1337 = vmax.f32 %v744, %v1112
  %v1338 = vmax.f32 %v746, %v1114
  %v1339 = vmax.f32 %v755, %v1116
  %v1340 = vmax.f32 %v763, %v1118
  %v1341 = vmax.f32 %v762, %v1120
  %v1342 = vmax.f32 %v764, %v1122
  %v1343 = vmax.f32 %v773, %v1124
  %v1344 = vmax.f32 %v781, %v1126
  %v1345 = vmax.f32 %v780, %v1128
  %v1346 = vmax.f32 %v782, %v1130
  %v1347 = vmax.f32 %v791, %v1132
  %v1348 = vmax.f32 %v799, %v1134
  %v1349 = vmax.f32 %v798, %v1136
  %v1350 = vmax.f32 %v800, %v1138
  %v1351 = vmax.f32 %v809, %v1140
  %v1352 = vmax.f32 %v817, %v1142
  %v1353 = vmax.f32 %v816, %v1144
  %v1354 = vmax.f32 %v818, %v1146
  %v1355 = vmax.f32 %v827, %v1148
  %v1356 = vmax.f32 %v835, %v1150
  %v1357 = vmax.f32 %v834, %v1152
  %v1358 = vmax.f32 %v836, %v1154
  %v1359 = vmax.f32 %v845, %v1156
  %v1360 = vmax.f32 %v853, %v1158
  %v1361 = vmax.f32 %v852, %v1160
  %v1362 = vmax.f32 %v854, %v1162
  %v1363 = vmax.f32 %v863, %v1164
  %v1364 = vmax.f32 %v871, %v1166
  %v1365 = vmax.f32 %v870, %v1168
  %v1366 = vmax.f32 %v872, %v1170
  %v1367 = vmax.f32 %v881, %v1172
  %v1368 = vmax.f32 %v889, %v1174
  %v1369 = vmax.f32 %v888, %v1176
  %v1370 = vmax.f32 %v890, %v1178
  %1467 = vrot.lane.b32.xlu0 %v1275, 56
  %v1468 = vpop.permute.xlu0 %1467
  %1469 = vrot.lane.b32.xlu0 %v1276, 56
  %v1470 = vpop.permute.xlu0 %1469
  %1471 = vrot.lane.b32.xlu0 %v1277, 56
  %v1472 = vpop.permute.xlu0 %1471
  %1473 = vrot.lane.b32.xlu0 %v1278, 56
  %v1474 = vpop.permute.xlu0 %1473
  %1475 = vrot.lane.b32.xlu0 %v1279, 56
  %v1476 = vpop.permute.xlu0 %1475
  %1477 = vrot.lane.b32.xlu0 %v1280, 56
  %v1478 = vpop.permute.xlu0 %1477
  %1479 = vrot.lane.b32.xlu0 %v1281, 56
  %v1480 = vpop.permute.xlu0 %1479
  %1481 = vrot.lane.b32.xlu0 %v1282, 56
  %v1482 = vpop.permute.xlu0 %1481
  %1483 = vrot.lane.b32.xlu0 %v1283, 56
  %v1484 = vpop.permute.xlu0 %1483
  %1485 = vrot.lane.b32.xlu0 %v1284, 56
  %v1486 = vpop.permute.xlu0 %1485
  %1487 = vrot.lane.b32.xlu0 %v1285, 56
  %v1488 = vpop.permute.xlu0 %1487
  %1489 = vrot.lane.b32.xlu0 %v1286, 56
  %v1490 = vpop.permute.xlu0 %1489
  %1491 = vrot.lane.b32.xlu0 %v1287, 56
  %v1492 = vpop.permute.xlu0 %1491
  %1493 = vrot.lane.b32.xlu0 %v1288, 56
  %v1494 = vpop.permute.xlu0 %1493
  %1495 = vrot.lane.b32.xlu0 %v1289, 56
  %v1496 = vpop.permute.xlu0 %1495
  %1497 = vrot.lane.b32.xlu0 %v1290, 56
  %v1498 = vpop.permute.xlu0 %1497
  %1499 = vrot.lane.b32.xlu0 %v1291, 56
  %v1500 = vpop.permute.xlu0 %1499
  %1501 = vrot.lane.b32.xlu0 %v1292, 56
  %v1502 = vpop.permute.xlu0 %1501
  %1503 = vrot.lane.b32.xlu0 %v1293, 56
  %v1504 = vpop.permute.xlu0 %1503
  %1505 = vrot.lane.b32.xlu0 %v1294, 56
  %v1506 = vpop.permute.xlu0 %1505
  %1507 = vrot.lane.b32.xlu0 %v1295, 56
  %v1508 = vpop.permute.xlu0 %1507
  %1509 = vrot.lane.b32.xlu0 %v1296, 56
  %v1510 = vpop.permute.xlu0 %1509
  %1511 = vrot.lane.b32.xlu0 %v1297, 56
  %v1512 = vpop.permute.xlu0 %1511
  %1513 = vrot.lane.b32.xlu0 %v1298, 56
  %v1514 = vpop.permute.xlu0 %1513
  %1515 = vrot.lane.b32.xlu0 %v1299, 56
  %v1516 = vpop.permute.xlu0 %1515
  %1517 = vrot.lane.b32.xlu0 %v1300, 56
  %v1518 = vpop.permute.xlu0 %1517
  %1519 = vrot.lane.b32.xlu0 %v1301, 56
  %v1520 = vpop.permute.xlu0 %1519
  %1521 = vrot.lane.b32.xlu0 %v1302, 56
  %v1522 = vpop.permute.xlu0 %1521
  %1523 = vrot.lane.b32.xlu0 %v1303, 56
  %v1524 = vpop.permute.xlu0 %1523
  %1525 = vrot.lane.b32.xlu0 %v1304, 56
  %v1526 = vpop.permute.xlu0 %1525
  %1527 = vrot.lane.b32.xlu0 %v1305, 56
  %v1528 = vpop.permute.xlu0 %1527
  %1529 = vrot.lane.b32.xlu0 %v1306, 56
  %v1530 = vpop.permute.xlu0 %1529
  %1531 = vrot.lane.b32.xlu0 %v1307, 56
  %v1532 = vpop.permute.xlu0 %1531
  %1533 = vrot.lane.b32.xlu0 %v1308, 56
  %v1534 = vpop.permute.xlu0 %1533
  %1535 = vrot.lane.b32.xlu0 %v1309, 56
  %v1536 = vpop.permute.xlu0 %1535
  %1537 = vrot.lane.b32.xlu0 %v1310, 56
  %v1538 = vpop.permute.xlu0 %1537
  %1539 = vrot.lane.b32.xlu0 %v1311, 56
  %v1540 = vpop.permute.xlu0 %1539
  %1541 = vrot.lane.b32.xlu0 %v1312, 56
  %v1542 = vpop.permute.xlu0 %1541
  %1543 = vrot.lane.b32.xlu0 %v1313, 56
  %v1544 = vpop.permute.xlu0 %1543
  %1545 = vrot.lane.b32.xlu0 %v1314, 56
  %v1546 = vpop.permute.xlu0 %1545
  %1547 = vrot.lane.b32.xlu0 %v1315, 56
  %v1548 = vpop.permute.xlu0 %1547
  %1549 = vrot.lane.b32.xlu0 %v1316, 56
  %v1550 = vpop.permute.xlu0 %1549
  %1551 = vrot.lane.b32.xlu0 %v1317, 56
  %v1552 = vpop.permute.xlu0 %1551
  %1553 = vrot.lane.b32.xlu0 %v1318, 56
  %v1554 = vpop.permute.xlu0 %1553
  %1555 = vrot.lane.b32.xlu0 %v1319, 56
  %v1556 = vpop.permute.xlu0 %1555
  %1557 = vrot.lane.b32.xlu0 %v1320, 56
  %v1558 = vpop.permute.xlu0 %1557
  %1559 = vrot.lane.b32.xlu0 %v1321, 56
  %v1560 = vpop.permute.xlu0 %1559
  %1561 = vrot.lane.b32.xlu0 %v1322, 56
  %v1562 = vpop.permute.xlu0 %1561
  %1563 = vrot.lane.b32.xlu0 %v1323, 56
  %v1564 = vpop.permute.xlu0 %1563
  %1565 = vrot.lane.b32.xlu0 %v1324, 56
  %v1566 = vpop.permute.xlu0 %1565
  %1567 = vrot.lane.b32.xlu0 %v1325, 56
  %v1568 = vpop.permute.xlu0 %1567
  %1569 = vrot.lane.b32.xlu0 %v1326, 56
  %v1570 = vpop.permute.xlu0 %1569
  %1571 = vrot.lane.b32.xlu0 %v1327, 56
  %v1572 = vpop.permute.xlu0 %1571
  %1573 = vrot.lane.b32.xlu0 %v1328, 56
  %v1574 = vpop.permute.xlu0 %1573
  %1575 = vrot.lane.b32.xlu0 %v1329, 56
  %v1576 = vpop.permute.xlu0 %1575
  %1577 = vrot.lane.b32.xlu0 %v1330, 56
  %v1578 = vpop.permute.xlu0 %1577
  %1579 = vrot.lane.b32.xlu0 %v1331, 56
  %v1580 = vpop.permute.xlu0 %1579
  %1581 = vrot.lane.b32.xlu0 %v1332, 56
  %v1582 = vpop.permute.xlu0 %1581
  %1583 = vrot.lane.b32.xlu0 %v1333, 56
  %v1584 = vpop.permute.xlu0 %1583
  %1585 = vrot.lane.b32.xlu0 %v1334, 56
  %v1586 = vpop.permute.xlu0 %1585
  %1587 = vrot.lane.b32.xlu0 %v1335, 56
  %v1588 = vpop.permute.xlu0 %1587
  %1589 = vrot.lane.b32.xlu0 %v1336, 56
  %v1590 = vpop.permute.xlu0 %1589
  %1591 = vrot.lane.b32.xlu0 %v1337, 56
  %v1592 = vpop.permute.xlu0 %1591
  %1593 = vrot.lane.b32.xlu0 %v1338, 56
  %v1594 = vpop.permute.xlu0 %1593
  %1595 = vrot.lane.b32.xlu0 %v1339, 56
  %v1596 = vpop.permute.xlu0 %1595
  %1597 = vrot.lane.b32.xlu0 %v1340, 56
  %v1598 = vpop.permute.xlu0 %1597
  %1599 = vrot.lane.b32.xlu0 %v1341, 56
  %v1600 = vpop.permute.xlu0 %1599
  %1601 = vrot.lane.b32.xlu0 %v1342, 56
  %v1602 = vpop.permute.xlu0 %1601
  %1603 = vrot.lane.b32.xlu0 %v1343, 56
  %v1604 = vpop.permute.xlu0 %1603
  %1605 = vrot.lane.b32.xlu0 %v1344, 56
  %v1606 = vpop.permute.xlu0 %1605
  %1607 = vrot.lane.b32.xlu0 %v1345, 56
  %v1608 = vpop.permute.xlu0 %1607
  %1609 = vrot.lane.b32.xlu0 %v1346, 56
  %v1610 = vpop.permute.xlu0 %1609
  %1611 = vrot.lane.b32.xlu0 %v1347, 56
  %v1612 = vpop.permute.xlu0 %1611
  %1613 = vrot.lane.b32.xlu0 %v1348, 56
  %v1614 = vpop.permute.xlu0 %1613
  %1615 = vrot.lane.b32.xlu0 %v1349, 56
  %v1616 = vpop.permute.xlu0 %1615
  %1617 = vrot.lane.b32.xlu0 %v1350, 56
  %v1618 = vpop.permute.xlu0 %1617
  %1619 = vrot.lane.b32.xlu0 %v1351, 56
  %v1620 = vpop.permute.xlu0 %1619
  %1621 = vrot.lane.b32.xlu0 %v1352, 56
  %v1622 = vpop.permute.xlu0 %1621
  %1623 = vrot.lane.b32.xlu0 %v1353, 56
  %v1624 = vpop.permute.xlu0 %1623
  %1625 = vrot.lane.b32.xlu0 %v1354, 56
  %v1626 = vpop.permute.xlu0 %1625
  %1627 = vrot.lane.b32.xlu0 %v1355, 56
  %v1628 = vpop.permute.xlu0 %1627
  %1629 = vrot.lane.b32.xlu0 %v1356, 56
  %v1630 = vpop.permute.xlu0 %1629
  %1631 = vrot.lane.b32.xlu0 %v1357, 56
  %v1632 = vpop.permute.xlu0 %1631
  %1633 = vrot.lane.b32.xlu0 %v1358, 56
  %v1634 = vpop.permute.xlu0 %1633
  %1635 = vrot.lane.b32.xlu0 %v1359, 56
  %v1636 = vpop.permute.xlu0 %1635
  %1637 = vrot.lane.b32.xlu0 %v1360, 56
  %v1638 = vpop.permute.xlu0 %1637
  %1639 = vrot.lane.b32.xlu0 %v1361, 56
  %v1640 = vpop.permute.xlu0 %1639
  %1641 = vrot.lane.b32.xlu0 %v1362, 56
  %v1642 = vpop.permute.xlu0 %1641
  %1643 = vrot.lane.b32.xlu0 %v1363, 56
  %v1644 = vpop.permute.xlu0 %1643
  %1645 = vrot.lane.b32.xlu0 %v1364, 56
  %v1646 = vpop.permute.xlu0 %1645
  %1647 = vrot.lane.b32.xlu0 %v1365, 56
  %v1648 = vpop.permute.xlu0 %1647
  %1649 = vrot.lane.b32.xlu0 %v1366, 56
  %v1650 = vpop.permute.xlu0 %1649
  %1651 = vrot.lane.b32.xlu0 %v1367, 56
  %v1652 = vpop.permute.xlu0 %1651
  %1653 = vrot.lane.b32.xlu0 %v1368, 56
  %v1654 = vpop.permute.xlu0 %1653
  %1655 = vrot.lane.b32.xlu0 %v1369, 56
  %v1656 = vpop.permute.xlu0 %1655
  %1657 = vrot.lane.b32.xlu0 %v1370, 56
  %v1658 = vpop.permute.xlu0 %1657
  %v1659 = vrot.slane %v1468, 2
  %v1660 = vrot.slane %v1470, 2
  %v1661 = vrot.slane %v1472, 2
  %v1662 = vrot.slane %v1474, 2
  %v1663 = vrot.slane %v1476, 2
  %v1664 = vrot.slane %v1478, 2
  %v1665 = vrot.slane %v1480, 2
  %v1666 = vrot.slane %v1482, 2
  %v1667 = vrot.slane %v1484, 2
  %v1668 = vrot.slane %v1486, 2
  %v1669 = vrot.slane %v1488, 2
  %v1670 = vrot.slane %v1490, 2
  %v1671 = vrot.slane %v1492, 2
  %v1672 = vrot.slane %v1494, 2
  %v1673 = vrot.slane %v1496, 2
  %v1674 = vrot.slane %v1498, 2
  %v1675 = vrot.slane %v1500, 2
  %v1676 = vrot.slane %v1502, 2
  %v1677 = vrot.slane %v1504, 2
  %v1678 = vrot.slane %v1506, 2
  %v1679 = vrot.slane %v1508, 2
  %v1680 = vrot.slane %v1510, 2
  %v1681 = vrot.slane %v1512, 2
  %v1682 = vrot.slane %v1514, 2
  %v1683 = vrot.slane %v1516, 2
  %v1684 = vrot.slane %v1518, 2
  %v1685 = vrot.slane %v1520, 2
  %v1686 = vrot.slane %v1522, 2
  %v1687 = vrot.slane %v1524, 2
  %v1688 = vrot.slane %v1526, 2
  %v1689 = vrot.slane %v1528, 2
  %v1690 = vrot.slane %v1530, 2
  %v1691 = vrot.slane %v1532, 2
  %v1692 = vrot.slane %v1534, 2
  %v1693 = vrot.slane %v1536, 2
  %v1694 = vrot.slane %v1538, 2
  %v1695 = vrot.slane %v1540, 2
  %v1696 = vrot.slane %v1542, 2
  %v1697 = vrot.slane %v1544, 2
  %v1698 = vrot.slane %v1546, 2
  %v1699 = vrot.slane %v1548, 2
  %v1700 = vrot.slane %v1550, 2
  %v1701 = vrot.slane %v1552, 2
  %v1702 = vrot.slane %v1554, 2
  %v1703 = vrot.slane %v1556, 2
  %v1704 = vrot.slane %v1558, 2
  %v1705 = vrot.slane %v1560, 2
  %v1706 = vrot.slane %v1562, 2
  %v1707 = vrot.slane %v1564, 2
  %v1708 = vrot.slane %v1566, 2
  %v1709 = vrot.slane %v1568, 2
  %v1710 = vrot.slane %v1570, 2
  %v1711 = vrot.slane %v1572, 2
  %v1712 = vrot.slane %v1574, 2
  %v1713 = vrot.slane %v1576, 2
  %v1714 = vrot.slane %v1578, 2
  %v1715 = vrot.slane %v1580, 2
  %v1716 = vrot.slane %v1582, 2
  %v1717 = vrot.slane %v1584, 2
  %v1718 = vrot.slane %v1586, 2
  %v1719 = vrot.slane %v1588, 2
  %v1720 = vrot.slane %v1590, 2
  %v1721 = vrot.slane %v1592, 2
  %v1722 = vrot.slane %v1594, 2
  %v1723 = vrot.slane %v1596, 2
  %v1724 = vrot.slane %v1598, 2
  %v1725 = vrot.slane %v1600, 2
  %v1726 = vrot.slane %v1602, 2
  %v1727 = vrot.slane %v1604, 2
  %v1728 = vrot.slane %v1606, 2
  %v1729 = vrot.slane %v1608, 2
  %v1730 = vrot.slane %v1610, 2
  %v1731 = vrot.slane %v1612, 2
  %v1732 = vrot.slane %v1614, 2
  %v1733 = vrot.slane %v1616, 2
  %v1734 = vrot.slane %v1618, 2
  %v1735 = vrot.slane %v1620, 2
  %v1736 = vrot.slane %v1622, 2
  %v1737 = vrot.slane %v1624, 2
  %v1738 = vrot.slane %v1626, 2
  %v1739 = vrot.slane %v1628, 2
  %v1740 = vrot.slane %v1630, 2
  %v1741 = vrot.slane %v1632, 2
  %v1742 = vrot.slane %v1634, 2
  %v1743 = vrot.slane %v1636, 2
  %v1744 = vrot.slane %v1638, 2
  %v1745 = vrot.slane %v1640, 2
  %v1746 = vrot.slane %v1642, 2
  %v1747 = vrot.slane %v1644, 2
  %v1748 = vrot.slane %v1646, 2
  %v1749 = vrot.slane %v1648, 2
  %v1750 = vrot.slane %v1650, 2
  %v1751 = vrot.slane %v1652, 2
  %v1752 = vrot.slane %v1654, 2
  %v1753 = vrot.slane %v1656, 2
  %v1754 = vrot.slane %v1658, 2
  %vm1755 = vcmask 457728
  %v1756 = vsel %vm1755, %v1468, %v1659
  %v1757 = vsel %vm1755, %v1470, %v1660
  %v1758 = vsel %vm1755, %v1472, %v1661
  %v1759 = vsel %vm1755, %v1474, %v1662
  %v1760 = vsel %vm1755, %v1476, %v1663
  %v1761 = vsel %vm1755, %v1478, %v1664
  %v1762 = vsel %vm1755, %v1480, %v1665
  %v1763 = vsel %vm1755, %v1482, %v1666
  %v1764 = vsel %vm1755, %v1484, %v1667
  %v1765 = vsel %vm1755, %v1486, %v1668
  %v1766 = vsel %vm1755, %v1488, %v1669
  %v1767 = vsel %vm1755, %v1490, %v1670
  %v1768 = vsel %vm1755, %v1492, %v1671
  %v1769 = vsel %vm1755, %v1494, %v1672
  %v1770 = vsel %vm1755, %v1496, %v1673
  %v1771 = vsel %vm1755, %v1498, %v1674
  %v1772 = vsel %vm1755, %v1500, %v1675
  %v1773 = vsel %vm1755, %v1502, %v1676
  %v1774 = vsel %vm1755, %v1504, %v1677
  %v1775 = vsel %vm1755, %v1506, %v1678
  %v1776 = vsel %vm1755, %v1508, %v1679
  %v1777 = vsel %vm1755, %v1510, %v1680
  %v1778 = vsel %vm1755, %v1512, %v1681
  %v1779 = vsel %vm1755, %v1514, %v1682
  %v1780 = vsel %vm1755, %v1516, %v1683
  %v1781 = vsel %vm1755, %v1518, %v1684
  %v1782 = vsel %vm1755, %v1520, %v1685
  %v1783 = vsel %vm1755, %v1522, %v1686
  %v1784 = vsel %vm1755, %v1524, %v1687
  %v1785 = vsel %vm1755, %v1526, %v1688
  %v1786 = vsel %vm1755, %v1528, %v1689
  %v1787 = vsel %vm1755, %v1530, %v1690
  %v1788 = vsel %vm1755, %v1532, %v1691
  %v1789 = vsel %vm1755, %v1534, %v1692
  %v1790 = vsel %vm1755, %v1536, %v1693
  %v1791 = vsel %vm1755, %v1538, %v1694
  %v1792 = vsel %vm1755, %v1540, %v1695
  %v1793 = vsel %vm1755, %v1542, %v1696
  %v1794 = vsel %vm1755, %v1544, %v1697
  %v1795 = vsel %vm1755, %v1546, %v1698
  %v1796 = vsel %vm1755, %v1548, %v1699
  %v1797 = vsel %vm1755, %v1550, %v1700
  %v1798 = vsel %vm1755, %v1552, %v1701
  %v1799 = vsel %vm1755, %v1554, %v1702
  %v1800 = vsel %vm1755, %v1556, %v1703
  %v1801 = vsel %vm1755, %v1558, %v1704
  %v1802 = vsel %vm1755, %v1560, %v1705
  %v1803 = vsel %vm1755, %v1562, %v1706
  %v1804 = vsel %vm1755, %v1564, %v1707
  %v1805 = vsel %vm1755, %v1566, %v1708
  %v1806 = vsel %vm1755, %v1568, %v1709
  %v1807 = vsel %vm1755, %v1570, %v1710
  %v1808 = vsel %vm1755, %v1572, %v1711
  %v1809 = vsel %vm1755, %v1574, %v1712
  %v1810 = vsel %vm1755, %v1576, %v1713
  %v1811 = vsel %vm1755, %v1578, %v1714
  %v1812 = vsel %vm1755, %v1580, %v1715
  %v1813 = vsel %vm1755, %v1582, %v1716
  %v1814 = vsel %vm1755, %v1584, %v1717
  %v1815 = vsel %vm1755, %v1586, %v1718
  %v1816 = vsel %vm1755, %v1588, %v1719
  %v1817 = vsel %vm1755, %v1590, %v1720
  %v1818 = vsel %vm1755, %v1592, %v1721
  %v1819 = vsel %vm1755, %v1594, %v1722
  %v1820 = vsel %vm1755, %v1596, %v1723
  %v1821 = vsel %vm1755, %v1598, %v1724
  %v1822 = vsel %vm1755, %v1600, %v1725
  %v1823 = vsel %vm1755, %v1602, %v1726
  %v1824 = vsel %vm1755, %v1604, %v1727
  %v1825 = vsel %vm1755, %v1606, %v1728
  %v1826 = vsel %vm1755, %v1608, %v1729
  %v1827 = vsel %vm1755, %v1610, %v1730
  %v1828 = vsel %vm1755, %v1612, %v1731
  %v1829 = vsel %vm1755, %v1614, %v1732
  %v1830 = vsel %vm1755, %v1616, %v1733
  %v1831 = vsel %vm1755, %v1618, %v1734
  %v1832 = vsel %vm1755, %v1620, %v1735
  %v1833 = vsel %vm1755, %v1622, %v1736
  %v1834 = vsel %vm1755, %v1624, %v1737
  %v1835 = vsel %vm1755, %v1626, %v1738
  %v1836 = vsel %vm1755, %v1628, %v1739
  %v1837 = vsel %vm1755, %v1630, %v1740
  %v1838 = vsel %vm1755, %v1632, %v1741
  %v1839 = vsel %vm1755, %v1634, %v1742
  %v1840 = vsel %vm1755, %v1636, %v1743
  %v1841 = vsel %vm1755, %v1638, %v1744
  %v1842 = vsel %vm1755, %v1640, %v1745
  %v1843 = vsel %vm1755, %v1642, %v1746
  %v1844 = vsel %vm1755, %v1644, %v1747
  %v1845 = vsel %vm1755, %v1646, %v1748
  %v1846 = vsel %vm1755, %v1648, %v1749
  %v1847 = vsel %vm1755, %v1650, %v1750
  %v1848 = vsel %vm1755, %v1652, %v1751
  %v1849 = vsel %vm1755, %v1654, %v1752
  %v1850 = vsel %vm1755, %v1656, %v1753
  %v1851 = vsel %vm1755, %v1658, %v1754
  %v1948 = vmax.f32 %v1275, %v1756
  %v1949 = vmax.f32 %v1276, %v1757
  %v1950 = vmax.f32 %v1277, %v1758
  %v1951 = vmax.f32 %v1278, %v1759
  %v1952 = vmax.f32 %v1279, %v1760
  %v1953 = vmax.f32 %v1280, %v1761
  %v1954 = vmax.f32 %v1281, %v1762
  %v1955 = vmax.f32 %v1282, %v1763
  %v1956 = vmax.f32 %v1283, %v1764
  %v1957 = vmax.f32 %v1284, %v1765
  %v1958 = vmax.f32 %v1285, %v1766
  %v1959 = vmax.f32 %v1286, %v1767
  %v1960 = vmax.f32 %v1287, %v1768
  %v1961 = vmax.f32 %v1288, %v1769
  %v1962 = vmax.f32 %v1289, %v1770
  %v1963 = vmax.f32 %v1290, %v1771
  %v1964 = vmax.f32 %v1291, %v1772
  %v1965 = vmax.f32 %v1292, %v1773
  %v1966 = vmax.f32 %v1293, %v1774
  %v1967 = vmax.f32 %v1294, %v1775
  %v1968 = vmax.f32 %v1295, %v1776
  %v1969 = vmax.f32 %v1296, %v1777
  %v1970 = vmax.f32 %v1297, %v1778
  %v1971 = vmax.f32 %v1298, %v1779
  %v1972 = vmax.f32 %v1299, %v1780
  %v1973 = vmax.f32 %v1300, %v1781
  %v1974 = vmax.f32 %v1301, %v1782
  %v1975 = vmax.f32 %v1302, %v1783
  %v1976 = vmax.f32 %v1303, %v1784
  %v1977 = vmax.f32 %v1304, %v1785
  %v1978 = vmax.f32 %v1305, %v1786
  %v1979 = vmax.f32 %v1306, %v1787
  %v1980 = vmax.f32 %v1307, %v1788
  %v1981 = vmax.f32 %v1308, %v1789
  %v1982 = vmax.f32 %v1309, %v1790
  %v1983 = vmax.f32 %v1310, %v1791
  %v1984 = vmax.f32 %v1311, %v1792
  %v1985 = vmax.f32 %v1312, %v1793
  %v1986 = vmax.f32 %v1313, %v1794
  %v1987 = vmax.f32 %v1314, %v1795
  %v1988 = vmax.f32 %v1315, %v1796
  %v1989 = vmax.f32 %v1316, %v1797
  %v1990 = vmax.f32 %v1317, %v1798
  %v1991 = vmax.f32 %v1318, %v1799
  %v1992 = vmax.f32 %v1319, %v1800
  %v1993 = vmax.f32 %v1320, %v1801
  %v1994 = vmax.f32 %v1321, %v1802
  %v1995 = vmax.f32 %v1322, %v1803
  %v1996 = vmax.f32 %v1323, %v1804
  %v1997 = vmax.f32 %v1324, %v1805
  %v1998 = vmax.f32 %v1325, %v1806
  %v1999 = vmax.f32 %v1326, %v1807
  %v2000 = vmax.f32 %v1327, %v1808
  %v2001 = vmax.f32 %v1328, %v1809
  %v2002 = vmax.f32 %v1329, %v1810
  %v2003 = vmax.f32 %v1330, %v1811
  %v2004 = vmax.f32 %v1331, %v1812
  %v2005 = vmax.f32 %v1332, %v1813
  %v2006 = vmax.f32 %v1333, %v1814
  %v2007 = vmax.f32 %v1334, %v1815
  %v2008 = vmax.f32 %v1335, %v1816
  %v2009 = vmax.f32 %v1336, %v1817
  %v2010 = vmax.f32 %v1337, %v1818
  %v2011 = vmax.f32 %v1338, %v1819
  %v2012 = vmax.f32 %v1339, %v1820
  %v2013 = vmax.f32 %v1340, %v1821
  %v2014 = vmax.f32 %v1341, %v1822
  %v2015 = vmax.f32 %v1342, %v1823
  %v2016 = vmax.f32 %v1343, %v1824
  %v2017 = vmax.f32 %v1344, %v1825
  %v2018 = vmax.f32 %v1345, %v1826
  %v2019 = vmax.f32 %v1346, %v1827
  %v2020 = vmax.f32 %v1347, %v1828
  %v2021 = vmax.f32 %v1348, %v1829
  %v2022 = vmax.f32 %v1349, %v1830
  %v2023 = vmax.f32 %v1350, %v1831
  %v2024 = vmax.f32 %v1351, %v1832
  %v2025 = vmax.f32 %v1352, %v1833
  %v2026 = vmax.f32 %v1353, %v1834
  %v2027 = vmax.f32 %v1354, %v1835
  %v2028 = vmax.f32 %v1355, %v1836
  %v2029 = vmax.f32 %v1356, %v1837
  %v2030 = vmax.f32 %v1357, %v1838
  %v2031 = vmax.f32 %v1358, %v1839
  %v2032 = vmax.f32 %v1359, %v1840
  %v2033 = vmax.f32 %v1360, %v1841
  %v2034 = vmax.f32 %v1361, %v1842
  %v2035 = vmax.f32 %v1362, %v1843
  %v2036 = vmax.f32 %v1363, %v1844
  %v2037 = vmax.f32 %v1364, %v1845
  %v2038 = vmax.f32 %v1365, %v1846
  %v2039 = vmax.f32 %v1366, %v1847
  %v2040 = vmax.f32 %v1367, %v1848
  %v2041 = vmax.f32 %v1368, %v1849
  %v2042 = vmax.f32 %v1369, %v1850
  %v2043 = vmax.f32 %v1370, %v1851
  %v2044 = vld [vmem:[%s2] sm:$0x1]
  %v2046 = vlaneseq
  %v2047 = vshrl.u32 %v2046, 7
  %v2048 = vsub.s32 0, %v2047
  %v2049 = vrot.slane %v2044, %v2048
  %v2050 = vcombine.high %v2049, %v2049
  %v2052 = vunpack.c.l.s4 1983009808
  %v2053 = vunpack.c.0.s8 %v2052
  %v2054 = vlaneseq
  %v2055 = vshrl.u32 %v2054, 7
  %v2056 = vsub.s32 %v2053, %v2055
  %v2057 = vrot.slane %v2049, %v2056
  %v2059 = vunpack.c.l.s4 1983009808
  %v2060 = vunpack.c.0.s8 %v2059
  %v2061 = vlaneseq
  %v2062 = vshrl.u32 %v2061, 7
  %v2063 = vsub.s32 %v2060, %v2062
  %v2064 = vrot.slane %v2050, %v2063
  %v2065 = vcombine.high %v2057, %v2057
  %v2066 = vcombine.high %v2064, %v2064
  %v2067 = vrot.slane %v2057, 1
  %v2068 = vrot.slane %v2065, 1
  %v2069 = vrot.slane %v2064, 1
  %v2070 = vrot.slane %v2066, 1
  %v2079 = vadd.f32 %v1948, %v2057
  %v2080 = vadd.f32 %v1949, %v2067
  %v2081 = vadd.f32 %v1950, %v2065
  %v2082 = vadd.f32 %v1951, %v2068
  %v2083 = vadd.f32 %v1952, %v2064
  %v2084 = vadd.f32 %v1953, %v2069
  %v2085 = vadd.f32 %v1954, %v2066
  %v2086 = vadd.f32 %v1955, %v2070
  %v2087 = vadd.f32 %v1956, %v2057
  %v2088 = vadd.f32 %v1957, %v2067
  %v2089 = vadd.f32 %v1958, %v2065
  %v2090 = vadd.f32 %v1959, %v2068
  %v2091 = vadd.f32 %v1960, %v2057
  %v2092 = vadd.f32 %v1961, %v2067
  %v2093 = vadd.f32 %v1962, %v2065
  %v2094 = vadd.f32 %v1963, %v2068
  %v2095 = vadd.f32 %v1964, %v2064
  %v2096 = vadd.f32 %v1965, %v2069
  %v2097 = vadd.f32 %v1966, %v2066
  %v2098 = vadd.f32 %v1967, %v2070
  %v2099 = vadd.f32 %v1968, %v2057
  %v2100 = vadd.f32 %v1969, %v2067
  %v2101 = vadd.f32 %v1970, %v2065
  %v2102 = vadd.f32 %v1971, %v2068
  %v2103 = vadd.f32 %v1972, %v2057
  %v2104 = vadd.f32 %v1973, %v2067
  %v2105 = vadd.f32 %v1974, %v2065
  %v2106 = vadd.f32 %v1975, %v2068
  %v2107 = vadd.f32 %v1976, %v2064
  %v2108 = vadd.f32 %v1977, %v2069
  %v2109 = vadd.f32 %v1978, %v2066
  %v2110 = vadd.f32 %v1979, %v2070
  %v2111 = vadd.f32 %v1980, %v2057
  %v2112 = vadd.f32 %v1981, %v2067
  %v2113 = vadd.f32 %v1982, %v2065
  %v2114 = vadd.f32 %v1983, %v2068
  %v2115 = vadd.f32 %v1984, %v2057
  %v2116 = vadd.f32 %v1985, %v2067
  %v2117 = vadd.f32 %v1986, %v2065
  %v2118 = vadd.f32 %v1987, %v2068
  %v2119 = vadd.f32 %v1988, %v2064
  %v2120 = vadd.f32 %v1989, %v2069
  %v2121 = vadd.f32 %v1990, %v2066
  %v2122 = vadd.f32 %v1991, %v2070
  %v2123 = vadd.f32 %v1992, %v2057
  %v2124 = vadd.f32 %v1993, %v2067
  %v2125 = vadd.f32 %v1994, %v2065
  %v2126 = vadd.f32 %v1995, %v2068
  %v2127 = vadd.f32 %v1996, %v2057
  %v2128 = vadd.f32 %v1997, %v2067
  %v2129 = vadd.f32 %v1998, %v2065
  %v2130 = vadd.f32 %v1999, %v2068
  %v2131 = vadd.f32 %v2000, %v2064
  %v2132 = vadd.f32 %v2001, %v2069
  %v2133 = vadd.f32 %v2002, %v2066
  %v2134 = vadd.f32 %v2003, %v2070
  %v2135 = vadd.f32 %v2004, %v2057
  %v2136 = vadd.f32 %v2005, %v2067
  %v2137 = vadd.f32 %v2006, %v2065
  %v2138 = vadd.f32 %v2007, %v2068
  %v2139 = vadd.f32 %v2008, %v2057
  %v2140 = vadd.f32 %v2009, %v2067
  %v2141 = vadd.f32 %v2010, %v2065
  %v2142 = vadd.f32 %v2011, %v2068
  %v2143 = vadd.f32 %v2012, %v2064
  %v2144 = vadd.f32 %v2013, %v2069
  %v2145 = vadd.f32 %v2014, %v2066
  %v2146 = vadd.f32 %v2015, %v2070
  %v2147 = vadd.f32 %v2016, %v2057
  %v2148 = vadd.f32 %v2017, %v2067
  %v2149 = vadd.f32 %v2018, %v2065
  %v2150 = vadd.f32 %v2019, %v2068
  %v2151 = vadd.f32 %v2020, %v2057
  %v2152 = vadd.f32 %v2021, %v2067
  %v2153 = vadd.f32 %v2022, %v2065
  %v2154 = vadd.f32 %v2023, %v2068
  %v2155 = vadd.f32 %v2024, %v2064
  %v2156 = vadd.f32 %v2025, %v2069
  %v2157 = vadd.f32 %v2026, %v2066
  %v2158 = vadd.f32 %v2027, %v2070
  %v2159 = vadd.f32 %v2028, %v2057
  %v2160 = vadd.f32 %v2029, %v2067
  %v2161 = vadd.f32 %v2030, %v2065
  %v2162 = vadd.f32 %v2031, %v2068
  %v2163 = vadd.f32 %v2032, %v2057
  %v2164 = vadd.f32 %v2033, %v2067
  %v2165 = vadd.f32 %v2034, %v2065
  %v2166 = vadd.f32 %v2035, %v2068
  %v2167 = vadd.f32 %v2036, %v2064
  %v2168 = vadd.f32 %v2037, %v2069
  %v2169 = vadd.f32 %v2038, %v2066
  %v2170 = vadd.f32 %v2039, %v2070
  %v2171 = vadd.f32 %v2040, %v2057
  %v2172 = vadd.f32 %v2041, %v2067
  %v2173 = vadd.f32 %v2042, %v2065
  %v2174 = vadd.f32 %v2043, %v2068
  %v2175 = vmax.f32 %v2079, 0.0
  %v2176 = vmax.f32 %v2080, 0.0
  %v2177 = vmax.f32 %v2081, 0.0
  %v2178 = vmax.f32 %v2082, 0.0
  %v2179 = vmax.f32 %v2083, 0.0
  %v2180 = vmax.f32 %v2084, 0.0
  %v2181 = vmax.f32 %v2085, 0.0
  %v2182 = vmax.f32 %v2086, 0.0
  %v2183 = vmax.f32 %v2087, 0.0
  %v2184 = vmax.f32 %v2088, 0.0
  %v2185 = vmax.f32 %v2089, 0.0
  %v2186 = vmax.f32 %v2090, 0.0
  %v2187 = vmax.f32 %v2091, 0.0
  %v2188 = vmax.f32 %v2092, 0.0
  %v2189 = vmax.f32 %v2093, 0.0
  %v2190 = vmax.f32 %v2094, 0.0
  %v2191 = vmax.f32 %v2095, 0.0
  %v2192 = vmax.f32 %v2096, 0.0
  %v2193 = vmax.f32 %v2097, 0.0
  %v2194 = vmax.f32 %v2098, 0.0
  %v2195 = vmax.f32 %v2099, 0.0
  %v2196 = vmax.f32 %v2100, 0.0
  %v2197 = vmax.f32 %v2101, 0.0
  %v2198 = vmax.f32 %v2102, 0.0
  %v2199 = vmax.f32 %v2103, 0.0
  %v2200 = vmax.f32 %v2104, 0.0
  %v2201 = vmax.f32 %v2105, 0.0
  %v2202 = vmax.f32 %v2106, 0.0
  %v2203 = vmax.f32 %v2107, 0.0
  %v2204 = vmax.f32 %v2108, 0.0
  %v2205 = vmax.f32 %v2109, 0.0
  %v2206 = vmax.f32 %v2110, 0.0
  %v2207 = vmax.f32 %v2111, 0.0
  %v2208 = vmax.f32 %v2112, 0.0
  %v2209 = vmax.f32 %v2113, 0.0
  %v2210 = vmax.f32 %v2114, 0.0
  %v2211 = vmax.f32 %v2115, 0.0
  %v2212 = vmax.f32 %v2116, 0.0
  %v2213 = vmax.f32 %v2117, 0.0
  %v2214 = vmax.f32 %v2118, 0.0
  %v2215 = vmax.f32 %v2119, 0.0
  %v2216 = vmax.f32 %v2120, 0.0
  %v2217 = vmax.f32 %v2121, 0.0
  %v2218 = vmax.f32 %v2122, 0.0
  %v2219 = vmax.f32 %v2123, 0.0
  %v2220 = vmax.f32 %v2124, 0.0
  %v2221 = vmax.f32 %v2125, 0.0
  %v2222 = vmax.f32 %v2126, 0.0
  %v2223 = vmax.f32 %v2127, 0.0
  %v2224 = vmax.f32 %v2128, 0.0
  %v2225 = vmax.f32 %v2129, 0.0
  %v2226 = vmax.f32 %v2130, 0.0
  %v2227 = vmax.f32 %v2131, 0.0
  %v2228 = vmax.f32 %v2132, 0.0
  %v2229 = vmax.f32 %v2133, 0.0
  %v2230 = vmax.f32 %v2134, 0.0
  %v2231 = vmax.f32 %v2135, 0.0
  %v2232 = vmax.f32 %v2136, 0.0
  %v2233 = vmax.f32 %v2137, 0.0
  %v2234 = vmax.f32 %v2138, 0.0
  %v2235 = vmax.f32 %v2139, 0.0
  %v2236 = vmax.f32 %v2140, 0.0
  %v2237 = vmax.f32 %v2141, 0.0
  %v2238 = vmax.f32 %v2142, 0.0
  %v2239 = vmax.f32 %v2143, 0.0
  %v2240 = vmax.f32 %v2144, 0.0
  %v2241 = vmax.f32 %v2145, 0.0
  %v2242 = vmax.f32 %v2146, 0.0
  %v2243 = vmax.f32 %v2147, 0.0
  %v2244 = vmax.f32 %v2148, 0.0
  %v2245 = vmax.f32 %v2149, 0.0
  %v2246 = vmax.f32 %v2150, 0.0
  %v2247 = vmax.f32 %v2151, 0.0
  %v2248 = vmax.f32 %v2152, 0.0
  %v2249 = vmax.f32 %v2153, 0.0
  %v2250 = vmax.f32 %v2154, 0.0
  %v2251 = vmax.f32 %v2155, 0.0
  %v2252 = vmax.f32 %v2156, 0.0
  %v2253 = vmax.f32 %v2157, 0.0
  %v2254 = vmax.f32 %v2158, 0.0
  %v2255 = vmax.f32 %v2159, 0.0
  %v2256 = vmax.f32 %v2160, 0.0
  %v2257 = vmax.f32 %v2161, 0.0
  %v2258 = vmax.f32 %v2162, 0.0
  %v2259 = vmax.f32 %v2163, 0.0
  %v2260 = vmax.f32 %v2164, 0.0
  %v2261 = vmax.f32 %v2165, 0.0
  %v2262 = vmax.f32 %v2166, 0.0
  %v2263 = vmax.f32 %v2167, 0.0
  %v2264 = vmax.f32 %v2168, 0.0
  %v2265 = vmax.f32 %v2169, 0.0
  %v2266 = vmax.f32 %v2170, 0.0
  %v2267 = vmax.f32 %v2171, 0.0
  %v2268 = vmax.f32 %v2172, 0.0
  %v2269 = vmax.f32 %v2173, 0.0
  %v2270 = vmax.f32 %v2174, 0.0
  %v2335 = vlaneseq
  %v2336 = vshrl.u32 %v2335, 7
  %v2337 = vsub.s32 0, %v2336
  %v2338 = vrot.slane %v2175, %v2337
  %v2339 = vlaneseq
  %v2340 = vshrl.u32 %v2339, 7
  %v2341 = vsub.s32 0, %v2340
  %v2342 = vrot.slane %v2176, %v2341
  %v2343 = vlaneseq
  %v2344 = vshrl.u32 %v2343, 7
  %v2345 = vsub.s32 0, %v2344
  %v2346 = vrot.slane %v2177, %v2345
  %v2347 = vlaneseq
  %v2348 = vshrl.u32 %v2347, 7
  %v2349 = vsub.s32 0, %v2348
  %v2350 = vrot.slane %v2178, %v2349
  %v2351 = vlaneseq
  %v2352 = vshrl.u32 %v2351, 7
  %v2353 = vsub.s32 0, %v2352
  %v2354 = vrot.slane %v2179, %v2353
  %v2355 = vlaneseq
  %v2356 = vshrl.u32 %v2355, 7
  %v2357 = vsub.s32 0, %v2356
  %v2358 = vrot.slane %v2180, %v2357
  %v2359 = vlaneseq
  %v2360 = vshrl.u32 %v2359, 7
  %v2361 = vsub.s32 0, %v2360
  %v2362 = vrot.slane %v2181, %v2361
  %v2363 = vlaneseq
  %v2364 = vshrl.u32 %v2363, 7
  %v2365 = vsub.s32 0, %v2364
  %v2366 = vrot.slane %v2182, %v2365
  %v2367 = vlaneseq
  %v2368 = vshrl.u32 %v2367, 7
  %v2369 = vsub.s32 0, %v2368
  %v2370 = vrot.slane %v2187, %v2369
  %v2371 = vlaneseq
  %v2372 = vshrl.u32 %v2371, 7
  %v2373 = vsub.s32 0, %v2372
  %v2374 = vrot.slane %v2188, %v2373
  %v2375 = vlaneseq
  %v2376 = vshrl.u32 %v2375, 7
  %v2377 = vsub.s32 0, %v2376
  %v2378 = vrot.slane %v2189, %v2377
  %v2379 = vlaneseq
  %v2380 = vshrl.u32 %v2379, 7
  %v2381 = vsub.s32 0, %v2380
  %v2382 = vrot.slane %v2190, %v2381
  %v2383 = vlaneseq
  %v2384 = vshrl.u32 %v2383, 7
  %v2385 = vsub.s32 0, %v2384
  %v2386 = vrot.slane %v2191, %v2385
  %v2387 = vlaneseq
  %v2388 = vshrl.u32 %v2387, 7
  %v2389 = vsub.s32 0, %v2388
  %v2390 = vrot.slane %v2192, %v2389
  %v2391 = vlaneseq
  %v2392 = vshrl.u32 %v2391, 7
  %v2393 = vsub.s32 0, %v2392
  %v2394 = vrot.slane %v2193, %v2393
  %v2395 = vlaneseq
  %v2396 = vshrl.u32 %v2395, 7
  %v2397 = vsub.s32 0, %v2396
  %v2398 = vrot.slane %v2194, %v2397
  %v2399 = vlaneseq
  %v2400 = vshrl.u32 %v2399, 7
  %v2401 = vsub.s32 0, %v2400
  %v2402 = vrot.slane %v2199, %v2401
  %v2403 = vlaneseq
  %v2404 = vshrl.u32 %v2403, 7
  %v2405 = vsub.s32 0, %v2404
  %v2406 = vrot.slane %v2200, %v2405
  %v2407 = vlaneseq
  %v2408 = vshrl.u32 %v2407, 7
  %v2409 = vsub.s32 0, %v2408
  %v2410 = vrot.slane %v2201, %v2409
  %v2411 = vlaneseq
  %v2412 = vshrl.u32 %v2411, 7
  %v2413 = vsub.s32 0, %v2412
  %v2414 = vrot.slane %v2202, %v2413
  %v2415 = vlaneseq
  %v2416 = vshrl.u32 %v2415, 7
  %v2417 = vsub.s32 0, %v2416
  %v2418 = vrot.slane %v2203, %v2417
  %v2419 = vlaneseq
  %v2420 = vshrl.u32 %v2419, 7
  %v2421 = vsub.s32 0, %v2420
  %v2422 = vrot.slane %v2204, %v2421
  %v2423 = vlaneseq
  %v2424 = vshrl.u32 %v2423, 7
  %v2425 = vsub.s32 0, %v2424
  %v2426 = vrot.slane %v2205, %v2425
  %v2427 = vlaneseq
  %v2428 = vshrl.u32 %v2427, 7
  %v2429 = vsub.s32 0, %v2428
  %v2430 = vrot.slane %v2206, %v2429
  %v2431 = vlaneseq
  %v2432 = vshrl.u32 %v2431, 7
  %v2433 = vsub.s32 0, %v2432
  %v2434 = vrot.slane %v2211, %v2433
  %v2435 = vlaneseq
  %v2436 = vshrl.u32 %v2435, 7
  %v2437 = vsub.s32 0, %v2436
  %v2438 = vrot.slane %v2212, %v2437
  %v2439 = vlaneseq
  %v2440 = vshrl.u32 %v2439, 7
  %v2441 = vsub.s32 0, %v2440
  %v2442 = vrot.slane %v2213, %v2441
  %v2443 = vlaneseq
  %v2444 = vshrl.u32 %v2443, 7
  %v2445 = vsub.s32 0, %v2444
  %v2446 = vrot.slane %v2214, %v2445
  %v2447 = vlaneseq
  %v2448 = vshrl.u32 %v2447, 7
  %v2449 = vsub.s32 0, %v2448
  %v2450 = vrot.slane %v2215, %v2449
  %v2451 = vlaneseq
  %v2452 = vshrl.u32 %v2451, 7
  %v2453 = vsub.s32 0, %v2452
  %v2454 = vrot.slane %v2216, %v2453
  %v2455 = vlaneseq
  %v2456 = vshrl.u32 %v2455, 7
  %v2457 = vsub.s32 0, %v2456
  %v2458 = vrot.slane %v2217, %v2457
  %v2459 = vlaneseq
  %v2460 = vshrl.u32 %v2459, 7
  %v2461 = vsub.s32 0, %v2460
  %v2462 = vrot.slane %v2218, %v2461
  %v2463 = vlaneseq
  %v2464 = vshrl.u32 %v2463, 7
  %v2465 = vsub.s32 0, %v2464
  %v2466 = vrot.slane %v2223, %v2465
  %v2467 = vlaneseq
  %v2468 = vshrl.u32 %v2467, 7
  %v2469 = vsub.s32 0, %v2468
  %v2470 = vrot.slane %v2224, %v2469
  %v2471 = vlaneseq
  %v2472 = vshrl.u32 %v2471, 7
  %v2473 = vsub.s32 0, %v2472
  %v2474 = vrot.slane %v2225, %v2473
  %v2475 = vlaneseq
  %v2476 = vshrl.u32 %v2475, 7
  %v2477 = vsub.s32 0, %v2476
  %v2478 = vrot.slane %v2226, %v2477
  %v2479 = vlaneseq
  %v2480 = vshrl.u32 %v2479, 7
  %v2481 = vsub.s32 0, %v2480
  %v2482 = vrot.slane %v2227, %v2481
  %v2483 = vlaneseq
  %v2484 = vshrl.u32 %v2483, 7
  %v2485 = vsub.s32 0, %v2484
  %v2486 = vrot.slane %v2228, %v2485
  %v2487 = vlaneseq
  %v2488 = vshrl.u32 %v2487, 7
  %v2489 = vsub.s32 0, %v2488
  %v2490 = vrot.slane %v2229, %v2489
  %v2491 = vlaneseq
  %v2492 = vshrl.u32 %v2491, 7
  %v2493 = vsub.s32 0, %v2492
  %v2494 = vrot.slane %v2230, %v2493
  %v2495 = vlaneseq
  %v2496 = vshrl.u32 %v2495, 7
  %v2497 = vsub.s32 0, %v2496
  %v2498 = vrot.slane %v2235, %v2497
  %v2499 = vlaneseq
  %v2500 = vshrl.u32 %v2499, 7
  %v2501 = vsub.s32 0, %v2500
  %v2502 = vrot.slane %v2236, %v2501
  %v2503 = vlaneseq
  %v2504 = vshrl.u32 %v2503, 7
  %v2505 = vsub.s32 0, %v2504
  %v2506 = vrot.slane %v2237, %v2505
  %v2507 = vlaneseq
  %v2508 = vshrl.u32 %v2507, 7
  %v2509 = vsub.s32 0, %v2508
  %v2510 = vrot.slane %v2238, %v2509
  %v2511 = vlaneseq
  %v2512 = vshrl.u32 %v2511, 7
  %v2513 = vsub.s32 0, %v2512
  %v2514 = vrot.slane %v2239, %v2513
  %v2515 = vlaneseq
  %v2516 = vshrl.u32 %v2515, 7
  %v2517 = vsub.s32 0, %v2516
  %v2518 = vrot.slane %v2240, %v2517
  %v2519 = vlaneseq
  %v2520 = vshrl.u32 %v2519, 7
  %v2521 = vsub.s32 0, %v2520
  %v2522 = vrot.slane %v2241, %v2521
  %v2523 = vlaneseq
  %v2524 = vshrl.u32 %v2523, 7
  %v2525 = vsub.s32 0, %v2524
  %v2526 = vrot.slane %v2242, %v2525
  %v2527 = vlaneseq
  %v2528 = vshrl.u32 %v2527, 7
  %v2529 = vsub.s32 0, %v2528
  %v2530 = vrot.slane %v2247, %v2529
  %v2531 = vlaneseq
  %v2532 = vshrl.u32 %v2531, 7
  %v2533 = vsub.s32 0, %v2532
  %v2534 = vrot.slane %v2248, %v2533
  %v2535 = vlaneseq
  %v2536 = vshrl.u32 %v2535, 7
  %v2537 = vsub.s32 0, %v2536
  %v2538 = vrot.slane %v2249, %v2537
  %v2539 = vlaneseq
  %v2540 = vshrl.u32 %v2539, 7
  %v2541 = vsub.s32 0, %v2540
  %v2542 = vrot.slane %v2250, %v2541
  %v2543 = vlaneseq
  %v2544 = vshrl.u32 %v2543, 7
  %v2545 = vsub.s32 0, %v2544
  %v2546 = vrot.slane %v2251, %v2545
  %v2547 = vlaneseq
  %v2548 = vshrl.u32 %v2547, 7
  %v2549 = vsub.s32 0, %v2548
  %v2550 = vrot.slane %v2252, %v2549
  %v2551 = vlaneseq
  %v2552 = vshrl.u32 %v2551, 7
  %v2553 = vsub.s32 0, %v2552
  %v2554 = vrot.slane %v2253, %v2553
  %v2555 = vlaneseq
  %v2556 = vshrl.u32 %v2555, 7
  %v2557 = vsub.s32 0, %v2556
  %v2558 = vrot.slane %v2254, %v2557
  %v2559 = vlaneseq
  %v2560 = vshrl.u32 %v2559, 7
  %v2561 = vsub.s32 0, %v2560
  %v2562 = vrot.slane %v2259, %v2561
  %v2563 = vlaneseq
  %v2564 = vshrl.u32 %v2563, 7
  %v2565 = vsub.s32 0, %v2564
  %v2566 = vrot.slane %v2260, %v2565
  %v2567 = vlaneseq
  %v2568 = vshrl.u32 %v2567, 7
  %v2569 = vsub.s32 0, %v2568
  %v2570 = vrot.slane %v2261, %v2569
  %v2571 = vlaneseq
  %v2572 = vshrl.u32 %v2571, 7
  %v2573 = vsub.s32 0, %v2572
  %v2574 = vrot.slane %v2262, %v2573
  %v2575 = vlaneseq
  %v2576 = vshrl.u32 %v2575, 7
  %v2577 = vsub.s32 0, %v2576
  %v2578 = vrot.slane %v2263, %v2577
  %v2579 = vlaneseq
  %v2580 = vshrl.u32 %v2579, 7
  %v2581 = vsub.s32 0, %v2580
  %v2582 = vrot.slane %v2264, %v2581
  %v2583 = vlaneseq
  %v2584 = vshrl.u32 %v2583, 7
  %v2585 = vsub.s32 0, %v2584
  %v2586 = vrot.slane %v2265, %v2585
  %v2587 = vlaneseq
  %v2588 = vshrl.u32 %v2587, 7
  %v2589 = vsub.s32 0, %v2588
  %v2590 = vrot.slane %v2266, %v2589
  %vm2591 = vcmask 1041409
  %v2592 = vsel %vm2591, %v2342, %v2338
  %vm2593 = vcmask 1042434
  %v2594 = vsel %vm2593, %v2346, %v2592
  %vm2595 = vcmask 1043459
  %v2596 = vsel %vm2595, %v2350, %v2594
  %vm2597 = vcmask 1044484
  %v2598 = vsel %vm2597, %v2354, %v2596
  %vm2599 = vcmask 1045509
  %v2600 = vsel %vm2599, %v2358, %v2598
  %vm2601 = vcmask 1046534
  %v2602 = vsel %vm2601, %v2362, %v2600
  %vm2603 = vcmask 1047559
  %v2604 = vsel %vm2603, %v2366, %v2602
  %v2605 = vsel %vm2591, %v2374, %v2370
  %v2606 = vsel %vm2593, %v2378, %v2605
  %v2607 = vsel %vm2595, %v2382, %v2606
  %v2608 = vsel %vm2597, %v2386, %v2607
  %v2609 = vsel %vm2599, %v2390, %v2608
  %v2610 = vsel %vm2601, %v2394, %v2609
  %v2611 = vsel %vm2603, %v2398, %v2610
  %v2612 = vsel %vm2591, %v2406, %v2402
  %v2613 = vsel %vm2593, %v2410, %v2612
  %v2614 = vsel %vm2595, %v2414, %v2613
  %v2615 = vsel %vm2597, %v2418, %v2614
  %v2616 = vsel %vm2599, %v2422, %v2615
  %v2617 = vsel %vm2601, %v2426, %v2616
  %v2618 = vsel %vm2603, %v2430, %v2617
  %v2619 = vsel %vm2591, %v2438, %v2434
  %v2620 = vsel %vm2593, %v2442, %v2619
  %v2621 = vsel %vm2595, %v2446, %v2620
  %v2622 = vsel %vm2597, %v2450, %v2621
  %v2623 = vsel %vm2599, %v2454, %v2622
  %v2624 = vsel %vm2601, %v2458, %v2623
  %v2625 = vsel %vm2603, %v2462, %v2624
  %v2626 = vsel %vm2591, %v2470, %v2466
  %v2627 = vsel %vm2593, %v2474, %v2626
  %v2628 = vsel %vm2595, %v2478, %v2627
  %v2629 = vsel %vm2597, %v2482, %v2628
  %v2630 = vsel %vm2599, %v2486, %v2629
  %v2631 = vsel %vm2601, %v2490, %v2630
  %v2632 = vsel %vm2603, %v2494, %v2631
  %v2633 = vsel %vm2591, %v2502, %v2498
  %v2634 = vsel %vm2593, %v2506, %v2633
  %v2635 = vsel %vm2595, %v2510, %v2634
  %v2636 = vsel %vm2597, %v2514, %v2635
  %v2637 = vsel %vm2599, %v2518, %v2636
  %v2638 = vsel %vm2601, %v2522, %v2637
  %v2639 = vsel %vm2603, %v2526, %v2638
  %v2640 = vsel %vm2591, %v2534, %v2530
  %v2641 = vsel %vm2593, %v2538, %v2640
  %v2642 = vsel %vm2595, %v2542, %v2641
  %v2643 = vsel %vm2597, %v2546, %v2642
  %v2644 = vsel %vm2599, %v2550, %v2643
  %v2645 = vsel %vm2601, %v2554, %v2644
  %v2646 = vsel %vm2603, %v2558, %v2645
  %v2647 = vsel %vm2591, %v2566, %v2562
  %v2648 = vsel %vm2593, %v2570, %v2647
  %v2649 = vsel %vm2595, %v2574, %v2648
  %v2650 = vsel %vm2597, %v2578, %v2649
  %v2651 = vsel %vm2599, %v2582, %v2650
  %v2652 = vsel %vm2601, %v2586, %v2651
  %v2653 = vsel %vm2603, %v2590, %v2652
  %v2670 = vlaneseq
  %v2671 = vshrl.u32 %v2670, 7
  %v2672 = vsub.s32 0, %v2671
  %v2673 = vrot.slane %v2183, %v2672
  %v2674 = vlaneseq
  %v2675 = vshrl.u32 %v2674, 7
  %v2676 = vsub.s32 0, %v2675
  %v2677 = vrot.slane %v2195, %v2676
  %v2678 = vlaneseq
  %v2679 = vshrl.u32 %v2678, 7
  %v2680 = vsub.s32 0, %v2679
  %v2681 = vrot.slane %v2207, %v2680
  %v2682 = vlaneseq
  %v2683 = vshrl.u32 %v2682, 7
  %v2684 = vsub.s32 0, %v2683
  %v2685 = vrot.slane %v2219, %v2684
  %v2686 = vlaneseq
  %v2687 = vshrl.u32 %v2686, 7
  %v2688 = vsub.s32 0, %v2687
  %v2689 = vrot.slane %v2231, %v2688
  %v2690 = vlaneseq
  %v2691 = vshrl.u32 %v2690, 7
  %v2692 = vsub.s32 0, %v2691
  %v2693 = vrot.slane %v2243, %v2692
  %v2694 = vlaneseq
  %v2695 = vshrl.u32 %v2694, 7
  %v2696 = vsub.s32 0, %v2695
  %v2697 = vrot.slane %v2255, %v2696
  %v2698 = vlaneseq
  %v2699 = vshrl.u32 %v2698, 7
  %v2700 = vsub.s32 0, %v2699
  %v2701 = vrot.slane %v2267, %v2700
  %v2702 = vsel %vm2591, %v2346, %v2342
  %v2703 = vsel %vm2593, %v2350, %v2702
  %v2704 = vsel %vm2595, %v2354, %v2703
  %v2705 = vsel %vm2597, %v2358, %v2704
  %v2706 = vsel %vm2599, %v2362, %v2705
  %v2707 = vsel %vm2601, %v2366, %v2706
  %v2708 = vsel %vm2603, %v2673, %v2707
  %v2709 = vsel %vm2591, %v2378, %v2374
  %v2710 = vsel %vm2593, %v2382, %v2709
  %v2711 = vsel %vm2595, %v2386, %v2710
  %v2712 = vsel %vm2597, %v2390, %v2711
  %v2713 = vsel %vm2599, %v2394, %v2712
  %v2714 = vsel %vm2601, %v2398, %v2713
  %v2715 = vsel %vm2603, %v2677, %v2714
  %v2716 = vsel %vm2591, %v2410, %v2406
  %v2717 = vsel %vm2593, %v2414, %v2716
  %v2718 = vsel %vm2595, %v2418, %v2717
  %v2719 = vsel %vm2597, %v2422, %v2718
  %v2720 = vsel %vm2599, %v2426, %v2719
  %v2721 = vsel %vm2601, %v2430, %v2720
  %v2722 = vsel %vm2603, %v2681, %v2721
  %v2723 = vsel %vm2591, %v2442, %v2438
  %v2724 = vsel %vm2593, %v2446, %v2723
  %v2725 = vsel %vm2595, %v2450, %v2724
  %v2726 = vsel %vm2597, %v2454, %v2725
  %v2727 = vsel %vm2599, %v2458, %v2726
  %v2728 = vsel %vm2601, %v2462, %v2727
  %v2729 = vsel %vm2603, %v2685, %v2728
  %v2730 = vsel %vm2591, %v2474, %v2470
  %v2731 = vsel %vm2593, %v2478, %v2730
  %v2732 = vsel %vm2595, %v2482, %v2731
  %v2733 = vsel %vm2597, %v2486, %v2732
  %v2734 = vsel %vm2599, %v2490, %v2733
  %v2735 = vsel %vm2601, %v2494, %v2734
  %v2736 = vsel %vm2603, %v2689, %v2735
  %v2737 = vsel %vm2591, %v2506, %v2502
  %v2738 = vsel %vm2593, %v2510, %v2737
  %v2739 = vsel %vm2595, %v2514, %v2738
  %v2740 = vsel %vm2597, %v2518, %v2739
  %v2741 = vsel %vm2599, %v2522, %v2740
  %v2742 = vsel %vm2601, %v2526, %v2741
  %v2743 = vsel %vm2603, %v2693, %v2742
  %v2744 = vsel %vm2591, %v2538, %v2534
  %v2745 = vsel %vm2593, %v2542, %v2744
  %v2746 = vsel %vm2595, %v2546, %v2745
  %v2747 = vsel %vm2597, %v2550, %v2746
  %v2748 = vsel %vm2599, %v2554, %v2747
  %v2749 = vsel %vm2601, %v2558, %v2748
  %v2750 = vsel %vm2603, %v2697, %v2749
  %v2751 = vsel %vm2591, %v2570, %v2566
  %v2752 = vsel %vm2593, %v2574, %v2751
  %v2753 = vsel %vm2595, %v2578, %v2752
  %v2754 = vsel %vm2597, %v2582, %v2753
  %v2755 = vsel %vm2599, %v2586, %v2754
  %v2756 = vsel %vm2601, %v2590, %v2755
  %v2757 = vsel %vm2603, %v2701, %v2756
  %2758 = vrot.lane.b32.xlu0 %v2708, 72
  %v2759 = vpop.permute.xlu0 %2758
  %2760 = vrot.lane.b32.xlu0 %v2715, 72
  %v2761 = vpop.permute.xlu0 %2760
  %2762 = vrot.lane.b32.xlu0 %v2722, 72
  %v2763 = vpop.permute.xlu0 %2762
  %2764 = vrot.lane.b32.xlu0 %v2729, 72
  %v2765 = vpop.permute.xlu0 %2764
  %2766 = vrot.lane.b32.xlu0 %v2736, 72
  %v2767 = vpop.permute.xlu0 %2766
  %2768 = vrot.lane.b32.xlu0 %v2743, 72
  %v2769 = vpop.permute.xlu0 %2768
  %2770 = vrot.lane.b32.xlu0 %v2750, 72
  %v2771 = vpop.permute.xlu0 %2770
  %2772 = vrot.lane.b32.xlu0 %v2757, 72
  %v2773 = vpop.permute.xlu0 %2772
  %v2790 = vlaneseq
  %v2791 = vshrl.u32 %v2790, 7
  %v2792 = vsub.s32 0, %v2791
  %v2793 = vrot.slane %v2184, %v2792
  %v2794 = vlaneseq
  %v2795 = vshrl.u32 %v2794, 7
  %v2796 = vsub.s32 0, %v2795
  %v2797 = vrot.slane %v2196, %v2796
  %v2798 = vlaneseq
  %v2799 = vshrl.u32 %v2798, 7
  %v2800 = vsub.s32 0, %v2799
  %v2801 = vrot.slane %v2208, %v2800
  %v2802 = vlaneseq
  %v2803 = vshrl.u32 %v2802, 7
  %v2804 = vsub.s32 0, %v2803
  %v2805 = vrot.slane %v2220, %v2804
  %v2806 = vlaneseq
  %v2807 = vshrl.u32 %v2806, 7
  %v2808 = vsub.s32 0, %v2807
  %v2809 = vrot.slane %v2232, %v2808
  %v2810 = vlaneseq
  %v2811 = vshrl.u32 %v2810, 7
  %v2812 = vsub.s32 0, %v2811
  %v2813 = vrot.slane %v2244, %v2812
  %v2814 = vlaneseq
  %v2815 = vshrl.u32 %v2814, 7
  %v2816 = vsub.s32 0, %v2815
  %v2817 = vrot.slane %v2256, %v2816
  %v2818 = vlaneseq
  %v2819 = vshrl.u32 %v2818, 7
  %v2820 = vsub.s32 0, %v2819
  %v2821 = vrot.slane %v2268, %v2820
  %v2822 = vsel %vm2591, %v2350, %v2346
  %v2823 = vsel %vm2593, %v2354, %v2822
  %v2824 = vsel %vm2595, %v2358, %v2823
  %v2825 = vsel %vm2597, %v2362, %v2824
  %v2826 = vsel %vm2599, %v2366, %v2825
  %v2827 = vsel %vm2601, %v2673, %v2826
  %v2828 = vsel %vm2603, %v2793, %v2827
  %v2829 = vsel %vm2591, %v2382, %v2378
  %v2830 = vsel %vm2593, %v2386, %v2829
  %v2831 = vsel %vm2595, %v2390, %v2830
  %v2832 = vsel %vm2597, %v2394, %v2831
  %v2833 = vsel %vm2599, %v2398, %v2832
  %v2834 = vsel %vm2601, %v2677, %v2833
  %v2835 = vsel %vm2603, %v2797, %v2834
  %v2836 = vsel %vm2591, %v2414, %v2410
  %v2837 = vsel %vm2593, %v2418, %v2836
  %v2838 = vsel %vm2595, %v2422, %v2837
  %v2839 = vsel %vm2597, %v2426, %v2838
  %v2840 = vsel %vm2599, %v2430, %v2839
  %v2841 = vsel %vm2601, %v2681, %v2840
  %v2842 = vsel %vm2603, %v2801, %v2841
  %v2843 = vsel %vm2591, %v2446, %v2442
  %v2844 = vsel %vm2593, %v2450, %v2843
  %v2845 = vsel %vm2595, %v2454, %v2844
  %v2846 = vsel %vm2597, %v2458, %v2845
  %v2847 = vsel %vm2599, %v2462, %v2846
  %v2848 = vsel %vm2601, %v2685, %v2847
  %v2849 = vsel %vm2603, %v2805, %v2848
  %v2850 = vsel %vm2591, %v2478, %v2474
  %v2851 = vsel %vm2593, %v2482, %v2850
  %v2852 = vsel %vm2595, %v2486, %v2851
  %v2853 = vsel %vm2597, %v2490, %v2852
  %v2854 = vsel %vm2599, %v2494, %v2853
  %v2855 = vsel %vm2601, %v2689, %v2854
  %v2856 = vsel %vm2603, %v2809, %v2855
  %v2857 = vsel %vm2591, %v2510, %v2506
  %v2858 = vsel %vm2593, %v2514, %v2857
  %v2859 = vsel %vm2595, %v2518, %v2858
  %v2860 = vsel %vm2597, %v2522, %v2859
  %v2861 = vsel %vm2599, %v2526, %v2860
  %v2862 = vsel %vm2601, %v2693, %v2861
  %v2863 = vsel %vm2603, %v2813, %v2862
  %v2864 = vsel %vm2591, %v2542, %v2538
  %v2865 = vsel %vm2593, %v2546, %v2864
  %v2866 = vsel %vm2595, %v2550, %v2865
  %v2867 = vsel %vm2597, %v2554, %v2866
  %v2868 = vsel %vm2599, %v2558, %v2867
  %v2869 = vsel %vm2601, %v2697, %v2868
  %v2870 = vsel %vm2603, %v2817, %v2869
  %v2871 = vsel %vm2591, %v2574, %v2570
  %v2872 = vsel %vm2593, %v2578, %v2871
  %v2873 = vsel %vm2595, %v2582, %v2872
  %v2874 = vsel %vm2597, %v2586, %v2873
  %v2875 = vsel %vm2599, %v2590, %v2874
  %v2876 = vsel %vm2601, %v2701, %v2875
  %v2877 = vsel %vm2603, %v2821, %v2876
  %2878 = vrot.lane.b32.xlu0 %v2828, 16
  %v2879 = vpop.permute.xlu0 %2878
  %2880 = vrot.lane.b32.xlu0 %v2835, 16
  %v2881 = vpop.permute.xlu0 %2880
  %2882 = vrot.lane.b32.xlu0 %v2842, 16
  %v2883 = vpop.permute.xlu0 %2882
  %2884 = vrot.lane.b32.xlu0 %v2849, 16
  %v2885 = vpop.permute.xlu0 %2884
  %2886 = vrot.lane.b32.xlu0 %v2856, 16
  %v2887 = vpop.permute.xlu0 %2886
  %2888 = vrot.lane.b32.xlu0 %v2863, 16
  %v2889 = vpop.permute.xlu0 %2888
  %2890 = vrot.lane.b32.xlu0 %v2870, 16
  %v2891 = vpop.permute.xlu0 %2890
  %2892 = vrot.lane.b32.xlu0 %v2877, 16
  %v2893 = vpop.permute.xlu0 %2892
  %v2910 = vlaneseq
  %v2911 = vshrl.u32 %v2910, 7
  %v2912 = vsub.s32 0, %v2911
  %v2913 = vrot.slane %v2185, %v2912
  %v2914 = vlaneseq
  %v2915 = vshrl.u32 %v2914, 7
  %v2916 = vsub.s32 0, %v2915
  %v2917 = vrot.slane %v2197, %v2916
  %v2918 = vlaneseq
  %v2919 = vshrl.u32 %v2918, 7
  %v2920 = vsub.s32 0, %v2919
  %v2921 = vrot.slane %v2209, %v2920
  %v2922 = vlaneseq
  %v2923 = vshrl.u32 %v2922, 7
  %v2924 = vsub.s32 0, %v2923
  %v2925 = vrot.slane %v2221, %v2924
  %v2926 = vlaneseq
  %v2927 = vshrl.u32 %v2926, 7
  %v2928 = vsub.s32 0, %v2927
  %v2929 = vrot.slane %v2233, %v2928
  %v2930 = vlaneseq
  %v2931 = vshrl.u32 %v2930, 7
  %v2932 = vsub.s32 0, %v2931
  %v2933 = vrot.slane %v2245, %v2932
  %v2934 = vlaneseq
  %v2935 = vshrl.u32 %v2934, 7
  %v2936 = vsub.s32 0, %v2935
  %v2937 = vrot.slane %v2257, %v2936
  %v2938 = vlaneseq
  %v2939 = vshrl.u32 %v2938, 7
  %v2940 = vsub.s32 0, %v2939
  %v2941 = vrot.slane %v2269, %v2940
  %v2942 = vsel %vm2591, %v2354, %v2350
  %v2943 = vsel %vm2593, %v2358, %v2942
  %v2944 = vsel %vm2595, %v2362, %v2943
  %v2945 = vsel %vm2597, %v2366, %v2944
  %v2946 = vsel %vm2599, %v2673, %v2945
  %v2947 = vsel %vm2601, %v2793, %v2946
  %v2948 = vsel %vm2603, %v2913, %v2947
  %v2949 = vsel %vm2591, %v2386, %v2382
  %v2950 = vsel %vm2593, %v2390, %v2949
  %v2951 = vsel %vm2595, %v2394, %v2950
  %v2952 = vsel %vm2597, %v2398, %v2951
  %v2953 = vsel %vm2599, %v2677, %v2952
  %v2954 = vsel %vm2601, %v2797, %v2953
  %v2955 = vsel %vm2603, %v2917, %v2954
  %v2956 = vsel %vm2591, %v2418, %v2414
  %v2957 = vsel %vm2593, %v2422, %v2956
  %v2958 = vsel %vm2595, %v2426, %v2957
  %v2959 = vsel %vm2597, %v2430, %v2958
  %v2960 = vsel %vm2599, %v2681, %v2959
  %v2961 = vsel %vm2601, %v2801, %v2960
  %v2962 = vsel %vm2603, %v2921, %v2961
  %v2963 = vsel %vm2591, %v2450, %v2446
  %v2964 = vsel %vm2593, %v2454, %v2963
  %v2965 = vsel %vm2595, %v2458, %v2964
  %v2966 = vsel %vm2597, %v2462, %v2965
  %v2967 = vsel %vm2599, %v2685, %v2966
  %v2968 = vsel %vm2601, %v2805, %v2967
  %v2969 = vsel %vm2603, %v2925, %v2968
  %v2970 = vsel %vm2591, %v2482, %v2478
  %v2971 = vsel %vm2593, %v2486, %v2970
  %v2972 = vsel %vm2595, %v2490, %v2971
  %v2973 = vsel %vm2597, %v2494, %v2972
  %v2974 = vsel %vm2599, %v2689, %v2973
  %v2975 = vsel %vm2601, %v2809, %v2974
  %v2976 = vsel %vm2603, %v2929, %v2975
  %v2977 = vsel %vm2591, %v2514, %v2510
  %v2978 = vsel %vm2593, %v2518, %v2977
  %v2979 = vsel %vm2595, %v2522, %v2978
  %v2980 = vsel %vm2597, %v2526, %v2979
  %v2981 = vsel %vm2599, %v2693, %v2980
  %v2982 = vsel %vm2601, %v2813, %v2981
  %v2983 = vsel %vm2603, %v2933, %v2982
  %v2984 = vsel %vm2591, %v2546, %v2542
  %v2985 = vsel %vm2593, %v2550, %v2984
  %v2986 = vsel %vm2595, %v2554, %v2985
  %v2987 = vsel %vm2597, %v2558, %v2986
  %v2988 = vsel %vm2599, %v2697, %v2987
  %v2989 = vsel %vm2601, %v2817, %v2988
  %v2990 = vsel %vm2603, %v2937, %v2989
  %v2991 = vsel %vm2591, %v2578, %v2574
  %v2992 = vsel %vm2593, %v2582, %v2991
  %v2993 = vsel %vm2595, %v2586, %v2992
  %v2994 = vsel %vm2597, %v2590, %v2993
  %v2995 = vsel %vm2599, %v2701, %v2994
  %v2996 = vsel %vm2601, %v2821, %v2995
  %v2997 = vsel %vm2603, %v2941, %v2996
  %2998 = vrot.lane.b32.xlu0 %v2948, 88
  %v2999 = vpop.permute.xlu0 %2998
  %3000 = vrot.lane.b32.xlu0 %v2955, 88
  %v3001 = vpop.permute.xlu0 %3000
  %3002 = vrot.lane.b32.xlu0 %v2962, 88
  %v3003 = vpop.permute.xlu0 %3002
  %3004 = vrot.lane.b32.xlu0 %v2969, 88
  %v3005 = vpop.permute.xlu0 %3004
  %3006 = vrot.lane.b32.xlu0 %v2976, 88
  %v3007 = vpop.permute.xlu0 %3006
  %3008 = vrot.lane.b32.xlu0 %v2983, 88
  %v3009 = vpop.permute.xlu0 %3008
  %3010 = vrot.lane.b32.xlu0 %v2990, 88
  %v3011 = vpop.permute.xlu0 %3010
  %3012 = vrot.lane.b32.xlu0 %v2997, 88
  %v3013 = vpop.permute.xlu0 %3012
  %v3030 = vlaneseq
  %v3031 = vshrl.u32 %v3030, 7
  %v3032 = vsub.s32 0, %v3031
  %v3033 = vrot.slane %v2186, %v3032
  %v3034 = vlaneseq
  %v3035 = vshrl.u32 %v3034, 7
  %v3036 = vsub.s32 0, %v3035
  %v3037 = vrot.slane %v2198, %v3036
  %v3038 = vlaneseq
  %v3039 = vshrl.u32 %v3038, 7
  %v3040 = vsub.s32 0, %v3039
  %v3041 = vrot.slane %v2210, %v3040
  %v3042 = vlaneseq
  %v3043 = vshrl.u32 %v3042, 7
  %v3044 = vsub.s32 0, %v3043
  %v3045 = vrot.slane %v2222, %v3044
  %v3046 = vlaneseq
  %v3047 = vshrl.u32 %v3046, 7
  %v3048 = vsub.s32 0, %v3047
  %v3049 = vrot.slane %v2234, %v3048
  %v3050 = vlaneseq
  %v3051 = vshrl.u32 %v3050, 7
  %v3052 = vsub.s32 0, %v3051
  %v3053 = vrot.slane %v2246, %v3052
  %v3054 = vlaneseq
  %v3055 = vshrl.u32 %v3054, 7
  %v3056 = vsub.s32 0, %v3055
  %v3057 = vrot.slane %v2258, %v3056
  %v3058 = vlaneseq
  %v3059 = vshrl.u32 %v3058, 7
  %v3060 = vsub.s32 0, %v3059
  %v3061 = vrot.slane %v2270, %v3060
  %v3062 = vsel %vm2591, %v2358, %v2354
  %v3063 = vsel %vm2593, %v2362, %v3062
  %v3064 = vsel %vm2595, %v2366, %v3063
  %v3065 = vsel %vm2597, %v2673, %v3064
  %v3066 = vsel %vm2599, %v2793, %v3065
  %v3067 = vsel %vm2601, %v2913, %v3066
  %v3068 = vsel %vm2603, %v3033, %v3067
  %v3069 = vsel %vm2591, %v2390, %v2386
  %v3070 = vsel %vm2593, %v2394, %v3069
  %v3071 = vsel %vm2595, %v2398, %v3070
  %v3072 = vsel %vm2597, %v2677, %v3071
  %v3073 = vsel %vm2599, %v2797, %v3072
  %v3074 = vsel %vm2601, %v2917, %v3073
  %v3075 = vsel %vm2603, %v3037, %v3074
  %v3076 = vsel %vm2591, %v2422, %v2418
  %v3077 = vsel %vm2593, %v2426, %v3076
  %v3078 = vsel %vm2595, %v2430, %v3077
  %v3079 = vsel %vm2597, %v2681, %v3078
  %v3080 = vsel %vm2599, %v2801, %v3079
  %v3081 = vsel %vm2601, %v2921, %v3080
  %v3082 = vsel %vm2603, %v3041, %v3081
  %v3083 = vsel %vm2591, %v2454, %v2450
  %v3084 = vsel %vm2593, %v2458, %v3083
  %v3085 = vsel %vm2595, %v2462, %v3084
  %v3086 = vsel %vm2597, %v2685, %v3085
  %v3087 = vsel %vm2599, %v2805, %v3086
  %v3088 = vsel %vm2601, %v2925, %v3087
  %v3089 = vsel %vm2603, %v3045, %v3088
  %v3090 = vsel %vm2591, %v2486, %v2482
  %v3091 = vsel %vm2593, %v2490, %v3090
  %v3092 = vsel %vm2595, %v2494, %v3091
  %v3093 = vsel %vm2597, %v2689, %v3092
  %v3094 = vsel %vm2599, %v2809, %v3093
  %v3095 = vsel %vm2601, %v2929, %v3094
  %v3096 = vsel %vm2603, %v3049, %v3095
  %v3097 = vsel %vm2591, %v2518, %v2514
  %v3098 = vsel %vm2593, %v2522, %v3097
  %v3099 = vsel %vm2595, %v2526, %v3098
  %v3100 = vsel %vm2597, %v2693, %v3099
  %v3101 = vsel %vm2599, %v2813, %v3100
  %v3102 = vsel %vm2601, %v2933, %v3101
  %v3103 = vsel %vm2603, %v3053, %v3102
  %v3104 = vsel %vm2591, %v2550, %v2546
  %v3105 = vsel %vm2593, %v2554, %v3104
  %v3106 = vsel %vm2595, %v2558, %v3105
  %v3107 = vsel %vm2597, %v2697, %v3106
  %v3108 = vsel %vm2599, %v2817, %v3107
  %v3109 = vsel %vm2601, %v2937, %v3108
  %v3110 = vsel %vm2603, %v3057, %v3109
  %v3111 = vsel %vm2591, %v2582, %v2578
  %v3112 = vsel %vm2593, %v2586, %v3111
  %v3113 = vsel %vm2595, %v2590, %v3112
  %v3114 = vsel %vm2597, %v2701, %v3113
  %v3115 = vsel %vm2599, %v2821, %v3114
  %v3116 = vsel %vm2601, %v2941, %v3115
  %v3117 = vsel %vm2603, %v3061, %v3116
  %3118 = vrot.lane.b32.xlu0 %v3068, 32
  %v3119 = vpop.permute.xlu0 %3118
  %3120 = vrot.lane.b32.xlu0 %v3075, 32
  %v3121 = vpop.permute.xlu0 %3120
  %3122 = vrot.lane.b32.xlu0 %v3082, 32
  %v3123 = vpop.permute.xlu0 %3122
  %3124 = vrot.lane.b32.xlu0 %v3089, 32
  %v3125 = vpop.permute.xlu0 %3124
  %3126 = vrot.lane.b32.xlu0 %v3096, 32
  %v3127 = vpop.permute.xlu0 %3126
  %3128 = vrot.lane.b32.xlu0 %v3103, 32
  %v3129 = vpop.permute.xlu0 %3128
  %3130 = vrot.lane.b32.xlu0 %v3110, 32
  %v3131 = vpop.permute.xlu0 %3130
  %3132 = vrot.lane.b32.xlu0 %v3117, 32
  %v3133 = vpop.permute.xlu0 %3132
  %vm3142 = vcmask 588800
  %v3143 = vsel %vm3142, %v2604, %v2759
  %v3144 = vsel %vm3142, %v2611, %v2761
  %v3145 = vsel %vm3142, %v2618, %v2763
  %v3146 = vsel %vm3142, %v2625, %v2765
  %v3147 = vsel %vm3142, %v2632, %v2767
  %v3148 = vsel %vm3142, %v2639, %v2769
  %v3149 = vsel %vm3142, %v2646, %v2771
  %v3150 = vsel %vm3142, %v2653, %v2773
  %vm3151 = vcmask 130048
  %v3152 = vsel %vm3151, %v2759, %v2879
  %v3153 = vsel %vm3151, %v2761, %v2881
  %v3154 = vsel %vm3151, %v2763, %v2883
  %v3155 = vsel %vm3151, %v2765, %v2885
  %v3156 = vsel %vm3151, %v2767, %v2887
  %v3157 = vsel %vm3151, %v2769, %v2889
  %v3158 = vsel %vm3151, %v2771, %v2891
  %v3159 = vsel %vm3151, %v2773, %v2893
  %vm3160 = vcmask 719872
  %v3161 = vsel %vm3160, %v3152, %v2999
  %v3162 = vsel %vm3160, %v3153, %v3001
  %v3163 = vsel %vm3160, %v3154, %v3003
  %v3164 = vsel %vm3160, %v3155, %v3005
  %v3165 = vsel %vm3160, %v3156, %v3007
  %v3166 = vsel %vm3160, %v3157, %v3009
  %v3167 = vsel %vm3160, %v3158, %v3011
  %v3168 = vsel %vm3160, %v3159, %v3013
  %vm3169 = vcmask 261120
  %v3170 = vsel %vm3169, %v2999, %v3119
  %v3171 = vsel %vm3169, %v3001, %v3121
  %v3172 = vsel %vm3169, %v3003, %v3123
  %v3173 = vsel %vm3169, %v3005, %v3125
  %v3174 = vsel %vm3169, %v3007, %v3127
  %v3175 = vsel %vm3169, %v3009, %v3129
  %v3176 = vsel %vm3169, %v3011, %v3131
  %v3177 = vsel %vm3169, %v3013, %v3133
  %v3178 = vld [vmem:[%s3] sm:$0xff]
  %v3179 = vld [vmem:[%s3 + $0x8] sm:$0xff]
  %v3180 = vld [vmem:[%s3 + $0x10] sm:$0xff]
  %v3181 = vld [vmem:[%s3 + $0x18] sm:$0xff]
  %v3182 = vld [vmem:[%s3 + $0x20] sm:$0xff]
  %v3183 = vld [vmem:[%s3 + $0x28] sm:$0xff]
  %v3184 = vld [vmem:[%s3 + $0x30] sm:$0xff]
  %v3185 = vld [vmem:[%s3 + $0x38] sm:$0xff]
  %v3186 = vld [vmem:[%s3 + $0x40] sm:$0xff]
  %v3187 = vld [vmem:[%s3 + $0x48] sm:$0xff]
  %v3188 = vld [vmem:[%s3 + $0x50] sm:$0xff]
  %v3189 = vld [vmem:[%s3 + $0x58] sm:$0xff]
  %v3190 = vld [vmem:[%s3 + $0x60] sm:$0xff]
  %v3191 = vld [vmem:[%s3 + $0x68] sm:$0xff]
  %v3192 = vld [vmem:[%s3 + $0x70] sm:$0xff]
  %v3193 = vld [vmem:[%s3 + $0x78] sm:$0xff]
  %v3194 = vld [vmem:[%s3 + $0x80] sm:$0xff]
  %v3195 = vld [vmem:[%s3 + $0x88] sm:$0xff]
  %v3196 = vld [vmem:[%s3 + $0x90] sm:$0xff]
  %v3197 = vld [vmem:[%s3 + $0x98] sm:$0xff]
  %v3198 = vld [vmem:[%s3 + $0xa0] sm:$0xff]
  %v3199 = vld [vmem:[%s3 + $0xa8] sm:$0xff]
  %v3200 = vld [vmem:[%s3 + $0xb0] sm:$0xff]
  %v3201 = vld [vmem:[%s3 + $0xb8] sm:$0xff]
  %v3202 = vld [vmem:[%s3 + $0xc0] sm:$0xff]
  %v3203 = vld [vmem:[%s3 + $0xc8] sm:$0xff]
  %v3204 = vld [vmem:[%s3 + $0xd0] sm:$0xff]
  %v3205 = vld [vmem:[%s3 + $0xd8] sm:$0xff]
  %v3206 = vld [vmem:[%s3 + $0xe0] sm:$0xff]
  %v3207 = vld [vmem:[%s3 + $0xe8] sm:$0xff]
  %v3208 = vld [vmem:[%s3 + $0xf0] sm:$0xff]
  %v3209 = vld [vmem:[%s3 + $0xf8] sm:$0xff]
  %v3210 = vld [vmem:[%s3 + $0x100] sm:$0xff]
  %v3211 = vld [vmem:[%s3 + $0x108] sm:$0xff]
  %v3212 = vld [vmem:[%s3 + $0x110] sm:$0xff]
  %v3213 = vld [vmem:[%s3 + $0x118] sm:$0xff]
  %v3214 = vld [vmem:[%s3 + $0x120] sm:$0xff]
  %v3215 = vld [vmem:[%s3 + $0x128] sm:$0xff]
  %v3216 = vld [vmem:[%s3 + $0x130] sm:$0xff]
  %v3217 = vld [vmem:[%s3 + $0x138] sm:$0xff]
  %v3218 = vld [vmem:[%s3 + $0x140] sm:$0xff]
  %v3219 = vld [vmem:[%s3 + $0x148] sm:$0xff]
  %v3220 = vld [vmem:[%s3 + $0x150] sm:$0xff]
  %v3221 = vld [vmem:[%s3 + $0x158] sm:$0xff]
  %v3222 = vld [vmem:[%s3 + $0x160] sm:$0xff]
  %vm3223 = vcmask 850944
  %v3225 = vsel %vm3223, %v3170, 0
  %v3228 = vsel %vm3223, %v3171, 0
  %v3231 = vsel %vm3223, %v3172, 0
  %v3234 = vsel %vm3223, %v3173, 0
  %v3237 = vsel %vm3223, %v3174, 0
  %v3240 = vsel %vm3223, %v3175, 0
  %v3243 = vsel %vm3223, %v3176, 0
  %v3246 = vsel %vm3223, %v3177, 0
  %3248 = vmatprep.subr.mxu0 0.0
  %3249 = vmatpush1.msra.mxu0 %v3193
  %3250 = vmatprep.subr.mxu0 0.0
  %3251 = vmatpush1.msra.mxu0 %v3192
  %3252 = vmatprep.subr.mxu0 0.0
  %3253 = vmatpush1.msra.mxu0 %v3191
  %3254 = vmatprep.subr.mxu0 0.0
  %3255 = vmatpush1.msra.mxu0 %v3190
  %3256 = vmatprep.subr.mxu0 0.0
  %3257 = vmatpush1.msra.mxu0 %v3189
  %3258 = vmatprep.subr.mxu0 0.0
  %3259 = vmatpush1.msra.mxu0 %v3188
  %3260 = vmatprep.subr.mxu0 0.0
  %3261 = vmatpush1.msra.mxu0 %v3187
  %3262 = vmatprep.subr.mxu0 0.0
  %3263 = vmatpush1.msra.mxu0 %v3186
  %3264 = vmatprep.subr.mxu0 0.0
  %3265 = vmatpush1.msra.mxu0 %v3185
  %3266 = vmatprep.subr.mxu0 0.0
  %3267 = vmatpush1.msra.mxu0 %v3184
  %3268 = vmatprep.subr.mxu0 0.0
  %3269 = vmatpush1.msra.mxu0 %v3183
  %3270 = vmatprep.subr.mxu0 0.0
  %3271 = vmatpush1.msra.mxu0 %v3182
  %3272 = vmatprep.subr.mxu0 0.0
  %3273 = vmatpush1.msra.mxu0 %v3181
  %3274 = vmatprep.subr.mxu0 0.0
  %3275 = vmatpush1.msra.mxu0 %v3180
  %3276 = vmatprep.subr.mxu0 0.0
  %3277 = vmatpush1.msra.mxu0 %v3179
  %3278 = vmatprep.subr.mxu0 0.0
  %3279 = vmatpush1.msra.mxu0 %v3178
  %3280 = vmatprep.subr.mxu0 0.0
  %3281 = vmatpush2.msra.mxu0 %v3209
  %3282 = vmatprep.subr.mxu0 0.0
  %3283 = vmatpush2.msra.mxu0 %v3208
  %3284 = vmatprep.subr.mxu0 0.0
  %3285 = vmatpush2.msra.mxu0 %v3207
  %3286 = vmatprep.subr.mxu0 0.0
  %3287 = vmatpush2.msra.mxu0 %v3206
  %3288 = vmatprep.subr.mxu0 0.0
  %3289 = vmatpush2.msra.mxu0 %v3205
  %3290 = vmatprep.subr.mxu0 0.0
  %3291 = vmatpush2.msra.mxu0 %v3204
  %3292 = vmatprep.subr.mxu0 0.0
  %3293 = vmatpush2.msra.mxu0 %v3203
  %3294 = vmatprep.subr.mxu0 0.0
  %3295 = vmatpush2.msra.mxu0 %v3202
  %3296 = vmatprep.subr.mxu0 0.0
  %3297 = vmatpush2.msra.mxu0 %v3201
  %3298 = vmatprep.subr.mxu0 0.0
  %3299 = vmatpush2.msra.mxu0 %v3200
  %3300 = vmatprep.subr.mxu0 0.0
  %3301 = vmatpush2.msra.mxu0 %v3199
  %3302 = vmatprep.subr.mxu0 0.0
  %3303 = vmatpush2.msra.mxu0 %v3198
  %3304 = vmatprep.subr.mxu0 0.0
  %3305 = vmatpush2.msra.mxu0 %v3197
  %3306 = vmatprep.subr.mxu0 0.0
  %3307 = vmatpush2.msra.mxu0 %v3196
  %3308 = vmatprep.subr.mxu0 0.0
  %3309 = vmatpush2.msra.mxu0 %v3195
  %3310 = vmatprep.subr.mxu0 0.0
  %3311 = vmatpush2.msra.mxu0 %v3194
  %3312 = vmatprep.mubr.f32.mxu0 %v3161
  %3313 = vmatmul.mubr.f32.gmra.mxu0 %v3143
  %v3314 = vpop.f32.mrf.mxu0
  %v3315 = vadd.f32 0.0, %v3314
  %v3316 = vpop.f32.mrf.mxu0
  %3317 = vmatprep.mubr.f32.mxu0 %v3162
  %3318 = vmatmul.mubr.f32.gmra.mxu0 %v3144
  %v3319 = vpop.f32.mrf.mxu0
  %v3320 = vadd.f32 0.0, %v3319
  %v3321 = vpop.f32.mrf.mxu0
  %3322 = vmatprep.mubr.f32.mxu0 %v3163
  %3323 = vmatmul.mubr.f32.gmra.mxu0 %v3145
  %v3324 = vpop.f32.mrf.mxu0
  %v3325 = vadd.f32 0.0, %v3324
  %v3326 = vpop.f32.mrf.mxu0
  %3327 = vmatprep.mubr.f32.mxu0 %v3164
  %3328 = vmatmul.mubr.f32.gmra.mxu0 %v3146
  %v3329 = vpop.f32.mrf.mxu0
  %v3330 = vadd.f32 0.0, %v3329
  %v3331 = vpop.f32.mrf.mxu0
  %3332 = vmatprep.mubr.f32.mxu0 %v3165
  %3333 = vmatmul.mubr.f32.gmra.mxu0 %v3147
  %v3334 = vpop.f32.mrf.mxu0
  %v3335 = vadd.f32 0.0, %v3334
  %v3336 = vpop.f32.mrf.mxu0
  %3337 = vmatprep.mubr.f32.mxu0 %v3166
  %3338 = vmatmul.mubr.f32.gmra.mxu0 %v3148
  %v3339 = vpop.f32.mrf.mxu0
  %v3340 = vadd.f32 0.0, %v3339
  %v3341 = vpop.f32.mrf.mxu0
  %3342 = vmatprep.mubr.f32.mxu0 %v3167
  %3343 = vmatmul.mubr.f32.gmra.mxu0 %v3149
  %v3344 = vpop.f32.mrf.mxu0
  %v3345 = vadd.f32 0.0, %v3344
  %v3346 = vpop.f32.mrf.mxu0
  %3347 = vmatprep.mubr.f32.mxu0 %v3168
  %3348 = vmatmul.mubr.f32.gmra.mxu0 %v3150
  %v3349 = vpop.f32.mrf.mxu0
  %v3350 = vadd.f32 0.0, %v3349
  %v3351 = vpop.f32.mrf.mxu0
  %3352 = vdwg.mxu0
  %3353 = vmatprep.subr.mxu0 0.0
  %3354 = vmatpush1.msra.mxu0 0.0
  %3355 = vmatprep.subr.mxu0 0.0
  %3356 = vmatpush1.msra.mxu0 0.0
  %3357 = vmatprep.subr.mxu0 0.0
  %3358 = vmatpush1.msra.mxu0 0.0
  %3359 = vmatprep.subr.mxu0 0.0
  %3360 = vmatpush1.msra.mxu0 %v3222
  %3361 = vmatprep.subr.mxu0 0.0
  %3362 = vmatpush1.msra.mxu0 %v3221
  %3363 = vmatprep.subr.mxu0 0.0
  %3364 = vmatpush1.msra.mxu0 %v3220
  %3365 = vmatprep.subr.mxu0 0.0
  %3366 = vmatpush1.msra.mxu0 %v3219
  %3367 = vmatprep.subr.mxu0 0.0
  %3368 = vmatpush1.msra.mxu0 %v3218
  %3369 = vmatprep.subr.mxu0 0.0
  %3370 = vmatpush1.msra.mxu0 %v3217
  %3371 = vmatprep.subr.mxu0 0.0
  %3372 = vmatpush1.msra.mxu0 %v3216
  %3373 = vmatprep.subr.mxu0 0.0
  %3374 = vmatpush1.msra.mxu0 %v3215
  %3375 = vmatprep.subr.mxu0 0.0
  %3376 = vmatpush1.msra.mxu0 %v3214
  %3377 = vmatprep.subr.mxu0 0.0
  %3378 = vmatpush1.msra.mxu0 %v3213
  %3379 = vmatprep.subr.mxu0 0.0
  %3380 = vmatpush1.msra.mxu0 %v3212
  %3381 = vmatprep.subr.mxu0 0.0
  %3382 = vmatpush1.msra.mxu0 %v3211
  %3383 = vmatprep.subr.mxu0 0.0
  %3384 = vmatpush1.msra.mxu0 %v3210
  %3385 = vmatprep.subr.mxu0 0.0
  %3386 = vmatpush2.msra.mxu0 0.0
  %3387 = vmatprep.subr.mxu0 0.0
  %3388 = vmatpush2.msra.mxu0 0.0
  %3389 = vmatprep.subr.mxu0 0.0
  %3390 = vmatpush2.msra.mxu0 0.0
  %3391 = vmatprep.subr.mxu0 0.0
  %3392 = vmatpush2.msra.mxu0 0.0
  %3393 = vmatprep.subr.mxu0 0.0
  %3394 = vmatpush2.msra.mxu0 0.0
  %3395 = vmatprep.subr.mxu0 0.0
  %3396 = vmatpush2.msra.mxu0 0.0
  %3397 = vmatprep.subr.mxu0 0.0
  %3398 = vmatpush2.msra.mxu0 0.0
  %3399 = vmatprep.subr.mxu0 0.0
  %3400 = vmatpush2.msra.mxu0 0.0
  %3401 = vmatprep.subr.mxu0 0.0
  %3402 = vmatpush2.msra.mxu0 0.0
  %3403 = vmatprep.subr.mxu0 0.0
  %3404 = vmatpush2.msra.mxu0 0.0
  %3405 = vmatprep.subr.mxu0 0.0
  %3406 = vmatpush2.msra.mxu0 0.0
  %3407 = vmatprep.subr.mxu0 0.0
  %3408 = vmatpush2.msra.mxu0 0.0
  %3409 = vmatprep.subr.mxu0 0.0
  %3410 = vmatpush2.msra.mxu0 0.0
  %3411 = vmatprep.subr.mxu0 0.0
  %3412 = vmatpush2.msra.mxu0 0.0
  %3413 = vmatprep.subr.mxu0 0.0
  %3414 = vmatpush2.msra.mxu0 0.0
  %3415 = vmatprep.subr.mxu0 0.0
  %3416 = vmatpush2.msra.mxu0 0.0
  %3417 = vmatprep.mubr.f32.mxu0 0.0
  %3418 = vmatmul.mubr.f32.gmra.mxu0 %v3225
  %v3419 = vpop.f32.mrf.mxu0
  %v3420 = vadd.f32 %v3315, %v3419
  %v3421 = vpop.f32.mrf.mxu0
  %3422 = vmatprep.mubr.f32.mxu0 0.0
  %3423 = vmatmul.mubr.f32.gmra.mxu0 %v3228
  %v3424 = vpop.f32.mrf.mxu0
  %v3425 = vadd.f32 %v3320, %v3424
  %v3426 = vpop.f32.mrf.mxu0
  %3427 = vmatprep.mubr.f32.mxu0 0.0
  %3428 = vmatmul.mubr.f32.gmra.mxu0 %v3231
  %v3429 = vpop.f32.mrf.mxu0
  %v3430 = vadd.f32 %v3325, %v3429
  %v3431 = vpop.f32.mrf.mxu0
  %3432 = vmatprep.mubr.f32.mxu0 0.0
  %3433 = vmatmul.mubr.f32.gmra.mxu0 %v3234
  %v3434 = vpop.f32.mrf.mxu0
  %v3435 = vadd.f32 %v3330, %v3434
  %v3436 = vpop.f32.mrf.mxu0
  %3437 = vmatprep.mubr.f32.mxu0 0.0
  %3438 = vmatmul.mubr.f32.gmra.mxu0 %v3237
  %v3439 = vpop.f32.mrf.mxu0
  %v3440 = vadd.f32 %v3335, %v3439
  %v3441 = vpop.f32.mrf.mxu0
  %3442 = vmatprep.mubr.f32.mxu0 0.0
  %3443 = vmatmul.mubr.f32.gmra.mxu0 %v3240
  %v3444 = vpop.f32.mrf.mxu0
  %v3445 = vadd.f32 %v3340, %v3444
  %v3446 = vpop.f32.mrf.mxu0
  %3447 = vmatprep.mubr.f32.mxu0 0.0
  %3448 = vmatmul.mubr.f32.gmra.mxu0 %v3243
  %v3449 = vpop.f32.mrf.mxu0
  %v3450 = vadd.f32 %v3345, %v3449
  %v3451 = vpop.f32.mrf.mxu0
  %3452 = vmatprep.mubr.f32.mxu0 0.0
  %3453 = vmatmul.mubr.f32.gmra.mxu0 %v3246
  %v3454 = vpop.f32.mrf.mxu0
  %v3455 = vadd.f32 %v3350, %v3454
  %v3456 = vpop.f32.mrf.mxu0
  %3457 = vdwg.mxu0
  %v3466 = vcombine.high %v3420, %v3420
  %v3468 = vunpack.c.l.s4 1983009808
  %v3469 = vunpack.c.0.s8 %v3468
  %v3470 = vlaneseq
  %v3471 = vshrl.u32 %v3470, 7
  %v3472 = vsub.s32 %v3469, %v3471
  %v3473 = vrot.slane %v3420, %v3472
  %v3475 = vunpack.c.l.s4 1983009808
  %v3476 = vunpack.c.0.s8 %v3475
  %v3477 = vlaneseq
  %v3478 = vshrl.u32 %v3477, 7
  %v3479 = vsub.s32 %v3476, %v3478
  %v3480 = vrot.slane %v3466, %v3479
  %v3481 = vcombine.high %v3473, %v3473
  %v3482 = vcombine.high %v3480, %v3480
  %v3483 = vcombine.high %v3425, %v3425
  %v3485 = vunpack.c.l.s4 1983009808
  %v3486 = vunpack.c.0.s8 %v3485
  %v3487 = vlaneseq
  %v3488 = vshrl.u32 %v3487, 7
  %v3489 = vsub.s32 %v3486, %v3488
  %v3490 = vrot.slane %v3425, %v3489
  %v3492 = vunpack.c.l.s4 1983009808
  %v3493 = vunpack.c.0.s8 %v3492
  %v3494 = vlaneseq
  %v3495 = vshrl.u32 %v3494, 7
  %v3496 = vsub.s32 %v3493, %v3495
  %v3497 = vrot.slane %v3483, %v3496
  %v3498 = vcombine.high %v3490, %v3490
  %v3499 = vcombine.high %v3497, %v3497
  %v3500 = vcombine.high %v3430, %v3430
  %v3502 = vunpack.c.l.s4 1983009808
  %v3503 = vunpack.c.0.s8 %v3502
  %v3504 = vlaneseq
  %v3505 = vshrl.u32 %v3504, 7
  %v3506 = vsub.s32 %v3503, %v3505
  %v3507 = vrot.slane %v3430, %v3506
  %v3509 = vunpack.c.l.s4 1983009808
  %v3510 = vunpack.c.0.s8 %v3509
  %v3511 = vlaneseq
  %v3512 = vshrl.u32 %v3511, 7
  %v3513 = vsub.s32 %v3510, %v3512
  %v3514 = vrot.slane %v3500, %v3513
  %v3515 = vcombine.high %v3507, %v3507
  %v3516 = vcombine.high %v3514, %v3514
  %v3517 = vcombine.high %v3435, %v3435
  %v3519 = vunpack.c.l.s4 1983009808
  %v3520 = vunpack.c.0.s8 %v3519
  %v3521 = vlaneseq
  %v3522 = vshrl.u32 %v3521, 7
  %v3523 = vsub.s32 %v3520, %v3522
  %v3524 = vrot.slane %v3435, %v3523
  %v3526 = vunpack.c.l.s4 1983009808
  %v3527 = vunpack.c.0.s8 %v3526
  %v3528 = vlaneseq
  %v3529 = vshrl.u32 %v3528, 7
  %v3530 = vsub.s32 %v3527, %v3529
  %v3531 = vrot.slane %v3517, %v3530
  %v3532 = vcombine.high %v3524, %v3524
  %v3533 = vcombine.high %v3531, %v3531
  %v3534 = vcombine.high %v3440, %v3440
  %v3536 = vunpack.c.l.s4 1983009808
  %v3537 = vunpack.c.0.s8 %v3536
  %v3538 = vlaneseq
  %v3539 = vshrl.u32 %v3538, 7
  %v3540 = vsub.s32 %v3537, %v3539
  %v3541 = vrot.slane %v3440, %v3540
  %v3543 = vunpack.c.l.s4 1983009808
  %v3544 = vunpack.c.0.s8 %v3543
  %v3545 = vlaneseq
  %v3546 = vshrl.u32 %v3545, 7
  %v3547 = vsub.s32 %v3544, %v3546
  %v3548 = vrot.slane %v3534, %v3547
  %v3549 = vcombine.high %v3541, %v3541
  %v3550 = vcombine.high %v3548, %v3548
  %v3551 = vcombine.high %v3445, %v3445
  %v3553 = vunpack.c.l.s4 1983009808
  %v3554 = vunpack.c.0.s8 %v3553
  %v3555 = vlaneseq
  %v3556 = vshrl.u32 %v3555, 7
  %v3557 = vsub.s32 %v3554, %v3556
  %v3558 = vrot.slane %v3445, %v3557
  %v3560 = vunpack.c.l.s4 1983009808
  %v3561 = vunpack.c.0.s8 %v3560
  %v3562 = vlaneseq
  %v3563 = vshrl.u32 %v3562, 7
  %v3564 = vsub.s32 %v3561, %v3563
  %v3565 = vrot.slane %v3551, %v3564
  %v3566 = vcombine.high %v3558, %v3558
  %v3567 = vcombine.high %v3565, %v3565
  %v3568 = vcombine.high %v3450, %v3450
  %v3570 = vunpack.c.l.s4 1983009808
  %v3571 = vunpack.c.0.s8 %v3570
  %v3572 = vlaneseq
  %v3573 = vshrl.u32 %v3572, 7
  %v3574 = vsub.s32 %v3571, %v3573
  %v3575 = vrot.slane %v3450, %v3574
  %v3577 = vunpack.c.l.s4 1983009808
  %v3578 = vunpack.c.0.s8 %v3577
  %v3579 = vlaneseq
  %v3580 = vshrl.u32 %v3579, 7
  %v3581 = vsub.s32 %v3578, %v3580
  %v3582 = vrot.slane %v3568, %v3581
  %v3583 = vcombine.high %v3575, %v3575
  %v3584 = vcombine.high %v3582, %v3582
  %v3585 = vcombine.high %v3455, %v3455
  %v3587 = vunpack.c.l.s4 1983009808
  %v3588 = vunpack.c.0.s8 %v3587
  %v3589 = vlaneseq
  %v3590 = vshrl.u32 %v3589, 7
  %v3591 = vsub.s32 %v3588, %v3590
  %v3592 = vrot.slane %v3455, %v3591
  %v3594 = vunpack.c.l.s4 1983009808
  %v3595 = vunpack.c.0.s8 %v3594
  %v3596 = vlaneseq
  %v3597 = vshrl.u32 %v3596, 7
  %v3598 = vsub.s32 %v3595, %v3597
  %v3599 = vrot.slane %v3585, %v3598
  %v3600 = vcombine.high %v3592, %v3592
  %v3601 = vcombine.high %v3599, %v3599
  %v3634 = vrot.slane %v3473, 7
  %v3635 = vrot.slane %v3634, 2
  %v3636 = vrot.slane %v3481, 7
  %v3637 = vrot.slane %v3636, 2
  %v3638 = vrot.slane %v3480, 7
  %v3639 = vrot.slane %v3638, 2
  %v3640 = vrot.slane %v3482, 7
  %v3641 = vrot.slane %v3640, 2
  %v3642 = vrot.slane %v3490, 7
  %v3643 = vrot.slane %v3642, 2
  %v3644 = vrot.slane %v3498, 7
  %v3645 = vrot.slane %v3644, 2
  %v3646 = vrot.slane %v3497, 7
  %v3647 = vrot.slane %v3646, 2
  %v3648 = vrot.slane %v3499, 7
  %v3649 = vrot.slane %v3648, 2
  %v3650 = vrot.slane %v3507, 7
  %v3651 = vrot.slane %v3650, 2
  %v3652 = vrot.slane %v3515, 7
  %v3653 = vrot.slane %v3652, 2
  %v3654 = vrot.slane %v3514, 7
  %v3655 = vrot.slane %v3654, 2
  %v3656 = vrot.slane %v3516, 7
  %v3657 = vrot.slane %v3656, 2
  %v3658 = vrot.slane %v3524, 7
  %v3659 = vrot.slane %v3658, 2
  %v3660 = vrot.slane %v3532, 7
  %v3661 = vrot.slane %v3660, 2
  %v3662 = vrot.slane %v3531, 7
  %v3663 = vrot.slane %v3662, 2
  %v3664 = vrot.slane %v3533, 7
  %v3665 = vrot.slane %v3664, 2
  %v3666 = vrot.slane %v3541, 7
  %v3667 = vrot.slane %v3666, 2
  %v3668 = vrot.slane %v3549, 7
  %v3669 = vrot.slane %v3668, 2
  %v3670 = vrot.slane %v3548, 7
  %v3671 = vrot.slane %v3670, 2
  %v3672 = vrot.slane %v3550, 7
  %v3673 = vrot.slane %v3672, 2
  %v3674 = vrot.slane %v3558, 7
  %v3675 = vrot.slane %v3674, 2
  %v3676 = vrot.slane %v3566, 7
  %v3677 = vrot.slane %v3676, 2
  %v3678 = vrot.slane %v3565, 7
  %v3679 = vrot.slane %v3678, 2
  %v3680 = vrot.slane %v3567, 7
  %v3681 = vrot.slane %v3680, 2
  %v3682 = vrot.slane %v3575, 7
  %v3683 = vrot.slane %v3682, 2
  %v3684 = vrot.slane %v3583, 7
  %v3685 = vrot.slane %v3684, 2
  %v3686 = vrot.slane %v3582, 7
  %v3687 = vrot.slane %v3686, 2
  %v3688 = vrot.slane %v3584, 7
  %v3689 = vrot.slane %v3688, 2
  %v3690 = vrot.slane %v3592, 7
  %v3691 = vrot.slane %v3690, 2
  %v3692 = vrot.slane %v3600, 7
  %v3693 = vrot.slane %v3692, 2
  %v3694 = vrot.slane %v3599, 7
  %v3695 = vrot.slane %v3694, 2
  %v3696 = vrot.slane %v3601, 7
  %v3697 = vrot.slane %v3696, 2
  %v3730 = vmax.f32 %v3473, %v3635
  %v3731 = vmax.f32 %v3481, %v3637
  %v3732 = vmax.f32 %v3480, %v3639
  %v3733 = vmax.f32 %v3482, %v3641
  %v3734 = vmax.f32 %v3490, %v3643
  %v3735 = vmax.f32 %v3498, %v3645
  %v3736 = vmax.f32 %v3497, %v3647
  %v3737 = vmax.f32 %v3499, %v3649
  %v3738 = vmax.f32 %v3507, %v3651
  %v3739 = vmax.f32 %v3515, %v3653
  %v3740 = vmax.f32 %v3514, %v3655
  %v3741 = vmax.f32 %v3516, %v3657
  %v3742 = vmax.f32 %v3524, %v3659
  %v3743 = vmax.f32 %v3532, %v3661
  %v3744 = vmax.f32 %v3531, %v3663
  %v3745 = vmax.f32 %v3533, %v3665
  %v3746 = vmax.f32 %v3541, %v3667
  %v3747 = vmax.f32 %v3549, %v3669
  %v3748 = vmax.f32 %v3548, %v3671
  %v3749 = vmax.f32 %v3550, %v3673
  %v3750 = vmax.f32 %v3558, %v3675
  %v3751 = vmax.f32 %v3566, %v3677
  %v3752 = vmax.f32 %v3565, %v3679
  %v3753 = vmax.f32 %v3567, %v3681
  %v3754 = vmax.f32 %v3575, %v3683
  %v3755 = vmax.f32 %v3583, %v3685
  %v3756 = vmax.f32 %v3582, %v3687
  %v3757 = vmax.f32 %v3584, %v3689
  %v3758 = vmax.f32 %v3592, %v3691
  %v3759 = vmax.f32 %v3600, %v3693
  %v3760 = vmax.f32 %v3599, %v3695
  %v3761 = vmax.f32 %v3601, %v3697
  %3794 = vrot.lane.b32.xlu0 %v3730, 64
  %v3795 = vpop.permute.xlu0 %3794
  %3796 = vrot.lane.b32.xlu0 %v3731, 64
  %v3797 = vpop.permute.xlu0 %3796
  %3798 = vrot.lane.b32.xlu0 %v3732, 64
  %v3799 = vpop.permute.xlu0 %3798
  %3800 = vrot.lane.b32.xlu0 %v3733, 64
  %v3801 = vpop.permute.xlu0 %3800
  %3802 = vrot.lane.b32.xlu0 %v3734, 64
  %v3803 = vpop.permute.xlu0 %3802
  %3804 = vrot.lane.b32.xlu0 %v3735, 64
  %v3805 = vpop.permute.xlu0 %3804
  %3806 = vrot.lane.b32.xlu0 %v3736, 64
  %v3807 = vpop.permute.xlu0 %3806
  %3808 = vrot.lane.b32.xlu0 %v3737, 64
  %v3809 = vpop.permute.xlu0 %3808
  %3810 = vrot.lane.b32.xlu0 %v3738, 64
  %v3811 = vpop.permute.xlu0 %3810
  %3812 = vrot.lane.b32.xlu0 %v3739, 64
  %v3813 = vpop.permute.xlu0 %3812
  %3814 = vrot.lane.b32.xlu0 %v3740, 64
  %v3815 = vpop.permute.xlu0 %3814
  %3816 = vrot.lane.b32.xlu0 %v3741, 64
  %v3817 = vpop.permute.xlu0 %3816
  %3818 = vrot.lane.b32.xlu0 %v3742, 64
  %v3819 = vpop.permute.xlu0 %3818
  %3820 = vrot.lane.b32.xlu0 %v3743, 64
  %v3821 = vpop.permute.xlu0 %3820
  %3822 = vrot.lane.b32.xlu0 %v3744, 64
  %v3823 = vpop.permute.xlu0 %3822
  %3824 = vrot.lane.b32.xlu0 %v3745, 64
  %v3825 = vpop.permute.xlu0 %3824
  %3826 = vrot.lane.b32.xlu0 %v3746, 64
  %v3827 = vpop.permute.xlu0 %3826
  %3828 = vrot.lane.b32.xlu0 %v3747, 64
  %v3829 = vpop.permute.xlu0 %3828
  %3830 = vrot.lane.b32.xlu0 %v3748, 64
  %v3831 = vpop.permute.xlu0 %3830
  %3832 = vrot.lane.b32.xlu0 %v3749, 64
  %v3833 = vpop.permute.xlu0 %3832
  %3834 = vrot.lane.b32.xlu0 %v3750, 64
  %v3835 = vpop.permute.xlu0 %3834
  %3836 = vrot.lane.b32.xlu0 %v3751, 64
  %v3837 = vpop.permute.xlu0 %3836
  %3838 = vrot.lane.b32.xlu0 %v3752, 64
  %v3839 = vpop.permute.xlu0 %3838
  %3840 = vrot.lane.b32.xlu0 %v3753, 64
  %v3841 = vpop.permute.xlu0 %3840
  %3842 = vrot.lane.b32.xlu0 %v3754, 64
  %v3843 = vpop.permute.xlu0 %3842
  %3844 = vrot.lane.b32.xlu0 %v3755, 64
  %v3845 = vpop.permute.xlu0 %3844
  %3846 = vrot.lane.b32.xlu0 %v3756, 64
  %v3847 = vpop.permute.xlu0 %3846
  %3848 = vrot.lane.b32.xlu0 %v3757, 64
  %v3849 = vpop.permute.xlu0 %3848
  %3850 = vrot.lane.b32.xlu0 %v3758, 64
  %v3851 = vpop.permute.xlu0 %3850
  %3852 = vrot.lane.b32.xlu0 %v3759, 64
  %v3853 = vpop.permute.xlu0 %3852
  %3854 = vrot.lane.b32.xlu0 %v3760, 64
  %v3855 = vpop.permute.xlu0 %3854
  %3856 = vrot.lane.b32.xlu0 %v3761, 64
  %v3857 = vpop.permute.xlu0 %3856
  %v3890 = vmax.f32 %v3730, %v3795
  %v3891 = vmax.f32 %v3731, %v3797
  %v3892 = vmax.f32 %v3732, %v3799
  %v3893 = vmax.f32 %v3733, %v3801
  %v3894 = vmax.f32 %v3734, %v3803
  %v3895 = vmax.f32 %v3735, %v3805
  %v3896 = vmax.f32 %v3736, %v3807
  %v3897 = vmax.f32 %v3737, %v3809
  %v3898 = vmax.f32 %v3738, %v3811
  %v3899 = vmax.f32 %v3739, %v3813
  %v3900 = vmax.f32 %v3740, %v3815
  %v3901 = vmax.f32 %v3741, %v3817
  %v3902 = vmax.f32 %v3742, %v3819
  %v3903 = vmax.f32 %v3743, %v3821
  %v3904 = vmax.f32 %v3744, %v3823
  %v3905 = vmax.f32 %v3745, %v3825
  %v3906 = vmax.f32 %v3746, %v3827
  %v3907 = vmax.f32 %v3747, %v3829
  %v3908 = vmax.f32 %v3748, %v3831
  %v3909 = vmax.f32 %v3749, %v3833
  %v3910 = vmax.f32 %v3750, %v3835
  %v3911 = vmax.f32 %v3751, %v3837
  %v3912 = vmax.f32 %v3752, %v3839
  %v3913 = vmax.f32 %v3753, %v3841
  %v3914 = vmax.f32 %v3754, %v3843
  %v3915 = vmax.f32 %v3755, %v3845
  %v3916 = vmax.f32 %v3756, %v3847
  %v3917 = vmax.f32 %v3757, %v3849
  %v3918 = vmax.f32 %v3758, %v3851
  %v3919 = vmax.f32 %v3759, %v3853
  %v3920 = vmax.f32 %v3760, %v3855
  %v3921 = vmax.f32 %v3761, %v3857
  %v3922 = vld [vmem:[%s4] sm:$0x1]
  %v3924 = vlaneseq
  %v3925 = vshrl.u32 %v3924, 7
  %v3926 = vsub.s32 0, %v3925
  %v3927 = vrot.slane %v3922, %v3926
  %v3929 = vunpack.c.l.s4 1983009808
  %v3930 = vunpack.c.0.s8 %v3929
  %v3931 = vlaneseq
  %v3932 = vshrl.u32 %v3931, 7
  %v3933 = vsub.s32 %v3930, %v3932
  %v3934 = vrot.slane %v3927, %v3933
  %v3935 = vcombine.high %v3934, %v3934
  %v3936 = vrot.slane %v3934, 1
  %v3937 = vrot.slane %v3935, 1
  %v3942 = vadd.f32 %v3890, %v3934
  %v3943 = vadd.f32 %v3891, %v3936
  %v3944 = vadd.f32 %v3892, %v3935
  %v3945 = vadd.f32 %v3893, %v3937
  %v3946 = vadd.f32 %v3894, %v3934
  %v3947 = vadd.f32 %v3895, %v3936
  %v3948 = vadd.f32 %v3896, %v3935
  %v3949 = vadd.f32 %v3897, %v3937
  %v3950 = vadd.f32 %v3898, %v3934
  %v3951 = vadd.f32 %v3899, %v3936
  %v3952 = vadd.f32 %v3900, %v3935
  %v3953 = vadd.f32 %v3901, %v3937
  %v3954 = vadd.f32 %v3902, %v3934
  %v3955 = vadd.f32 %v3903, %v3936
  %v3956 = vadd.f32 %v3904, %v3935
  %v3957 = vadd.f32 %v3905, %v3937
  %v3958 = vadd.f32 %v3906, %v3934
  %v3959 = vadd.f32 %v3907, %v3936
  %v3960 = vadd.f32 %v3908, %v3935
  %v3961 = vadd.f32 %v3909, %v3937
  %v3962 = vadd.f32 %v3910, %v3934
  %v3963 = vadd.f32 %v3911, %v3936
  %v3964 = vadd.f32 %v3912, %v3935
  %v3965 = vadd.f32 %v3913, %v3937
  %v3966 = vadd.f32 %v3914, %v3934
  %v3967 = vadd.f32 %v3915, %v3936
  %v3968 = vadd.f32 %v3916, %v3935
  %v3969 = vadd.f32 %v3917, %v3937
  %v3970 = vadd.f32 %v3918, %v3934
  %v3971 = vadd.f32 %v3919, %v3936
  %v3972 = vadd.f32 %v3920, %v3935
  %v3973 = vadd.f32 %v3921, %v3937
  %v3974 = vmax.f32 %v3942, 0.0
  %v3975 = vmax.f32 %v3943, 0.0
  %v3976 = vmax.f32 %v3944, 0.0
  %v3977 = vmax.f32 %v3945, 0.0
  %v3978 = vmax.f32 %v3946, 0.0
  %v3979 = vmax.f32 %v3947, 0.0
  %v3980 = vmax.f32 %v3948, 0.0
  %v3981 = vmax.f32 %v3949, 0.0
  %v3982 = vmax.f32 %v3950, 0.0
  %v3983 = vmax.f32 %v3951, 0.0
  %v3984 = vmax.f32 %v3952, 0.0
  %v3985 = vmax.f32 %v3953, 0.0
  %v3986 = vmax.f32 %v3954, 0.0
  %v3987 = vmax.f32 %v3955, 0.0
  %v3988 = vmax.f32 %v3956, 0.0
  %v3989 = vmax.f32 %v3957, 0.0
  %v3990 = vmax.f32 %v3958, 0.0
  %v3991 = vmax.f32 %v3959, 0.0
  %v3992 = vmax.f32 %v3960, 0.0
  %v3993 = vmax.f32 %v3961, 0.0
  %v3994 = vmax.f32 %v3962, 0.0
  %v3995 = vmax.f32 %v3963, 0.0
  %v3996 = vmax.f32 %v3964, 0.0
  %v3997 = vmax.f32 %v3965, 0.0
  %v3998 = vmax.f32 %v3966, 0.0
  %v3999 = vmax.f32 %v3967, 0.0
  %v4000 = vmax.f32 %v3968, 0.0
  %v4001 = vmax.f32 %v3969, 0.0
  %v4002 = vmax.f32 %v3970, 0.0
  %v4003 = vmax.f32 %v3971, 0.0
  %v4004 = vmax.f32 %v3972, 0.0
  %v4005 = vmax.f32 %v3973, 0.0
  %v4014 = vlaneseq
  %v4015 = vshrl.u32 %v4014, 7
  %v4016 = vsub.s32 0, %v4015
  %v4017 = vrot.slane %v3974, %v4016
  %v4018 = vlaneseq
  %v4019 = vshrl.u32 %v4018, 7
  %v4020 = vsub.s32 0, %v4019
  %v4021 = vrot.slane %v3978, %v4020
  %v4022 = vlaneseq
  %v4023 = vshrl.u32 %v4022, 7
  %v4024 = vsub.s32 0, %v4023
  %v4025 = vrot.slane %v3982, %v4024
  %v4026 = vlaneseq
  %v4027 = vshrl.u32 %v4026, 7
  %v4028 = vsub.s32 0, %v4027
  %v4029 = vrot.slane %v3986, %v4028
  %v4030 = vlaneseq
  %v4031 = vshrl.u32 %v4030, 7
  %v4032 = vsub.s32 0, %v4031
  %v4033 = vrot.slane %v3990, %v4032
  %v4034 = vlaneseq
  %v4035 = vshrl.u32 %v4034, 7
  %v4036 = vsub.s32 0, %v4035
  %v4037 = vrot.slane %v3994, %v4036
  %v4038 = vlaneseq
  %v4039 = vshrl.u32 %v4038, 7
  %v4040 = vsub.s32 0, %v4039
  %v4041 = vrot.slane %v3998, %v4040
  %v4042 = vlaneseq
  %v4043 = vshrl.u32 %v4042, 7
  %v4044 = vsub.s32 0, %v4043
  %v4045 = vrot.slane %v4002, %v4044
  %v4046 = vsel %vm2591, %v4021, %v4017
  %v4047 = vsel %vm2593, %v4025, %v4046
  %v4048 = vsel %vm2595, %v4029, %v4047
  %v4049 = vsel %vm2597, %v4033, %v4048
  %v4050 = vsel %vm2599, %v4037, %v4049
  %v4051 = vsel %vm2601, %v4041, %v4050
  %v4052 = vsel %vm2603, %v4045, %v4051
  %v4062 = vlaneseq
  %v4063 = vshrl.u32 %v4062, 7
  %v4064 = vsub.s32 0, %v4063
  %v4065 = vrot.slane %v3975, %v4064
  %v4066 = vlaneseq
  %v4067 = vshrl.u32 %v4066, 7
  %v4068 = vsub.s32 0, %v4067
  %v4069 = vrot.slane %v3979, %v4068
  %v4070 = vlaneseq
  %v4071 = vshrl.u32 %v4070, 7
  %v4072 = vsub.s32 0, %v4071
  %v4073 = vrot.slane %v3983, %v4072
  %v4074 = vlaneseq
  %v4075 = vshrl.u32 %v4074, 7
  %v4076 = vsub.s32 0, %v4075
  %v4077 = vrot.slane %v3987, %v4076
  %v4078 = vlaneseq
  %v4079 = vshrl.u32 %v4078, 7
  %v4080 = vsub.s32 0, %v4079
  %v4081 = vrot.slane %v3991, %v4080
  %v4082 = vlaneseq
  %v4083 = vshrl.u32 %v4082, 7
  %v4084 = vsub.s32 0, %v4083
  %v4085 = vrot.slane %v3995, %v4084
  %v4086 = vlaneseq
  %v4087 = vshrl.u32 %v4086, 7
  %v4088 = vsub.s32 0, %v4087
  %v4089 = vrot.slane %v3999, %v4088
  %v4090 = vlaneseq
  %v4091 = vshrl.u32 %v4090, 7
  %v4092 = vsub.s32 0, %v4091
  %v4093 = vrot.slane %v4003, %v4092
  %v4094 = vsel %vm2591, %v4069, %v4065
  %v4095 = vsel %vm2593, %v4073, %v4094
  %v4096 = vsel %vm2595, %v4077, %v4095
  %v4097 = vsel %vm2597, %v4081, %v4096
  %v4098 = vsel %vm2599, %v4085, %v4097
  %v4099 = vsel %vm2601, %v4089, %v4098
  %v4100 = vsel %vm2603, %v4093, %v4099
  %4101 = vrot.lane.b32.xlu0 %v4100, 64
  %v4102 = vpop.permute.xlu0 %4101
  %v4112 = vlaneseq
  %v4113 = vshrl.u32 %v4112, 7
  %v4114 = vsub.s32 0, %v4113
  %v4115 = vrot.slane %v3976, %v4114
  %v4116 = vlaneseq
  %v4117 = vshrl.u32 %v4116, 7
  %v4118 = vsub.s32 0, %v4117
  %v4119 = vrot.slane %v3980, %v4118
  %v4120 = vlaneseq
  %v4121 = vshrl.u32 %v4120, 7
  %v4122 = vsub.s32 0, %v4121
  %v4123 = vrot.slane %v3984, %v4122
  %v4124 = vlaneseq
  %v4125 = vshrl.u32 %v4124, 7
  %v4126 = vsub.s32 0, %v4125
  %v4127 = vrot.slane %v3988, %v4126
  %v4128 = vlaneseq
  %v4129 = vshrl.u32 %v4128, 7
  %v4130 = vsub.s32 0, %v4129
  %v4131 = vrot.slane %v3992, %v4130
  %v4132 = vlaneseq
  %v4133 = vshrl.u32 %v4132, 7
  %v4134 = vsub.s32 0, %v4133
  %v4135 = vrot.slane %v3996, %v4134
  %v4136 = vlaneseq
  %v4137 = vshrl.u32 %v4136, 7
  %v4138 = vsub.s32 0, %v4137
  %v4139 = vrot.slane %v4000, %v4138
  %v4140 = vlaneseq
  %v4141 = vshrl.u32 %v4140, 7
  %v4142 = vsub.s32 0, %v4141
  %v4143 = vrot.slane %v4004, %v4142
  %v4144 = vsel %vm2591, %v4119, %v4115
  %v4145 = vsel %vm2593, %v4123, %v4144
  %v4146 = vsel %vm2595, %v4127, %v4145
  %v4147 = vsel %vm2597, %v4131, %v4146
  %v4148 = vsel %vm2599, %v4135, %v4147
  %v4149 = vsel %vm2601, %v4139, %v4148
  %v4150 = vsel %vm2603, %v4143, %v4149
  %v4160 = vlaneseq
  %v4161 = vshrl.u32 %v4160, 7
  %v4162 = vsub.s32 0, %v4161
  %v4163 = vrot.slane %v3977, %v4162
  %v4164 = vlaneseq
  %v4165 = vshrl.u32 %v4164, 7
  %v4166 = vsub.s32 0, %v4165
  %v4167 = vrot.slane %v3981, %v4166
  %v4168 = vlaneseq
  %v4169 = vshrl.u32 %v4168, 7
  %v4170 = vsub.s32 0, %v4169
  %v4171 = vrot.slane %v3985, %v4170
  %v4172 = vlaneseq
  %v4173 = vshrl.u32 %v4172, 7
  %v4174 = vsub.s32 0, %v4173
  %v4175 = vrot.slane %v3989, %v4174
  %v4176 = vlaneseq
  %v4177 = vshrl.u32 %v4176, 7
  %v4178 = vsub.s32 0, %v4177
  %v4179 = vrot.slane %v3993, %v4178
  %v4180 = vlaneseq
  %v4181 = vshrl.u32 %v4180, 7
  %v4182 = vsub.s32 0, %v4181
  %v4183 = vrot.slane %v3997, %v4182
  %v4184 = vlaneseq
  %v4185 = vshrl.u32 %v4184, 7
  %v4186 = vsub.s32 0, %v4185
  %v4187 = vrot.slane %v4001, %v4186
  %v4188 = vlaneseq
  %v4189 = vshrl.u32 %v4188, 7
  %v4190 = vsub.s32 0, %v4189
  %v4191 = vrot.slane %v4005, %v4190
  %v4192 = vsel %vm2591, %v4167, %v4163
  %v4193 = vsel %vm2593, %v4171, %v4192
  %v4194 = vsel %vm2595, %v4175, %v4193
  %v4195 = vsel %vm2597, %v4179, %v4194
  %v4196 = vsel %vm2599, %v4183, %v4195
  %v4197 = vsel %vm2601, %v4187, %v4196
  %v4198 = vsel %vm2603, %v4191, %v4197
  %4199 = vrot.lane.b32.xlu0 %v4198, 64
  %v4200 = vpop.permute.xlu0 %4199
  %vm4202 = vcmask 523264
  %v4203 = vsel %vm4202, %v4052, %v4102
  %v4204 = vsel %vm4202, %v4150, %v4200
  %v4205 = vld [vmem:[%s5] sm:$0xff]
  %v4206 = vld [vmem:[%s5 + $0x8] sm:$0xff]
  %v4207 = vld [vmem:[%s5 + $0x10] sm:$0xff]
  %v4208 = vld [vmem:[%s5 + $0x18] sm:$0xff]
  %v4209 = vld [vmem:[%s5 + $0x20] sm:$0xff]
  %v4210 = vld [vmem:[%s5 + $0x28] sm:$0xff]
  %v4211 = vld [vmem:[%s5 + $0x30] sm:$0xff]
  %v4212 = vld [vmem:[%s5 + $0x38] sm:$0xff]
  %v4213 = vld [vmem:[%s5 + $0x40] sm:$0xff]
  %v4214 = vld [vmem:[%s5 + $0x48] sm:$0xff]
  %v4215 = vld [vmem:[%s5 + $0x50] sm:$0xff]
  %v4216 = vld [vmem:[%s5 + $0x58] sm:$0xff]
  %v4217 = vld [vmem:[%s5 + $0x60] sm:$0xff]
  %v4218 = vld [vmem:[%s5 + $0x68] sm:$0xff]
  %v4219 = vld [vmem:[%s5 + $0x70] sm:$0xff]
  %v4220 = vld [vmem:[%s5 + $0x78] sm:$0xff]
  %v4221 = vld [vmem:[%s5 + $0x80] sm:$0xff]
  %v4222 = vld [vmem:[%s5 + $0x88] sm:$0xff]
  %v4223 = vld [vmem:[%s5 + $0x90] sm:$0xff]
  %v4224 = vld [vmem:[%s5 + $0x98] sm:$0xff]
  %v4225 = vld [vmem:[%s5 + $0xa0] sm:$0xff]
  %v4226 = vld [vmem:[%s5 + $0xa8] sm:$0xff]
  %v4227 = vld [vmem:[%s5 + $0xb0] sm:$0xff]
  %v4228 = vld [vmem:[%s5 + $0xb8] sm:$0xff]
  %v4229 = vld [vmem:[%s5 + $0xc0] sm:$0xff]
  %v4230 = vld [vmem:[%s5 + $0xc8] sm:$0xff]
  %v4231 = vld [vmem:[%s5 + $0xd0] sm:$0xff]
  %v4232 = vld [vmem:[%s5 + $0xd8] sm:$0xff]
  %v4233 = vld [vmem:[%s5 + $0xe0] sm:$0xff]
  %v4234 = vld [vmem:[%s5 + $0xe8] sm:$0xff]
  %v4235 = vld [vmem:[%s5 + $0xf0] sm:$0xff]
  %v4236 = vld [vmem:[%s5 + $0xf8] sm:$0xff]
  %v4237 = vld [vmem:[%s6] sm:$0x1]
  %v4239 = vlaneseq
  %v4240 = vshrl.u32 %v4239, 7
  %v4241 = vsub.s32 0, %v4240
  %v4242 = vrot.slane %v4237, %v4241
  %4244 = vmatprep.subr.mxu0 0.0
  %4245 = vmatpush1.msra.mxu0 %v4220
  %4246 = vmatprep.subr.mxu0 0.0
  %4247 = vmatpush1.msra.mxu0 %v4219
  %4248 = vmatprep.subr.mxu0 0.0
  %4249 = vmatpush1.msra.mxu0 %v4218
  %4250 = vmatprep.subr.mxu0 0.0
  %4251 = vmatpush1.msra.mxu0 %v4217
  %4252 = vmatprep.subr.mxu0 0.0
  %4253 = vmatpush1.msra.mxu0 %v4216
  %4254 = vmatprep.subr.mxu0 0.0
  %4255 = vmatpush1.msra.mxu0 %v4215
  %4256 = vmatprep.subr.mxu0 0.0
  %4257 = vmatpush1.msra.mxu0 %v4214
  %4258 = vmatprep.subr.mxu0 0.0
  %4259 = vmatpush1.msra.mxu0 %v4213
  %4260 = vmatprep.subr.mxu0 0.0
  %4261 = vmatpush1.msra.mxu0 %v4212
  %4262 = vmatprep.subr.mxu0 0.0
  %4263 = vmatpush1.msra.mxu0 %v4211
  %4264 = vmatprep.subr.mxu0 0.0
  %4265 = vmatpush1.msra.mxu0 %v4210
  %4266 = vmatprep.subr.mxu0 0.0
  %4267 = vmatpush1.msra.mxu0 %v4209
  %4268 = vmatprep.subr.mxu0 0.0
  %4269 = vmatpush1.msra.mxu0 %v4208
  %4270 = vmatprep.subr.mxu0 0.0
  %4271 = vmatpush1.msra.mxu0 %v4207
  %4272 = vmatprep.subr.mxu0 0.0
  %4273 = vmatpush1.msra.mxu0 %v4206
  %4274 = vmatprep.subr.mxu0 0.0
  %4275 = vmatpush1.msra.mxu0 %v4205
  %4276 = vmatprep.subr.mxu0 0.0
  %4277 = vmatpush2.msra.mxu0 %v4236
  %4278 = vmatprep.subr.mxu0 0.0
  %4279 = vmatpush2.msra.mxu0 %v4235
  %4280 = vmatprep.subr.mxu0 0.0
  %4281 = vmatpush2.msra.mxu0 %v4234
  %4282 = vmatprep.subr.mxu0 0.0
  %4283 = vmatpush2.msra.mxu0 %v4233
  %4284 = vmatprep.subr.mxu0 0.0
  %4285 = vmatpush2.msra.mxu0 %v4232
  %4286 = vmatprep.subr.mxu0 0.0
  %4287 = vmatpush2.msra.mxu0 %v4231
  %4288 = vmatprep.subr.mxu0 0.0
  %4289 = vmatpush2.msra.mxu0 %v4230
  %4290 = vmatprep.subr.mxu0 0.0
  %4291 = vmatpush2.msra.mxu0 %v4229
  %4292 = vmatprep.subr.mxu0 0.0
  %4293 = vmatpush2.msra.mxu0 %v4228
  %4294 = vmatprep.subr.mxu0 0.0
  %4295 = vmatpush2.msra.mxu0 %v4227
  %4296 = vmatprep.subr.mxu0 0.0
  %4297 = vmatpush2.msra.mxu0 %v4226
  %4298 = vmatprep.subr.mxu0 0.0
  %4299 = vmatpush2.msra.mxu0 %v4225
  %4300 = vmatprep.subr.mxu0 0.0
  %4301 = vmatpush2.msra.mxu0 %v4224
  %4302 = vmatprep.subr.mxu0 0.0
  %4303 = vmatpush2.msra.mxu0 %v4223
  %4304 = vmatprep.subr.mxu0 0.0
  %4305 = vmatpush2.msra.mxu0 %v4222
  %4306 = vmatprep.subr.mxu0 0.0
  %4307 = vmatpush2.msra.mxu0 %v4221
  %4308 = vmatprep.mubr.f32.mxu0 %v4204
  %4309 = vmatmul.mubr.f32.gmra.mxu0 %v4203
  %v4310 = vpop.f32.mrf.mxu0
  %v4311 = vadd.f32 %v4242, %v4310
  %v4312 = vpop.f32.mrf.mxu0
  %4313 = vdwg.mxu0
  %v4314 = vmax.f32 %v4311, 0.0
  %v4315 = vld [vmem:[%s7] sm:$0xff]
  %v4316 = vld [vmem:[%s7 + $0x8] sm:$0xff]
  %v4317 = vld [vmem:[%s7 + $0x10] sm:$0xff]
  %v4318 = vld [vmem:[%s7 + $0x18] sm:$0xff]
  %v4319 = vld [vmem:[%s7 + $0x20] sm:$0xff]
  %v4320 = vld [vmem:[%s7 + $0x28] sm:$0xff]
  %v4321 = vld [vmem:[%s7 + $0x30] sm:$0xff]
  %v4322 = vld [vmem:[%s7 + $0x38] sm:$0xff]
  %v4323 = vld [vmem:[%s7 + $0x40] sm:$0xff]
  %v4324 = vld [vmem:[%s7 + $0x48] sm:$0xff]
  %v4325 = vld [vmem:[%s7 + $0x50] sm:$0xff]
  %v4326 = vld [vmem:[%s7 + $0x58] sm:$0xff]
  %v4327 = vld [vmem:[%s7 + $0x60] sm:$0xff]
  %v4328 = vld [vmem:[%s7 + $0x68] sm:$0xff]
  %v4329 = vld [vmem:[%s7 + $0x70] sm:$0xff]
  %v4330 = vld [vmem:[%s7 + $0x78] sm:$0xff]
  %v4331 = vld [vmem:[%s8] sm:$0x1]
  %v4333 = vlaneseq
  %v4334 = vshrl.u32 %v4333, 7
  %v4335 = vsub.s32 0, %v4334
  %v4336 = vrot.slane %v4331, %v4335
  %4338 = vmatprep.subr.mxu0 0.0
  %4339 = vmatpush1.msra.mxu0 %v4330
  %4340 = vmatprep.subr.mxu0 0.0
  %4341 = vmatpush1.msra.mxu0 %v4329
  %4342 = vmatprep.subr.mxu0 0.0
  %4343 = vmatpush1.msra.mxu0 %v4328
  %4344 = vmatprep.subr.mxu0 0.0
  %4345 = vmatpush1.msra.mxu0 %v4327
  %4346 = vmatprep.subr.mxu0 0.0
  %4347 = vmatpush1.msra.mxu0 %v4326
  %4348 = vmatprep.subr.mxu0 0.0
  %4349 = vmatpush1.msra.mxu0 %v4325
  %4350 = vmatprep.subr.mxu0 0.0
  %4351 = vmatpush1.msra.mxu0 %v4324
  %4352 = vmatprep.subr.mxu0 0.0
  %4353 = vmatpush1.msra.mxu0 %v4323
  %4354 = vmatprep.subr.mxu0 0.0
  %4355 = vmatpush1.msra.mxu0 %v4322
  %4356 = vmatprep.subr.mxu0 0.0
  %4357 = vmatpush1.msra.mxu0 %v4321
  %4358 = vmatprep.subr.mxu0 0.0
  %4359 = vmatpush1.msra.mxu0 %v4320
  %4360 = vmatprep.subr.mxu0 0.0
  %4361 = vmatpush1.msra.mxu0 %v4319
  %4362 = vmatprep.subr.mxu0 0.0
  %4363 = vmatpush1.msra.mxu0 %v4318
  %4364 = vmatprep.subr.mxu0 0.0
  %4365 = vmatpush1.msra.mxu0 %v4317
  %4366 = vmatprep.subr.mxu0 0.0
  %4367 = vmatpush1.msra.mxu0 %v4316
  %4368 = vmatprep.subr.mxu0 0.0
  %4369 = vmatpush1.msra.mxu0 %v4315
  %4370 = vmatprep.subr.mxu0 0.0
  %4371 = vmatpush2.msra.mxu0 0.0
  %4372 = vmatprep.subr.mxu0 0.0
  %4373 = vmatpush2.msra.mxu0 0.0
  %4374 = vmatprep.subr.mxu0 0.0
  %4375 = vmatpush2.msra.mxu0 0.0
  %4376 = vmatprep.subr.mxu0 0.0
  %4377 = vmatpush2.msra.mxu0 0.0
  %4378 = vmatprep.subr.mxu0 0.0
  %4379 = vmatpush2.msra.mxu0 0.0
  %4380 = vmatprep.subr.mxu0 0.0
  %4381 = vmatpush2.msra.mxu0 0.0
  %4382 = vmatprep.subr.mxu0 0.0
  %4383 = vmatpush2.msra.mxu0 0.0
  %4384 = vmatprep.subr.mxu0 0.0
  %4385 = vmatpush2.msra.mxu0 0.0
  %4386 = vmatprep.subr.mxu0 0.0
  %4387 = vmatpush2.msra.mxu0 0.0
  %4388 = vmatprep.subr.mxu0 0.0
  %4389 = vmatpush2.msra.mxu0 0.0
  %4390 = vmatprep.subr.mxu0 0.0
  %4391 = vmatpush2.msra.mxu0 0.0
  %4392 = vmatprep.subr.mxu0 0.0
  %4393 = vmatpush2.msra.mxu0 0.0
  %4394 = vmatprep.subr.mxu0 0.0
  %4395 = vmatpush2.msra.mxu0 0.0
  %4396 = vmatprep.subr.mxu0 0.0
  %4397 = vmatpush2.msra.mxu0 0.0
  %4398 = vmatprep.subr.mxu0 0.0
  %4399 = vmatpush2.msra.mxu0 0.0
  %4400 = vmatprep.subr.mxu0 0.0
  %4401 = vmatpush2.msra.mxu0 0.0
  %4402 = vmatprep.mubr.f32.mxu0 0.0
  %4403 = vmatmul.mubr.f32.gmra.mxu0 %v4314
  %v4404 = vpop.f32.mrf.mxu0
  %v4405 = vadd.f32 %v4336, %v4404
  %v4406 = vpop.f32.mrf.mxu0
  %4407 = vdwg.mxu0
  %v4408 = vmax.f32 %v4405, 0.0
  %v4409 = vld [vmem:[%s9] sm:$0xff]
  %v4410 = vld [vmem:[%s9 + $0x8] sm:$0xff]
  %v4411 = vld [vmem:[%s9 + $0x10] sm:$0xff]
  %v4412 = vld [vmem:[%s9 + $0x18] sm:$0xff]
  %v4413 = vld [vmem:[%s9 + $0x20] sm:$0xff]
  %v4414 = vld [vmem:[%s9 + $0x28] sm:$0xff]
  %v4415 = vld [vmem:[%s9 + $0x30] sm:$0xff]
  %v4416 = vld [vmem:[%s9 + $0x38] sm:$0xff]
  %v4417 = vld [vmem:[%s9 + $0x40] sm:$0xff]
  %v4418 = vld [vmem:[%s9 + $0x48] sm:$0xff]
  %v4419 = vld [vmem:[%s9 + $0x50] sm:$0xff]
  %v4420 = vld [vmem:[%s9 + $0x58] sm:$0xff]
  %v4421 = vld [vmem:[%s9 + $0x60] sm:$0xff]
  %v4422 = vld [vmem:[%s9 + $0x68] sm:$0xff]
  %v4423 = vld [vmem:[%s9 + $0x70] sm:$0xff]
  %v4424 = vld [vmem:[%s9 + $0x78] sm:$0xff]
  %v4425 = vld [vmem:[%s10] sm:$0x1]
  %v4427 = vlaneseq
  %v4428 = vshrl.u32 %v4427, 7
  %v4429 = vsub.s32 0, %v4428
  %v4430 = vrot.slane %v4425, %v4429
  %4432 = vmatprep.subr.mxu0 0.0
  %4433 = vmatpush1.msra.mxu0 %v4424
  %4434 = vmatprep.subr.mxu0 0.0
  %4435 = vmatpush1.msra.mxu0 %v4423
  %4436 = vmatprep.subr.mxu0 0.0
  %4437 = vmatpush1.msra.mxu0 %v4422
  %4438 = vmatprep.subr.mxu0 0.0
  %4439 = vmatpush1.msra.mxu0 %v4421
  %4440 = vmatprep.subr.mxu0 0.0
  %4441 = vmatpush1.msra.mxu0 %v4420
  %4442 = vmatprep.subr.mxu0 0.0
  %4443 = vmatpush1.msra.mxu0 %v4419
  %4444 = vmatprep.subr.mxu0 0.0
  %4445 = vmatpush1.msra.mxu0 %v4418
  %4446 = vmatprep.subr.mxu0 0.0
  %4447 = vmatpush1.msra.mxu0 %v4417
  %4448 = vmatprep.subr.mxu0 0.0
  %4449 = vmatpush1.msra.mxu0 %v4416
  %4450 = vmatprep.subr.mxu0 0.0
  %4451 = vmatpush1.msra.mxu0 %v4415
  %4452 = vmatprep.subr.mxu0 0.0
  %4453 = vmatpush1.msra.mxu0 %v4414
  %4454 = vmatprep.subr.mxu0 0.0
  %4455 = vmatpush1.msra.mxu0 %v4413
  %4456 = vmatprep.subr.mxu0 0.0
  %4457 = vmatpush1.msra.mxu0 %v4412
  %4458 = vmatprep.subr.mxu0 0.0
  %4459 = vmatpush1.msra.mxu0 %v4411
  %4460 = vmatprep.subr.mxu0 0.0
  %4461 = vmatpush1.msra.mxu0 %v4410
  %4462 = vmatprep.subr.mxu0 0.0
  %4463 = vmatpush1.msra.mxu0 %v4409
  %4464 = vmatprep.subr.mxu0 0.0
  %4465 = vmatpush2.msra.mxu0 0.0
  %4466 = vmatprep.subr.mxu0 0.0
  %4467 = vmatpush2.msra.mxu0 0.0
  %4468 = vmatprep.subr.mxu0 0.0
  %4469 = vmatpush2.msra.mxu0 0.0
  %4470 = vmatprep.subr.mxu0 0.0
  %4471 = vmatpush2.msra.mxu0 0.0
  %4472 = vmatprep.subr.mxu0 0.0
  %4473 = vmatpush2.msra.mxu0 0.0
  %4474 = vmatprep.subr.mxu0 0.0
  %4475 = vmatpush2.msra.mxu0 0.0
  %4476 = vmatprep.subr.mxu0 0.0
  %4477 = vmatpush2.msra.mxu0 0.0
  %4478 = vmatprep.subr.mxu0 0.0
  %4479 = vmatpush2.msra.mxu0 0.0
  %4480 = vmatprep.subr.mxu0 0.0
  %4481 = vmatpush2.msra.mxu0 0.0
  %4482 = vmatprep.subr.mxu0 0.0
  %4483 = vmatpush2.msra.mxu0 0.0
  %4484 = vmatprep.subr.mxu0 0.0
  %4485 = vmatpush2.msra.mxu0 0.0
  %4486 = vmatprep.subr.mxu0 0.0
  %4487 = vmatpush2.msra.mxu0 0.0
  %4488 = vmatprep.subr.mxu0 0.0
  %4489 = vmatpush2.msra.mxu0 0.0
  %4490 = vmatprep.subr.mxu0 0.0
  %4491 = vmatpush2.msra.mxu0 0.0
  %4492 = vmatprep.subr.mxu0 0.0
  %4493 = vmatpush2.msra.mxu0 0.0
  %4494 = vmatprep.subr.mxu0 0.0
  %4495 = vmatpush2.msra.mxu0 0.0
  %4496 = vmatprep.mubr.f32.mxu0 0.0
  %4497 = vmatmul.mubr.f32.gmra.mxu0 %v4408
  %v4498 = vpop.f32.mrf.mxu0
  %v4499 = vadd.f32 %v4430, %v4498
  %v4500 = vpop.f32.mrf.mxu0
  %4501 = vdwg.mxu0
  %4502 = vst [vmem:[%s11] sm:$0xff] %v4499
  // Predicated region
  $region46: #{net_forward.1} parent=0 // pred_check
    _
  $region47: #{net_forward.1} parent=0 // pred_check_branch
    %4504 = sbr.rel (0) target = $region49
  $region48: #{net_forward.1} parent=0 // pred_region
    _
  $region49: #{net_forward.1} parent=0 // pred_fallthru
    _
  // Predicated region
  $region50: #{net_forward.1} parent=0 // pred_check
    _
  $region51: #{net_forward.1} parent=0 // pred_check_branch
    %4506 = sbr.rel (0) target = $region53
  $region52: #{net_forward.1} parent=0 // pred_region
    _
  $region53: #{net_forward.1} parent=0 // pred_fallthru
    _

</llo_original>
